<compile_context>
chip_gen: v7x
topology: tpu7x:2x2x1
jax: 0.10.0
libtpu: 0.0.40
codegen_flags: <defaults>
</compile_context>

<pallas_src>
import numpy as np

import jax
import jax.numpy as jnp
from jax import lax
from jax.experimental import pallas as pl
from jax.experimental.pallas import tpu as pltpu


def _prelu(x, a):
    return jnp.where(x >= 0, x, a * x)


# ----------------------------------------------------------------------------
# Fused kernel: TAC (subband interaction) + GroupNorm + residual + GRU + GroupNorm,
# one batch element (G subbands, T timesteps) per grid step.
# Row layout everywhere: row index = t * G + g  (time-major).
# ----------------------------------------------------------------------------
def sil_kernel(x_ref, mavg_ref, bt_ref, gmask_ref,
               w_in_ref, b_in_ref, w_mt_ref, b_mt_ref,
               w_o1_ref, w_o2_ref, b_o_ref, tgamma_ref, tbeta_ref,
               prelu_ref,
               wih_ref, whh_ref, bi3_ref, bh3_ref,
               ngamma_ref, nbeta_ref,
               o_ref, gi_ref):
    # x_ref: (T*G, N)    o_ref: (T, G, H)    gi_ref (scratch): (T, G, 3H)
    TG, N = x_ref.shape
    T, G, H3 = gi_ref.shape
    H = H3 // 3
    HI = lax.Precision.HIGHEST

    a_in = prelu_ref[0]
    a_mt = prelu_ref[1]
    a_o = prelu_ref[2]

    # -------------------- TAC (subband interaction) --------------------
    x2 = x_ref[...].astype(jnp.float32)                                        # (TG, N)
    # per-row input transform (all subbands & timesteps stacked into one matmul)
    h1 = _prelu(jnp.dot(x2, w_in_ref[...], preferred_element_type=jnp.float32)
                + b_in_ref[...], a_in)                                         # (TG, Ht)
    # mean over the G subbands of each timestep: exact 0/1/G routing matmul
    m = jnp.dot(mavg_ref[...], h1, precision=HI,
                preferred_element_type=jnp.float32)                            # (T, Ht)
    m2 = _prelu(jnp.dot(m, w_mt_ref[...], preferred_element_type=jnp.float32)
                + b_mt_ref[...], a_mt)                                         # (T, Ht)
    om = jnp.dot(m2, w_o2_ref[...], preferred_element_type=jnp.float32)        # (T, N)
    # broadcast the mean-path output back to every (t, g) row (exact 0/1 routing matmul)
    om_full = jnp.dot(bt_ref[...], om, precision=HI,
                      preferred_element_type=jnp.float32)                      # (TG, N)
    # concat+Linear == h1 @ W_o[:, :Ht].T + mean_path @ W_o[:, Ht:].T
    o = _prelu(jnp.dot(h1, w_o1_ref[...], preferred_element_type=jnp.float32)
               + om_full + b_o_ref[...], a_o)                                  # (TG, N)

    # GroupNorm(1, N): per (b, g) sample, statistics over all (T, N) elements.
    rs1 = jnp.sum(o, axis=1, keepdims=True)                                    # (TG, 1)
    rs2 = jnp.sum(o * o, axis=1, keepdims=True)                                # (TG, 1)
    inv_cnt = 1.0 / (T * N)
    meanfull = jnp.zeros_like(rs1)
    invfull = jnp.zeros_like(rs1)
    for g in range(G):                                                         # G is tiny & static
        mg = gmask_ref[g]                                                      # (TG, 1) 0/1 mask
        mean_g = jnp.sum(rs1 * mg) * inv_cnt
        var_g = jnp.sum(rs2 * mg) * inv_cnt - mean_g * mean_g
        inv_g = lax.rsqrt(var_g + 1e-5)
        meanfull = meanfull + mg * mean_g
        invfull = invfull + mg * inv_g
    o = (o - meanfull) * invfull * tgamma_ref[...] + tbeta_ref[...]
    y = x2 + o                                                                 # residual, (TG, N)

    # -------------------- GRU: input projection hoisted out of the recurrence --------------------
    # gates fused: columns = [r | z | n]; input biases (and the hh r/z biases) folded in.
    gi_all = (jnp.dot(y, wih_ref[...], preferred_element_type=jnp.float32)
              + bi3_ref[...])                                                  # (TG, 3H)
    # distribute into a (T, G, 3H) scratch so the time loop does a cheap leading-dim read
    for t in range(T):
        gi_ref[t] = gi_all[t * G:(t + 1) * G, :]

    whh = whh_ref[...]                                                         # (H, 3H), hoisted
    bh3 = bh3_ref[...]                                                         # (1, 3H) = [0, 0, b_hn]

    def step(t, carry):
        h_prev, s1, s2 = carry
        gi_t = gi_ref[t]                                                       # (G, 3H)
        gh = jnp.dot(h_prev, whh, preferred_element_type=jnp.float32) + bh3    # (G, 3H)
        r = jax.nn.sigmoid(gi_t[:, :H] + gh[:, :H])
        z = jax.nn.sigmoid(gi_t[:, H:2 * H] + gh[:, H:2 * H])
        n = jnp.tanh(gi_t[:, 2 * H:] + r * gh[:, 2 * H:])
        h = (1.0 - z) * n + z * h_prev                                         # (G, H)
        o_ref[t] = h
        # accumulate GroupNorm statistics on the fly (per subband, over (T, H))
        s1 = s1 + jnp.sum(h, axis=1, keepdims=True)
        s2 = s2 + jnp.sum(h * h, axis=1, keepdims=True)
        return (h, s1, s2)

    h0 = jnp.zeros((G, H), jnp.float32)
    z0 = jnp.zeros((G, 1), jnp.float32)
    _, s1, s2 = lax.fori_loop(0, T, step, (h0, z0, z0))

    # -------------------- final GroupNorm(1, H): per (b, g) over (T, H) --------------------
    denom = 1.0 / (T * H)
    mean = s1 * denom                                                          # (G, 1)
    var = s2 * denom - mean * mean
    inv = lax.rsqrt(var + 1e-5)
    hall = o_ref[...].astype(jnp.float32)                                      # (T, G, H)
    o_ref[...] = ((hall - mean[None, :, :]) * inv[None, :, :]
                  * ngamma_ref[...] + nbeta_ref[...]).astype(o_ref.dtype)


# ----------------------------------------------------------------------------
# Wrapper: layout plumbing + one fused pallas_call gridded over the batch.
# ----------------------------------------------------------------------------
def sil_block_forward(x, P):
    B, G, N, T = x.shape
    Htac = P['w_in_t'].shape[1]
    H = P['whh_all'].shape[0]
    TG = T * G
    H3 = 3 * H

    # [B, G, N, T] -> [B, T, G, N] -> [B, T*G, N]  (single tiny XLA relayout at entry)
    xt = jnp.transpose(x, (0, 3, 1, 2)).reshape(B, TG, N).astype(jnp.float32)

    # Constant routing matrices for the time-major row order (row = t*G + g).
    rows = jnp.arange(TG)
    tid = rows // G
    gid = rows % G
    mavg = (jnp.arange(T)[:, None] == tid[None, :]).astype(jnp.float32) / G        # (T, TG)
    bt = (tid[:, None] == jnp.arange(T)[None, :]).astype(jnp.float32)              # (TG, T)
    gmask = (jnp.arange(G)[:, None] == gid[None, :]).astype(jnp.float32)[:, :, None]  # (G, TG, 1)

    rep2 = lambda b: (0, 0)
    rep3 = lambda b: (0, 0, 0)

    out = pl.pallas_call(
        sil_kernel,
        out_shape=jax.ShapeDtypeStruct((B, T, G, H), jnp.float32),
        grid=(B,),
        in_specs=[
            pl.BlockSpec((None, TG, N), lambda b: (b, 0, 0)),     # x (per-batch)
            pl.BlockSpec((T, TG), rep2),                          # mavg
            pl.BlockSpec((TG, T), rep2),                          # bt
            pl.BlockSpec((G, TG, 1), rep3),                       # group masks
            pl.BlockSpec((N, Htac), rep2),                        # w_in
            pl.BlockSpec((1, Htac), rep2),                        # b_in
            pl.BlockSpec((Htac, Htac), rep2),                     # w_mt
            pl.BlockSpec((1, Htac), rep2),                        # b_mt
            pl.BlockSpec((Htac, N), rep2),                        # w_o1
            pl.BlockSpec((Htac, N), rep2),                        # w_o2
            pl.BlockSpec((1, N), rep2),                           # b_o
            pl.BlockSpec((1, N), rep2),                           # tac gamma
            pl.BlockSpec((1, N), rep2),                           # tac beta
            pl.BlockSpec(memory_space=pltpu.MemorySpace.SMEM),    # PReLU slopes (3,)
            pl.BlockSpec((N, H3), rep2),                          # W_ih fused [r|z|n]
            pl.BlockSpec((H, H3), rep2),                          # W_hh fused [r|z|n]
            pl.BlockSpec((1, H3), rep2),                          # fused input-side bias
            pl.BlockSpec((1, H3), rep2),                          # fused hh-side bias [0,0,b_hn]
            pl.BlockSpec((1, 1, H), rep3),                        # norm gamma
            pl.BlockSpec((1, 1, H), rep3),                        # norm beta
        ],
        out_specs=pl.BlockSpec((None, T, G, H), lambda b: (b, 0, 0, 0)),
        scratch_shapes=[pltpu.VMEM((T, G, H3), jnp.float32)],
        compiler_params=pltpu.CompilerParams(dimension_semantics=("parallel",)),
    )(xt, mavg, bt, gmask,
      P['w_in_t'], P['b_in'].reshape(1, Htac), P['w_mt_t'], P['b_mt'].reshape(1, Htac),
      P['w_o1_t'], P['w_o2_t'], P['b_o'].reshape(1, N),
      P['tac_gamma'].reshape(1, N), P['tac_beta'].reshape(1, N),
      P['prelu'],
      P['wih_all'], P['whh_all'], P['bias_i3'].reshape(1, H3), P['bias_h3'].reshape(1, H3),
      P['norm_gamma'].reshape(1, 1, H), P['norm_beta'].reshape(1, 1, H))

    # (B, T, G, H) -> (B, G, H, T)  (single tiny XLA relayout at exit)
    return jnp.transpose(out, (0, 2, 3, 1))


# ----------------------------------------------------------------------------
# Deterministic parameter construction (matches the PyTorch module's shapes).
# ----------------------------------------------------------------------------
def make_params(key, N, Htac, H):
    ks = jax.random.split(key, 16)
    rn = lambda k, s, sc=0.3: (sc * jax.random.normal(k, s)).astype(jnp.float32)
    # subband_interaction
    w_in = rn(ks[0], (Htac, N));       b_in = rn(ks[1], (Htac,), 0.1)
    w_mt = rn(ks[2], (Htac, Htac));    b_mt = rn(ks[3], (Htac,), 0.1)
    w_out = rn(ks[4], (N, 2 * Htac));  b_o = rn(ks[5], (N,), 0.1)
    tac_gamma = 1.0 + rn(ks[6], (N,), 0.1)
    tac_beta = rn(ks[7], (N,), 0.1)
    # GRU (weight_ih_l0: (3H, N) in [r, z, n] order; weight_hh_l0: (3H, H))
    W_ih = rn(ks[8], (3 * H, N));      W_hh = rn(ks[9], (3 * H, H))
    b_ih = rn(ks[10], (3 * H,), 0.1);  b_hh = rn(ks[11], (3 * H,), 0.1)
    # outer GroupNorm(1, H)
    norm_gamma = 1.0 + rn(ks[12], (H,), 0.1)
    norm_beta = rn(ks[13], (H,), 0.1)
    prelu = jnp.array([0.25, 0.25, 0.25], jnp.float32)   # nn.PReLU() default slope
    # fused GRU weights/biases: columns ordered [r | z | n]
    bias_i3 = jnp.concatenate([b_ih[:H] + b_hh[:H],
                               b_ih[H:2 * H] + b_hh[H:2 * H],
                               b_ih[2 * H:]])
    bias_h3 = jnp.concatenate([jnp.zeros((2 * H,), jnp.float32), b_hh[2 * H:]])
    return dict(
        w_in_t=w_in.T, b_in=b_in,
        w_mt_t=w_mt.T, b_mt=b_mt,
        w_o1_t=w_out[:, :Htac].T, w_o2_t=w_out[:, Htac:].T, b_o=b_o,
        tac_gamma=tac_gamma, tac_beta=tac_beta, prelu=prelu,
        wih_all=W_ih.T, whh_all=W_hh.T, bias_i3=bias_i3, bias_h3=bias_h3,
        norm_gamma=norm_gamma, norm_beta=norm_beta,
    )


# ----------------------------------------------------------------------------
# Pure-JAX reference (mirrors the PyTorch forward semantics).
# ----------------------------------------------------------------------------
def ref_forward(x, P):
    B, G, N, T = x.shape
    H = P['whh_all'].shape[0]
    a_in, a_mt, a_o = P['prelu'][0], P['prelu'][1], P['prelu'][2]

    xt = jnp.transpose(x, (0, 1, 3, 2)).astype(jnp.float32)   # (B, G, T, N)
    h1 = _prelu(jnp.einsum('bgtn,nh->bgth', xt, P['w_in_t']) + P['b_in'], a_in)
    m = jnp.mean(h1, axis=1)
    m2 = _prelu(jnp.einsum('bth,hk->btk', m, P['w_mt_t']) + P['b_mt'], a_mt)
    o = _prelu(jnp.einsum('bgth,hn->bgtn', h1, P['w_o1_t'])
               + jnp.einsum('bth,hn->btn', m2, P['w_o2_t'])[:, None]
               + P['b_o'], a_o)
    mean = jnp.mean(o, axis=(2, 3), keepdims=True)
    var = jnp.mean((o - mean) ** 2, axis=(2, 3), keepdims=True)
    o = (o - mean) * lax.rsqrt(var + 1e-5) * P['tac_gamma'] + P['tac_beta']
    y = xt + o                                                # (B, G, T, N)

    yb = jnp.transpose(y.reshape(B * G, T, N), (1, 0, 2))     # (T, BG, N)

    Wih, Whh = P['wih_all'], P['whh_all']
    bi3, bh3 = P['bias_i3'], P['bias_h3']

    def step(h, xt_):
        gi = xt_ @ Wih + bi3
        gh = h @ Whh + bh3
        r = jax.nn.sigmoid(gi[:, :H] + gh[:, :H])
        z = jax.nn.sigmoid(gi[:, H:2 * H] + gh[:, H:2 * H])
        n = jnp.tanh(gi[:, 2 * H:] + r * gh[:, 2 * H:])
        h = (1.0 - z) * n + z * h
        return h, h

    h0 = jnp.zeros((B * G, H), jnp.float32)
    _, hs = lax.scan(step, h0, yb)                            # (T, BG, H)
    mean = jnp.mean(hs, axis=(0, 2), keepdims=True)
    var = jnp.mean((hs - mean) ** 2, axis=(0, 2), keepdims=True)
    on = (hs - mean) * lax.rsqrt(var + 1e-5) * P['norm_gamma'] + P['norm_beta']
    return jnp.transpose(on, (1, 2, 0)).reshape(B, G, H, T)


if __name__ == "__main__":
    # SIL_Block(input_size=N, tac_hidden_size=Htac, lstm_hidden_size=H, bidirectional=False)
    B, G, N, T = 2, 4, 32, 16
    Htac, H = 16, 32

    key = jax.random.PRNGKey(0)
    kx, kp = jax.random.split(key)
    x = jax.random.normal(kx, (B, G, N, T), jnp.float32)      # [B, F, N, T]
    P = make_params(kp, N, Htac, H)

    out = jax.jit(sil_block_forward)(x, P)
    out = jax.block_until_ready(out)

    ref = ref_forward(x, P)
    assert out.shape == (B, G, H, T), out.shape
    np.testing.assert_allclose(np.asarray(out), np.asarray(ref), rtol=2e-2, atol=2e-2)

    print("KERNEL_OK")
</pallas_src>

<mosaic_0001>
module attributes {stable_mosaic.version = 11 : i64} {
  func.func @sil_kernel(%arg0: i32, %arg1: memref<1x64x32xf32, #tpu.memory_space<vmem>>, %arg2: memref<16x64xf32, #tpu.memory_space<vmem>>, %arg3: memref<64x16xf32, #tpu.memory_space<vmem>>, %arg4: memref<4x64x1xf32, #tpu.memory_space<vmem>>, %arg5: memref<32x16xf32, #tpu.memory_space<vmem>>, %arg6: memref<1x16xf32, #tpu.memory_space<vmem>>, %arg7: memref<16x16xf32, #tpu.memory_space<vmem>>, %arg8: memref<1x16xf32, #tpu.memory_space<vmem>>, %arg9: memref<16x32xf32, #tpu.memory_space<vmem>>, %arg10: memref<16x32xf32, #tpu.memory_space<vmem>>, %arg11: memref<1x32xf32, #tpu.memory_space<vmem>>, %arg12: memref<1x32xf32, #tpu.memory_space<vmem>>, %arg13: memref<1x32xf32, #tpu.memory_space<vmem>>, %arg14: memref<3xf32, #tpu.memory_space<smem>>, %arg15: memref<32x96xf32, #tpu.memory_space<vmem>>, %arg16: memref<32x96xf32, #tpu.memory_space<vmem>>, %arg17: memref<1x96xf32, #tpu.memory_space<vmem>>, %arg18: memref<1x96xf32, #tpu.memory_space<vmem>>, %arg19: memref<1x1x32xf32, #tpu.memory_space<vmem>>, %arg20: memref<1x1x32xf32, #tpu.memory_space<vmem>>, %arg21: memref<1x16x4x32xf32, #tpu.memory_space<vmem>>, %arg22: memref<16x4x96xf32, #tpu.memory_space<vmem>>) attributes {dimension_semantics = [#tpu.dimension_semantics<parallel>], iteration_bounds = array<i64: 2>, scalar_prefetch = 0 : i64, scratch_operands = 1 : i64, tpu.core_type = #tpu.core_type<tc>, window_params = [{transform_indices = @transform_0, window_bounds = array<i64: 1, 64, 32>}, {pipeline_mode = #tpu.pipeline_mode<synchronous>, transform_indices = @transform_1, window_bounds = array<i64: 16, 64>}, {pipeline_mode = #tpu.pipeline_mode<synchronous>, transform_indices = @transform_2, window_bounds = array<i64: 64, 16>}, {pipeline_mode = #tpu.pipeline_mode<synchronous>, transform_indices = @transform_3, window_bounds = array<i64: 4, 64, 1>}, {pipeline_mode = #tpu.pipeline_mode<synchronous>, transform_indices = @transform_4, window_bounds = array<i64: 32, 16>}, {pipeline_mode = #tpu.pipeline_mode<synchronous>, transform_indices = @transform_5, window_bounds = array<i64: 1, 16>}, {pipeline_mode = #tpu.pipeline_mode<synchronous>, transform_indices = @transform_6, window_bounds = array<i64: 16, 16>}, {pipeline_mode = #tpu.pipeline_mode<synchronous>, transform_indices = @transform_7, window_bounds = array<i64: 1, 16>}, {pipeline_mode = #tpu.pipeline_mode<synchronous>, transform_indices = @transform_8, window_bounds = array<i64: 16, 32>}, {pipeline_mode = #tpu.pipeline_mode<synchronous>, transform_indices = @transform_9, window_bounds = array<i64: 16, 32>}, {pipeline_mode = #tpu.pipeline_mode<synchronous>, transform_indices = @transform_10, window_bounds = array<i64: 1, 32>}, {pipeline_mode = #tpu.pipeline_mode<synchronous>, transform_indices = @transform_11, window_bounds = array<i64: 1, 32>}, {pipeline_mode = #tpu.pipeline_mode<synchronous>, transform_indices = @transform_12, window_bounds = array<i64: 1, 32>}, {transform_indices = @transform_13, window_bounds = array<i64: 3>}, {pipeline_mode = #tpu.pipeline_mode<synchronous>, transform_indices = @transform_14, window_bounds = array<i64: 32, 96>}, {pipeline_mode = #tpu.pipeline_mode<synchronous>, transform_indices = @transform_15, window_bounds = array<i64: 32, 96>}, {pipeline_mode = #tpu.pipeline_mode<synchronous>, transform_indices = @transform_16, window_bounds = array<i64: 1, 96>}, {pipeline_mode = #tpu.pipeline_mode<synchronous>, transform_indices = @transform_17, window_bounds = array<i64: 1, 96>}, {pipeline_mode = #tpu.pipeline_mode<synchronous>, transform_indices = @transform_18, window_bounds = array<i64: 1, 1, 32>}, {pipeline_mode = #tpu.pipeline_mode<synchronous>, transform_indices = @transform_19, window_bounds = array<i64: 1, 1, 32>}, {transform_indices = @transform_20, window_bounds = array<i64: 1, 16, 4, 32>}]} {
    %c0 = arith.constant 0 : index
    %0 = memref.load %arg14[%c0] : memref<3xf32, #tpu.memory_space<smem>>
    %c1 = arith.constant 1 : index
    %1 = memref.load %arg14[%c1] : memref<3xf32, #tpu.memory_space<smem>>
    %c2 = arith.constant 2 : index
    %2 = memref.load %arg14[%c2] : memref<3xf32, #tpu.memory_space<smem>>
    %c0_0 = arith.constant 0 : index
    %c0_1 = arith.constant 0 : index
    %c0_2 = arith.constant 0 : index
    %3 = vector.load %arg1[%c0_0, %c0_1, %c0_2] : memref<1x64x32xf32, #tpu.memory_space<vmem>>, vector<1x64x32xf32>
    %4 = vector.shape_cast %3 : vector<1x64x32xf32> to vector<64x32xf32>
    %c0_3 = arith.constant 0 : index
    %c0_4 = arith.constant 0 : index
    %5 = vector.load %arg5[%c0_3, %c0_4] : memref<32x16xf32, #tpu.memory_space<vmem>>, vector<32x16xf32>
    %cst = arith.constant dense<0.000000e+00> : vector<64x16xf32>
    %6 = tpu.matmul %4, %5, %cst {dimension_numbers = #tpu.dot_dimension_numbers<[1], [0], [0], [1], [0, 0, 1, 1], [], []>} : vector<64x32xf32>, vector<32x16xf32>, vector<64x16xf32> -> vector<64x16xf32>
    %c0_5 = arith.constant 0 : index
    %c0_6 = arith.constant 0 : index
    %7 = vector.load %arg6[%c0_5, %c0_6] : memref<1x16xf32, #tpu.memory_space<vmem>>, vector<1x16xf32>
    %8 = vector.broadcast %7 : vector<1x16xf32> to vector<64x16xf32>
    %9 = arith.addf %6, %8 : vector<64x16xf32>
    %cst_7 = arith.constant 0.000000e+00 : f32
    %10 = vector.broadcast %cst_7 : f32 to vector<64x16xf32>
    %11 = arith.cmpf oge, %9, %10 : vector<64x16xf32>
    %12 = vector.broadcast %0 : f32 to vector<64x16xf32>
    %13 = arith.mulf %12, %9 : vector<64x16xf32>
    %14 = arith.select %11, %9, %13 : vector<64x16xi1>, vector<64x16xf32>
    %c0_8 = arith.constant 0 : index
    %c0_9 = arith.constant 0 : index
    %15 = vector.load %arg2[%c0_8, %c0_9] : memref<16x64xf32, #tpu.memory_space<vmem>>, vector<16x64xf32>
    %cst_10 = arith.constant dense<0.000000e+00> : vector<16x16xf32>
    %16 = tpu.matmul %15, %14, %cst_10 {dimension_numbers = #tpu.dot_dimension_numbers<[1], [0], [0], [1], [0, 0, 1, 1], [], []>, precision = #tpu.contract_precision<fp32>} : vector<16x64xf32>, vector<64x16xf32>, vector<16x16xf32> -> vector<16x16xf32>
    %c0_11 = arith.constant 0 : index
    %c0_12 = arith.constant 0 : index
    %17 = vector.load %arg7[%c0_11, %c0_12] : memref<16x16xf32, #tpu.memory_space<vmem>>, vector<16x16xf32>
    %cst_13 = arith.constant dense<0.000000e+00> : vector<16x16xf32>
    %18 = tpu.matmul %16, %17, %cst_13 {dimension_numbers = #tpu.dot_dimension_numbers<[1], [0], [0], [1], [0, 0, 1, 1], [], []>} : vector<16x16xf32>, vector<16x16xf32>, vector<16x16xf32> -> vector<16x16xf32>
    %c0_14 = arith.constant 0 : index
    %c0_15 = arith.constant 0 : index
    %19 = vector.load %arg8[%c0_14, %c0_15] : memref<1x16xf32, #tpu.memory_space<vmem>>, vector<1x16xf32>
    %20 = vector.broadcast %19 : vector<1x16xf32> to vector<16x16xf32>
    %21 = arith.addf %18, %20 : vector<16x16xf32>
    %cst_16 = arith.constant 0.000000e+00 : f32
    %22 = vector.broadcast %cst_16 : f32 to vector<16x16xf32>
    %23 = arith.cmpf oge, %21, %22 : vector<16x16xf32>
    %24 = vector.broadcast %1 : f32 to vector<16x16xf32>
    %25 = arith.mulf %24, %21 : vector<16x16xf32>
    %26 = arith.select %23, %21, %25 : vector<16x16xi1>, vector<16x16xf32>
    %c0_17 = arith.constant 0 : index
    %c0_18 = arith.constant 0 : index
    %27 = vector.load %arg10[%c0_17, %c0_18] : memref<16x32xf32, #tpu.memory_space<vmem>>, vector<16x32xf32>
    %cst_19 = arith.constant dense<0.000000e+00> : vector<16x32xf32>
    %28 = tpu.matmul %26, %27, %cst_19 {dimension_numbers = #tpu.dot_dimension_numbers<[1], [0], [0], [1], [0, 0, 1, 1], [], []>} : vector<16x16xf32>, vector<16x32xf32>, vector<16x32xf32> -> vector<16x32xf32>
    %c0_20 = arith.constant 0 : index
    %c0_21 = arith.constant 0 : index
    %29 = vector.load %arg3[%c0_20, %c0_21] : memref<64x16xf32, #tpu.memory_space<vmem>>, vector<64x16xf32>
    %cst_22 = arith.constant dense<0.000000e+00> : vector<64x32xf32>
    %30 = tpu.matmul %29, %28, %cst_22 {dimension_numbers = #tpu.dot_dimension_numbers<[1], [0], [0], [1], [0, 0, 1, 1], [], []>, precision = #tpu.contract_precision<fp32>} : vector<64x16xf32>, vector<16x32xf32>, vector<64x32xf32> -> vector<64x32xf32>
    %c0_23 = arith.constant 0 : index
    %c0_24 = arith.constant 0 : index
    %31 = vector.load %arg9[%c0_23, %c0_24] : memref<16x32xf32, #tpu.memory_space<vmem>>, vector<16x32xf32>
    %cst_25 = arith.constant dense<0.000000e+00> : vector<64x32xf32>
    %32 = tpu.matmul %14, %31, %cst_25 {dimension_numbers = #tpu.dot_dimension_numbers<[1], [0], [0], [1], [0, 0, 1, 1], [], []>} : vector<64x16xf32>, vector<16x32xf32>, vector<64x32xf32> -> vector<64x32xf32>
    %33 = arith.addf %32, %30 : vector<64x32xf32>
    %c0_26 = arith.constant 0 : index
    %c0_27 = arith.constant 0 : index
    %34 = vector.load %arg11[%c0_26, %c0_27] : memref<1x32xf32, #tpu.memory_space<vmem>>, vector<1x32xf32>
    %35 = vector.broadcast %34 : vector<1x32xf32> to vector<64x32xf32>
    %36 = arith.addf %33, %35 : vector<64x32xf32>
    %cst_28 = arith.constant 0.000000e+00 : f32
    %37 = vector.broadcast %cst_28 : f32 to vector<64x32xf32>
    %38 = arith.cmpf oge, %36, %37 : vector<64x32xf32>
    %39 = vector.broadcast %2 : f32 to vector<64x32xf32>
    %40 = arith.mulf %39, %36 : vector<64x32xf32>
    %41 = arith.select %38, %36, %40 : vector<64x32xi1>, vector<64x32xf32>
    %cst_29 = arith.constant dense<0.000000e+00> : vector<64xf32>
    %42 = vector.multi_reduction <add>, %41, %cst_29 [1] : vector<64x32xf32> to vector<64xf32>
    %43 = vector.shape_cast %42 : vector<64xf32> to vector<64x1xf32>
    %44 = arith.mulf %41, %41 : vector<64x32xf32>
    %cst_30 = arith.constant dense<0.000000e+00> : vector<64xf32>
    %45 = vector.multi_reduction <add>, %44, %cst_30 [1] : vector<64x32xf32> to vector<64xf32>
    %46 = vector.shape_cast %45 : vector<64xf32> to vector<64x1xf32>
    %cst_31 = arith.constant 0.000000e+00 : f32
    %47 = vector.broadcast %cst_31 : f32 to vector<64x1xf32>
    %cst_32 = arith.constant 0.000000e+00 : f32
    %48 = vector.broadcast %cst_32 : f32 to vector<64x1xf32>
    %c0_33 = arith.constant 0 : index
    %c0_34 = arith.constant 0 : index
    %c0_35 = arith.constant 0 : index
    %49 = vector.load %arg4[%c0_33, %c0_34, %c0_35] : memref<4x64x1xf32, #tpu.memory_space<vmem>>, vector<1x64x1xf32>
    %50 = vector.shape_cast %49 : vector<1x64x1xf32> to vector<64x1xf32>
    %51 = arith.mulf %43, %50 : vector<64x1xf32>
    %52 = vector.shape_cast %51 : vector<64x1xf32> to vector<1x64x1xf32>
    %cst_36 = arith.constant dense<0.000000e+00> : vector<1xf32>
    %53 = vector.multi_reduction <add>, %52, %cst_36 [1, 2] : vector<1x64x1xf32> to vector<1xf32>
    %54 = vector.shape_cast %53 : vector<1xf32> to vector<1x1x1xf32>
    %55 = vector.extract %54[0, 0, 0] : f32 from vector<1x1x1xf32>
    %cst_37 = arith.constant 0.001953125 : f32
    %56 = arith.mulf %55, %cst_37 : f32
    %57 = arith.mulf %46, %50 : vector<64x1xf32>
    %58 = vector.shape_cast %57 : vector<64x1xf32> to vector<1x64x1xf32>
    %cst_38 = arith.constant dense<0.000000e+00> : vector<1xf32>
    %59 = vector.multi_reduction <add>, %58, %cst_38 [1, 2] : vector<1x64x1xf32> to vector<1xf32>
    %60 = vector.shape_cast %59 : vector<1xf32> to vector<1x1x1xf32>
    %61 = vector.extract %60[0, 0, 0] : f32 from vector<1x1x1xf32>
    %cst_39 = arith.constant 0.001953125 : f32
    %62 = arith.mulf %61, %cst_39 : f32
    %63 = arith.mulf %56, %56 : f32
    %64 = arith.subf %62, %63 : f32
    %cst_40 = arith.constant 9.99999974E-6 : f32
    %65 = arith.addf %64, %cst_40 : f32
    %66 = math.rsqrt %65 : f32
    %67 = vector.broadcast %56 : f32 to vector<64x1xf32>
    %68 = arith.mulf %50, %67 : vector<64x1xf32>
    %69 = arith.addf %47, %68 : vector<64x1xf32>
    %70 = vector.broadcast %66 : f32 to vector<64x1xf32>
    %71 = arith.mulf %50, %70 : vector<64x1xf32>
    %72 = arith.addf %48, %71 : vector<64x1xf32>
    %c1_41 = arith.constant 1 : index
    %c0_42 = arith.constant 0 : index
    %c0_43 = arith.constant 0 : index
    %73 = vector.load %arg4[%c1_41, %c0_42, %c0_43] : memref<4x64x1xf32, #tpu.memory_space<vmem>>, vector<1x64x1xf32>
    %74 = vector.shape_cast %73 : vector<1x64x1xf32> to vector<64x1xf32>
    %75 = arith.mulf %43, %74 : vector<64x1xf32>
    %76 = vector.shape_cast %75 : vector<64x1xf32> to vector<1x64x1xf32>
    %cst_44 = arith.constant dense<0.000000e+00> : vector<1xf32>
    %77 = vector.multi_reduction <add>, %76, %cst_44 [1, 2] : vector<1x64x1xf32> to vector<1xf32>
    %78 = vector.shape_cast %77 : vector<1xf32> to vector<1x1x1xf32>
    %79 = vector.extract %78[0, 0, 0] : f32 from vector<1x1x1xf32>
    %cst_45 = arith.constant 0.001953125 : f32
    %80 = arith.mulf %79, %cst_45 : f32
    %81 = arith.mulf %46, %74 : vector<64x1xf32>
    %82 = vector.shape_cast %81 : vector<64x1xf32> to vector<1x64x1xf32>
    %cst_46 = arith.constant dense<0.000000e+00> : vector<1xf32>
    %83 = vector.multi_reduction <add>, %82, %cst_46 [1, 2] : vector<1x64x1xf32> to vector<1xf32>
    %84 = vector.shape_cast %83 : vector<1xf32> to vector<1x1x1xf32>
    %85 = vector.extract %84[0, 0, 0] : f32 from vector<1x1x1xf32>
    %cst_47 = arith.constant 0.001953125 : f32
    %86 = arith.mulf %85, %cst_47 : f32
    %87 = arith.mulf %80, %80 : f32
    %88 = arith.subf %86, %87 : f32
    %cst_48 = arith.constant 9.99999974E-6 : f32
    %89 = arith.addf %88, %cst_48 : f32
    %90 = math.rsqrt %89 : f32
    %91 = vector.broadcast %80 : f32 to vector<64x1xf32>
    %92 = arith.mulf %74, %91 : vector<64x1xf32>
    %93 = arith.addf %69, %92 : vector<64x1xf32>
    %94 = vector.broadcast %90 : f32 to vector<64x1xf32>
    %95 = arith.mulf %74, %94 : vector<64x1xf32>
    %96 = arith.addf %72, %95 : vector<64x1xf32>
    %c2_49 = arith.constant 2 : index
    %c0_50 = arith.constant 0 : index
    %c0_51 = arith.constant 0 : index
    %97 = vector.load %arg4[%c2_49, %c0_50, %c0_51] : memref<4x64x1xf32, #tpu.memory_space<vmem>>, vector<1x64x1xf32>
    %98 = vector.shape_cast %97 : vector<1x64x1xf32> to vector<64x1xf32>
    %99 = arith.mulf %43, %98 : vector<64x1xf32>
    %100 = vector.shape_cast %99 : vector<64x1xf32> to vector<1x64x1xf32>
    %cst_52 = arith.constant dense<0.000000e+00> : vector<1xf32>
    %101 = vector.multi_reduction <add>, %100, %cst_52 [1, 2] : vector<1x64x1xf32> to vector<1xf32>
    %102 = vector.shape_cast %101 : vector<1xf32> to vector<1x1x1xf32>
    %103 = vector.extract %102[0, 0, 0] : f32 from vector<1x1x1xf32>
    %cst_53 = arith.constant 0.001953125 : f32
    %104 = arith.mulf %103, %cst_53 : f32
    %105 = arith.mulf %46, %98 : vector<64x1xf32>
    %106 = vector.shape_cast %105 : vector<64x1xf32> to vector<1x64x1xf32>
    %cst_54 = arith.constant dense<0.000000e+00> : vector<1xf32>
    %107 = vector.multi_reduction <add>, %106, %cst_54 [1, 2] : vector<1x64x1xf32> to vector<1xf32>
    %108 = vector.shape_cast %107 : vector<1xf32> to vector<1x1x1xf32>
    %109 = vector.extract %108[0, 0, 0] : f32 from vector<1x1x1xf32>
    %cst_55 = arith.constant 0.001953125 : f32
    %110 = arith.mulf %109, %cst_55 : f32
    %111 = arith.mulf %104, %104 : f32
    %112 = arith.subf %110, %111 : f32
    %cst_56 = arith.constant 9.99999974E-6 : f32
    %113 = arith.addf %112, %cst_56 : f32
    %114 = math.rsqrt %113 : f32
    %115 = vector.broadcast %104 : f32 to vector<64x1xf32>
    %116 = arith.mulf %98, %115 : vector<64x1xf32>
    %117 = arith.addf %93, %116 : vector<64x1xf32>
    %118 = vector.broadcast %114 : f32 to vector<64x1xf32>
    %119 = arith.mulf %98, %118 : vector<64x1xf32>
    %120 = arith.addf %96, %119 : vector<64x1xf32>
    %c3 = arith.constant 3 : index
    %c0_57 = arith.constant 0 : index
    %c0_58 = arith.constant 0 : index
    %121 = vector.load %arg4[%c3, %c0_57, %c0_58] : memref<4x64x1xf32, #tpu.memory_space<vmem>>, vector<1x64x1xf32>
    %122 = vector.shape_cast %121 : vector<1x64x1xf32> to vector<64x1xf32>
    %123 = arith.mulf %43, %122 : vector<64x1xf32>
    %124 = vector.shape_cast %123 : vector<64x1xf32> to vector<1x64x1xf32>
    %cst_59 = arith.constant dense<0.000000e+00> : vector<1xf32>
    %125 = vector.multi_reduction <add>, %124, %cst_59 [1, 2] : vector<1x64x1xf32> to vector<1xf32>
    %126 = vector.shape_cast %125 : vector<1xf32> to vector<1x1x1xf32>
    %127 = vector.extract %126[0, 0, 0] : f32 from vector<1x1x1xf32>
    %cst_60 = arith.constant 0.001953125 : f32
    %128 = arith.mulf %127, %cst_60 : f32
    %129 = arith.mulf %46, %122 : vector<64x1xf32>
    %130 = vector.shape_cast %129 : vector<64x1xf32> to vector<1x64x1xf32>
    %cst_61 = arith.constant dense<0.000000e+00> : vector<1xf32>
    %131 = vector.multi_reduction <add>, %130, %cst_61 [1, 2] : vector<1x64x1xf32> to vector<1xf32>
    %132 = vector.shape_cast %131 : vector<1xf32> to vector<1x1x1xf32>
    %133 = vector.extract %132[0, 0, 0] : f32 from vector<1x1x1xf32>
    %cst_62 = arith.constant 0.001953125 : f32
    %134 = arith.mulf %133, %cst_62 : f32
    %135 = arith.mulf %128, %128 : f32
    %136 = arith.subf %134, %135 : f32
    %cst_63 = arith.constant 9.99999974E-6 : f32
    %137 = arith.addf %136, %cst_63 : f32
    %138 = math.rsqrt %137 : f32
    %139 = vector.broadcast %128 : f32 to vector<64x1xf32>
    %140 = arith.mulf %122, %139 : vector<64x1xf32>
    %141 = arith.addf %117, %140 : vector<64x1xf32>
    %142 = vector.broadcast %138 : f32 to vector<64x1xf32>
    %143 = arith.mulf %122, %142 : vector<64x1xf32>
    %144 = arith.addf %120, %143 : vector<64x1xf32>
    %145 = vector.broadcast %141 : vector<64x1xf32> to vector<64x32xf32>
    %146 = arith.subf %41, %145 : vector<64x32xf32>
    %147 = vector.broadcast %144 : vector<64x1xf32> to vector<64x32xf32>
    %148 = arith.mulf %146, %147 : vector<64x32xf32>
    %c0_64 = arith.constant 0 : index
    %c0_65 = arith.constant 0 : index
    %149 = vector.load %arg12[%c0_64, %c0_65] : memref<1x32xf32, #tpu.memory_space<vmem>>, vector<1x32xf32>
    %150 = vector.broadcast %149 : vector<1x32xf32> to vector<64x32xf32>
    %151 = arith.mulf %148, %150 : vector<64x32xf32>
    %c0_66 = arith.constant 0 : index
    %c0_67 = arith.constant 0 : index
    %152 = vector.load %arg13[%c0_66, %c0_67] : memref<1x32xf32, #tpu.memory_space<vmem>>, vector<1x32xf32>
    %153 = vector.broadcast %152 : vector<1x32xf32> to vector<64x32xf32>
    %154 = arith.addf %151, %153 : vector<64x32xf32>
    %155 = arith.addf %4, %154 : vector<64x32xf32>
    %c0_68 = arith.constant 0 : index
    %c0_69 = arith.constant 0 : index
    %156 = vector.load %arg15[%c0_68, %c0_69] : memref<32x96xf32, #tpu.memory_space<vmem>>, vector<32x96xf32>
    %cst_70 = arith.constant dense<0.000000e+00> : vector<64x96xf32>
    %157 = tpu.matmul %155, %156, %cst_70 {dimension_numbers = #tpu.dot_dimension_numbers<[1], [0], [0], [1], [0, 0, 1, 1], [], []>} : vector<64x32xf32>, vector<32x96xf32>, vector<64x96xf32> -> vector<64x96xf32>
    %c0_71 = arith.constant 0 : index
    %c0_72 = arith.constant 0 : index
    %158 = vector.load %arg17[%c0_71, %c0_72] : memref<1x96xf32, #tpu.memory_space<vmem>>, vector<1x96xf32>
    %159 = vector.broadcast %158 : vector<1x96xf32> to vector<64x96xf32>
    %160 = arith.addf %157, %159 : vector<64x96xf32>
    %161 = vector.extract_strided_slice %160 {offsets = [0, 0], sizes = [4, 96], strides = [1, 1]} : vector<64x96xf32> to vector<4x96xf32>
    %c0_73 = arith.constant 0 : index
    %c0_74 = arith.constant 0 : index
    %c0_75 = arith.constant 0 : index
    %162 = vector.load %arg22[%c0_73, %c0_74, %c0_75] : memref<16x4x96xf32, #tpu.memory_space<vmem>>, vector<1x4x96xf32>
    %163 = vector.shape_cast %162 : vector<1x4x96xf32> to vector<4x96xf32>
    %164 = vector.shape_cast %161 : vector<4x96xf32> to vector<1x4x96xf32>
    tpu.vector_store %arg22[%c0_73, %c0_74, %c0_75], %164 {strides = array<i32>} : memref<16x4x96xf32, #tpu.memory_space<vmem>>, vector<1x4x96xf32>,
    %165 = vector.extract_strided_slice %160 {offsets = [4, 0], sizes = [4, 96], strides = [1, 1]} : vector<64x96xf32> to vector<4x96xf32>
    %c1_76 = arith.constant 1 : index
    %c0_77 = arith.constant 0 : index
    %c0_78 = arith.constant 0 : index
    %166 = vector.load %arg22[%c1_76, %c0_77, %c0_78] : memref<16x4x96xf32, #tpu.memory_space<vmem>>, vector<1x4x96xf32>
    %167 = vector.shape_cast %166 : vector<1x4x96xf32> to vector<4x96xf32>
    %168 = vector.shape_cast %165 : vector<4x96xf32> to vector<1x4x96xf32>
    tpu.vector_store %arg22[%c1_76, %c0_77, %c0_78], %168 {strides = array<i32>} : memref<16x4x96xf32, #tpu.memory_space<vmem>>, vector<1x4x96xf32>,
    %169 = vector.extract_strided_slice %160 {offsets = [8, 0], sizes = [4, 96], strides = [1, 1]} : vector<64x96xf32> to vector<4x96xf32>
    %c2_79 = arith.constant 2 : index
    %c0_80 = arith.constant 0 : index
    %c0_81 = arith.constant 0 : index
    %170 = vector.load %arg22[%c2_79, %c0_80, %c0_81] : memref<16x4x96xf32, #tpu.memory_space<vmem>>, vector<1x4x96xf32>
    %171 = vector.shape_cast %170 : vector<1x4x96xf32> to vector<4x96xf32>
    %172 = vector.shape_cast %169 : vector<4x96xf32> to vector<1x4x96xf32>
    tpu.vector_store %arg22[%c2_79, %c0_80, %c0_81], %172 {strides = array<i32>} : memref<16x4x96xf32, #tpu.memory_space<vmem>>, vector<1x4x96xf32>,
    %173 = vector.extract_strided_slice %160 {offsets = [12, 0], sizes = [4, 96], strides = [1, 1]} : vector<64x96xf32> to vector<4x96xf32>
    %c3_82 = arith.constant 3 : index
    %c0_83 = arith.constant 0 : index
    %c0_84 = arith.constant 0 : index
    %174 = vector.load %arg22[%c3_82, %c0_83, %c0_84] : memref<16x4x96xf32, #tpu.memory_space<vmem>>, vector<1x4x96xf32>
    %175 = vector.shape_cast %174 : vector<1x4x96xf32> to vector<4x96xf32>
    %176 = vector.shape_cast %173 : vector<4x96xf32> to vector<1x4x96xf32>
    tpu.vector_store %arg22[%c3_82, %c0_83, %c0_84], %176 {strides = array<i32>} : memref<16x4x96xf32, #tpu.memory_space<vmem>>, vector<1x4x96xf32>,
    %177 = vector.extract_strided_slice %160 {offsets = [16, 0], sizes = [4, 96], strides = [1, 1]} : vector<64x96xf32> to vector<4x96xf32>
    %c4 = arith.constant 4 : index
    %c0_85 = arith.constant 0 : index
    %c0_86 = arith.constant 0 : index
    %178 = vector.load %arg22[%c4, %c0_85, %c0_86] : memref<16x4x96xf32, #tpu.memory_space<vmem>>, vector<1x4x96xf32>
    %179 = vector.shape_cast %178 : vector<1x4x96xf32> to vector<4x96xf32>
    %180 = vector.shape_cast %177 : vector<4x96xf32> to vector<1x4x96xf32>
    tpu.vector_store %arg22[%c4, %c0_85, %c0_86], %180 {strides = array<i32>} : memref<16x4x96xf32, #tpu.memory_space<vmem>>, vector<1x4x96xf32>,
    %181 = vector.extract_strided_slice %160 {offsets = [20, 0], sizes = [4, 96], strides = [1, 1]} : vector<64x96xf32> to vector<4x96xf32>
    %c5 = arith.constant 5 : index
    %c0_87 = arith.constant 0 : index
    %c0_88 = arith.constant 0 : index
    %182 = vector.load %arg22[%c5, %c0_87, %c0_88] : memref<16x4x96xf32, #tpu.memory_space<vmem>>, vector<1x4x96xf32>
    %183 = vector.shape_cast %182 : vector<1x4x96xf32> to vector<4x96xf32>
    %184 = vector.shape_cast %181 : vector<4x96xf32> to vector<1x4x96xf32>
    tpu.vector_store %arg22[%c5, %c0_87, %c0_88], %184 {strides = array<i32>} : memref<16x4x96xf32, #tpu.memory_space<vmem>>, vector<1x4x96xf32>,
    %185 = vector.extract_strided_slice %160 {offsets = [24, 0], sizes = [4, 96], strides = [1, 1]} : vector<64x96xf32> to vector<4x96xf32>
    %c6 = arith.constant 6 : index
    %c0_89 = arith.constant 0 : index
    %c0_90 = arith.constant 0 : index
    %186 = vector.load %arg22[%c6, %c0_89, %c0_90] : memref<16x4x96xf32, #tpu.memory_space<vmem>>, vector<1x4x96xf32>
    %187 = vector.shape_cast %186 : vector<1x4x96xf32> to vector<4x96xf32>
    %188 = vector.shape_cast %185 : vector<4x96xf32> to vector<1x4x96xf32>
    tpu.vector_store %arg22[%c6, %c0_89, %c0_90], %188 {strides = array<i32>} : memref<16x4x96xf32, #tpu.memory_space<vmem>>, vector<1x4x96xf32>,
    %189 = vector.extract_strided_slice %160 {offsets = [28, 0], sizes = [4, 96], strides = [1, 1]} : vector<64x96xf32> to vector<4x96xf32>
    %c7 = arith.constant 7 : index
    %c0_91 = arith.constant 0 : index
    %c0_92 = arith.constant 0 : index
    %190 = vector.load %arg22[%c7, %c0_91, %c0_92] : memref<16x4x96xf32, #tpu.memory_space<vmem>>, vector<1x4x96xf32>
    %191 = vector.shape_cast %190 : vector<1x4x96xf32> to vector<4x96xf32>
    %192 = vector.shape_cast %189 : vector<4x96xf32> to vector<1x4x96xf32>
    tpu.vector_store %arg22[%c7, %c0_91, %c0_92], %192 {strides = array<i32>} : memref<16x4x96xf32, #tpu.memory_space<vmem>>, vector<1x4x96xf32>,
    %193 = vector.extract_strided_slice %160 {offsets = [32, 0], sizes = [4, 96], strides = [1, 1]} : vector<64x96xf32> to vector<4x96xf32>
    %c8 = arith.constant 8 : index
    %c0_93 = arith.constant 0 : index
    %c0_94 = arith.constant 0 : index
    %194 = vector.load %arg22[%c8, %c0_93, %c0_94] : memref<16x4x96xf32, #tpu.memory_space<vmem>>, vector<1x4x96xf32>
    %195 = vector.shape_cast %194 : vector<1x4x96xf32> to vector<4x96xf32>
    %196 = vector.shape_cast %193 : vector<4x96xf32> to vector<1x4x96xf32>
    tpu.vector_store %arg22[%c8, %c0_93, %c0_94], %196 {strides = array<i32>} : memref<16x4x96xf32, #tpu.memory_space<vmem>>, vector<1x4x96xf32>,
    %197 = vector.extract_strided_slice %160 {offsets = [36, 0], sizes = [4, 96], strides = [1, 1]} : vector<64x96xf32> to vector<4x96xf32>
    %c9 = arith.constant 9 : index
    %c0_95 = arith.constant 0 : index
    %c0_96 = arith.constant 0 : index
    %198 = vector.load %arg22[%c9, %c0_95, %c0_96] : memref<16x4x96xf32, #tpu.memory_space<vmem>>, vector<1x4x96xf32>
    %199 = vector.shape_cast %198 : vector<1x4x96xf32> to vector<4x96xf32>
    %200 = vector.shape_cast %197 : vector<4x96xf32> to vector<1x4x96xf32>
    tpu.vector_store %arg22[%c9, %c0_95, %c0_96], %200 {strides = array<i32>} : memref<16x4x96xf32, #tpu.memory_space<vmem>>, vector<1x4x96xf32>,
    %201 = vector.extract_strided_slice %160 {offsets = [40, 0], sizes = [4, 96], strides = [1, 1]} : vector<64x96xf32> to vector<4x96xf32>
    %c10 = arith.constant 10 : index
    %c0_97 = arith.constant 0 : index
    %c0_98 = arith.constant 0 : index
    %202 = vector.load %arg22[%c10, %c0_97, %c0_98] : memref<16x4x96xf32, #tpu.memory_space<vmem>>, vector<1x4x96xf32>
    %203 = vector.shape_cast %202 : vector<1x4x96xf32> to vector<4x96xf32>
    %204 = vector.shape_cast %201 : vector<4x96xf32> to vector<1x4x96xf32>
    tpu.vector_store %arg22[%c10, %c0_97, %c0_98], %204 {strides = array<i32>} : memref<16x4x96xf32, #tpu.memory_space<vmem>>, vector<1x4x96xf32>,
    %205 = vector.extract_strided_slice %160 {offsets = [44, 0], sizes = [4, 96], strides = [1, 1]} : vector<64x96xf32> to vector<4x96xf32>
    %c11 = arith.constant 11 : index
    %c0_99 = arith.constant 0 : index
    %c0_100 = arith.constant 0 : index
    %206 = vector.load %arg22[%c11, %c0_99, %c0_100] : memref<16x4x96xf32, #tpu.memory_space<vmem>>, vector<1x4x96xf32>
    %207 = vector.shape_cast %206 : vector<1x4x96xf32> to vector<4x96xf32>
    %208 = vector.shape_cast %205 : vector<4x96xf32> to vector<1x4x96xf32>
    tpu.vector_store %arg22[%c11, %c0_99, %c0_100], %208 {strides = array<i32>} : memref<16x4x96xf32, #tpu.memory_space<vmem>>, vector<1x4x96xf32>,
    %209 = vector.extract_strided_slice %160 {offsets = [48, 0], sizes = [4, 96], strides = [1, 1]} : vector<64x96xf32> to vector<4x96xf32>
    %c12 = arith.constant 12 : index
    %c0_101 = arith.constant 0 : index
    %c0_102 = arith.constant 0 : index
    %210 = vector.load %arg22[%c12, %c0_101, %c0_102] : memref<16x4x96xf32, #tpu.memory_space<vmem>>, vector<1x4x96xf32>
    %211 = vector.shape_cast %210 : vector<1x4x96xf32> to vector<4x96xf32>
    %212 = vector.shape_cast %209 : vector<4x96xf32> to vector<1x4x96xf32>
    tpu.vector_store %arg22[%c12, %c0_101, %c0_102], %212 {strides = array<i32>} : memref<16x4x96xf32, #tpu.memory_space<vmem>>, vector<1x4x96xf32>,
    %213 = vector.extract_strided_slice %160 {offsets = [52, 0], sizes = [4, 96], strides = [1, 1]} : vector<64x96xf32> to vector<4x96xf32>
    %c13 = arith.constant 13 : index
    %c0_103 = arith.constant 0 : index
    %c0_104 = arith.constant 0 : index
    %214 = vector.load %arg22[%c13, %c0_103, %c0_104] : memref<16x4x96xf32, #tpu.memory_space<vmem>>, vector<1x4x96xf32>
    %215 = vector.shape_cast %214 : vector<1x4x96xf32> to vector<4x96xf32>
    %216 = vector.shape_cast %213 : vector<4x96xf32> to vector<1x4x96xf32>
    tpu.vector_store %arg22[%c13, %c0_103, %c0_104], %216 {strides = array<i32>} : memref<16x4x96xf32, #tpu.memory_space<vmem>>, vector<1x4x96xf32>,
    %217 = vector.extract_strided_slice %160 {offsets = [56, 0], sizes = [4, 96], strides = [1, 1]} : vector<64x96xf32> to vector<4x96xf32>
    %c14 = arith.constant 14 : index
    %c0_105 = arith.constant 0 : index
    %c0_106 = arith.constant 0 : index
    %218 = vector.load %arg22[%c14, %c0_105, %c0_106] : memref<16x4x96xf32, #tpu.memory_space<vmem>>, vector<1x4x96xf32>
    %219 = vector.shape_cast %218 : vector<1x4x96xf32> to vector<4x96xf32>
    %220 = vector.shape_cast %217 : vector<4x96xf32> to vector<1x4x96xf32>
    tpu.vector_store %arg22[%c14, %c0_105, %c0_106], %220 {strides = array<i32>} : memref<16x4x96xf32, #tpu.memory_space<vmem>>, vector<1x4x96xf32>,
    %221 = vector.extract_strided_slice %160 {offsets = [60, 0], sizes = [4, 96], strides = [1, 1]} : vector<64x96xf32> to vector<4x96xf32>
    %c15 = arith.constant 15 : index
    %c0_107 = arith.constant 0 : index
    %c0_108 = arith.constant 0 : index
    %222 = vector.load %arg22[%c15, %c0_107, %c0_108] : memref<16x4x96xf32, #tpu.memory_space<vmem>>, vector<1x4x96xf32>
    %223 = vector.shape_cast %222 : vector<1x4x96xf32> to vector<4x96xf32>
    %224 = vector.shape_cast %221 : vector<4x96xf32> to vector<1x4x96xf32>
    tpu.vector_store %arg22[%c15, %c0_107, %c0_108], %224 {strides = array<i32>} : memref<16x4x96xf32, #tpu.memory_space<vmem>>, vector<1x4x96xf32>,
    %c0_109 = arith.constant 0 : index
    %c0_110 = arith.constant 0 : index
    %225 = vector.load %arg16[%c0_109, %c0_110] : memref<32x96xf32, #tpu.memory_space<vmem>>, vector<32x96xf32>
    %c0_111 = arith.constant 0 : index
    %c0_112 = arith.constant 0 : index
    %226 = vector.load %arg18[%c0_111, %c0_112] : memref<1x96xf32, #tpu.memory_space<vmem>>, vector<1x96xf32>
    %cst_113 = arith.constant 0.000000e+00 : f32
    %227 = vector.broadcast %cst_113 : f32 to vector<4x32xf32>
    %cst_114 = arith.constant 0.000000e+00 : f32
    %228 = vector.broadcast %cst_114 : f32 to vector<4x1xf32>
    %c0_i32 = arith.constant 0 : i32
    %c16_i32 = arith.constant 16 : i32
    %229 = arith.addi %c0_i32, %c16_i32 : i32
    %c1_i32 = arith.constant 1 : i32
    %230:3 = scf.for %arg23 = %c0_i32 to %229 step %c1_i32 iter_args(%arg24 = %227, %arg25 = %228, %arg26 = %228) -> (vector<4x32xf32>, vector<4x1xf32>, vector<4x1xf32>)  : i32 {
      %257 = arith.index_cast %arg23 : i32 to index
      %c0_133 = arith.constant 0 : index
      %c0_134 = arith.constant 0 : index
      %258 = vector.load %arg22[%257, %c0_133, %c0_134] : memref<16x4x96xf32, #tpu.memory_space<vmem>>, vector<1x4x96xf32>
      %259 = vector.shape_cast %258 : vector<1x4x96xf32> to vector<4x96xf32>
      %cst_135 = arith.constant dense<0.000000e+00> : vector<4x96xf32>
      %260 = tpu.matmul %arg24, %225, %cst_135 {dimension_numbers = #tpu.dot_dimension_numbers<[1], [0], [0], [1], [0, 0, 1, 1], [], []>} : vector<4x32xf32>, vector<32x96xf32>, vector<4x96xf32> -> vector<4x96xf32>
      %261 = vector.broadcast %226 : vector<1x96xf32> to vector<4x96xf32>
      %262 = arith.addf %260, %261 : vector<4x96xf32>
      %263 = vector.extract_strided_slice %259 {offsets = [0, 0], sizes = [4, 32], strides = [1, 1]} : vector<4x96xf32> to vector<4x32xf32>
      %264 = vector.extract_strided_slice %262 {offsets = [0, 0], sizes = [4, 32], strides = [1, 1]} : vector<4x96xf32> to vector<4x32xf32>
      %265 = arith.addf %263, %264 : vector<4x32xf32>
      %266 = arith.negf %265 : vector<4x32xf32>
      %267 = math.exp %266 : vector<4x32xf32>
      %cst_136 = arith.constant 1.000000e+00 : f32
      %268 = vector.broadcast %cst_136 : f32 to vector<4x32xf32>
      %269 = arith.addf %268, %267 : vector<4x32xf32>
      %270 = arith.divf %268, %269 : vector<4x32xf32>
      %271 = vector.extract_strided_slice %259 {offsets = [0, 32], sizes = [4, 32], strides = [1, 1]} : vector<4x96xf32> to vector<4x32xf32>
      %272 = vector.extract_strided_slice %262 {offsets = [0, 32], sizes = [4, 32], strides = [1, 1]} : vector<4x96xf32> to vector<4x32xf32>
      %273 = arith.addf %271, %272 : vector<4x32xf32>
      %274 = arith.negf %273 : vector<4x32xf32>
      %275 = math.exp %274 : vector<4x32xf32>
      %cst_137 = arith.constant 1.000000e+00 : f32
      %276 = vector.broadcast %cst_137 : f32 to vector<4x32xf32>
      %277 = arith.addf %276, %275 : vector<4x32xf32>
      %278 = arith.divf %276, %277 : vector<4x32xf32>
      %279 = vector.extract_strided_slice %259 {offsets = [0, 64], sizes = [4, 32], strides = [1, 1]} : vector<4x96xf32> to vector<4x32xf32>
      %280 = vector.extract_strided_slice %262 {offsets = [0, 64], sizes = [4, 32], strides = [1, 1]} : vector<4x96xf32> to vector<4x32xf32>
      %281 = arith.mulf %270, %280 : vector<4x32xf32>
      %282 = arith.addf %279, %281 : vector<4x32xf32>
      %283 = math.tanh %282 : vector<4x32xf32>
      %cst_138 = arith.constant 1.000000e+00 : f32
      %284 = vector.broadcast %cst_138 : f32 to vector<4x32xf32>
      %285 = arith.subf %284, %278 : vector<4x32xf32>
      %286 = arith.mulf %285, %283 : vector<4x32xf32>
      %287 = arith.mulf %278, %arg24 : vector<4x32xf32>
      %288 = arith.addf %286, %287 : vector<4x32xf32>
      %c0_139 = arith.constant 0 : index
      %289 = arith.index_cast %arg23 : i32 to index
      %c0_140 = arith.constant 0 : index
      %c0_141 = arith.constant 0 : index
      %290 = vector.load %arg21[%c0_139, %289, %c0_140, %c0_141] : memref<1x16x4x32xf32, #tpu.memory_space<vmem>>, vector<1x1x4x32xf32>
      %291 = vector.shape_cast %290 : vector<1x1x4x32xf32> to vector<4x32xf32>
      %292 = vector.shape_cast %288 : vector<4x32xf32> to vector<1x1x4x32xf32>
      tpu.vector_store %arg21[%c0_139, %289, %c0_140, %c0_141], %292 {strides = array<i32>} : memref<1x16x4x32xf32, #tpu.memory_space<vmem>>, vector<1x1x4x32xf32>,
      %cst_142 = arith.constant dense<0.000000e+00> : vector<4xf32>
      %293 = vector.multi_reduction <add>, %288, %cst_142 [1] : vector<4x32xf32> to vector<4xf32>
      %294 = vector.shape_cast %293 : vector<4xf32> to vector<4x1xf32>
      %295 = arith.addf %arg25, %294 : vector<4x1xf32>
      %296 = arith.mulf %288, %288 : vector<4x32xf32>
      %cst_143 = arith.constant dense<0.000000e+00> : vector<4xf32>
      %297 = vector.multi_reduction <add>, %296, %cst_143 [1] : vector<4x32xf32> to vector<4xf32>
      %298 = vector.shape_cast %297 : vector<4xf32> to vector<4x1xf32>
      %299 = arith.addf %arg26, %298 : vector<4x1xf32>
      scf.yield %288, %295, %299 : vector<4x32xf32>, vector<4x1xf32>, vector<4x1xf32>
    }
    %c16_i32_115 = arith.constant 16 : i32
    %cst_116 = arith.constant 0.001953125 : f32
    %231 = vector.broadcast %cst_116 : f32 to vector<4x1xf32>
    %232 = arith.mulf %230#1, %231 : vector<4x1xf32>
    %cst_117 = arith.constant 0.001953125 : f32
    %233 = vector.broadcast %cst_117 : f32 to vector<4x1xf32>
    %234 = arith.mulf %230#2, %233 : vector<4x1xf32>
    %235 = arith.mulf %232, %232 : vector<4x1xf32>
    %236 = arith.subf %234, %235 : vector<4x1xf32>
    %cst_118 = arith.constant 9.99999974E-6 : f32
    %237 = vector.broadcast %cst_118 : f32 to vector<4x1xf32>
    %238 = arith.addf %236, %237 : vector<4x1xf32>
    %239 = math.rsqrt %238 : vector<4x1xf32>
    %c0_119 = arith.constant 0 : index
    %c0_120 = arith.constant 0 : index
    %c0_121 = arith.constant 0 : index
    %c0_122 = arith.constant 0 : index
    %240 = vector.load %arg21[%c0_119, %c0_120, %c0_121, %c0_122] : memref<1x16x4x32xf32, #tpu.memory_space<vmem>>, vector<1x16x4x32xf32>
    %241 = vector.shape_cast %240 : vector<1x16x4x32xf32> to vector<16x4x32xf32>
    %242 = vector.shape_cast %232 : vector<4x1xf32> to vector<1x4x1xf32>
    %243 = vector.broadcast %242 : vector<1x4x1xf32> to vector<16x4x32xf32>
    %244 = arith.subf %241, %243 : vector<16x4x32xf32>
    %245 = vector.shape_cast %239 : vector<4x1xf32> to vector<1x4x1xf32>
    %246 = vector.broadcast %245 : vector<1x4x1xf32> to vector<16x4x32xf32>
    %247 = arith.mulf %244, %246 : vector<16x4x32xf32>
    %c0_123 = arith.constant 0 : index
    %c0_124 = arith.constant 0 : index
    %c0_125 = arith.constant 0 : index
    %248 = vector.load %arg19[%c0_123, %c0_124, %c0_125] : memref<1x1x32xf32, #tpu.memory_space<vmem>>, vector<1x1x32xf32>
    %249 = vector.broadcast %248 : vector<1x1x32xf32> to vector<16x4x32xf32>
    %250 = arith.mulf %247, %249 : vector<16x4x32xf32>
    %c0_126 = arith.constant 0 : index
    %c0_127 = arith.constant 0 : index
    %c0_128 = arith.constant 0 : index
    %251 = vector.load %arg20[%c0_126, %c0_127, %c0_128] : memref<1x1x32xf32, #tpu.memory_space<vmem>>, vector<1x1x32xf32>
    %252 = vector.broadcast %251 : vector<1x1x32xf32> to vector<16x4x32xf32>
    %253 = arith.addf %250, %252 : vector<16x4x32xf32>
    %c0_129 = arith.constant 0 : index
    %c0_130 = arith.constant 0 : index
    %c0_131 = arith.constant 0 : index
    %c0_132 = arith.constant 0 : index
    %254 = vector.load %arg21[%c0_129, %c0_130, %c0_131, %c0_132] : memref<1x16x4x32xf32, #tpu.memory_space<vmem>>, vector<1x16x4x32xf32>
    %255 = vector.shape_cast %254 : vector<1x16x4x32xf32> to vector<16x4x32xf32>
    %256 = vector.shape_cast %253 : vector<16x4x32xf32> to vector<1x16x4x32xf32>
    tpu.vector_store %arg21[%c0_129, %c0_130, %c0_131, %c0_132], %256 {strides = array<i32>} : memref<1x16x4x32xf32, #tpu.memory_space<vmem>>, vector<1x16x4x32xf32>,
    return
  }
  func.func @transform_0(%arg0: i32) -> (i32, i32, i32) {
    %c0_i32 = arith.constant 0 : i32
    %c0_i32_0 = arith.constant 0 : i32
    %c0_i32_1 = arith.constant 0 : i32
    return %arg0, %c0_i32, %c0_i32_0 : i32, i32, i32
  }
  func.func @transform_1(%arg0: i32) -> (i32, i32) {
    %c0_i32 = arith.constant 0 : i32
    %c0_i32_0 = arith.constant 0 : i32
    %c0_i32_1 = arith.constant 0 : i32
    return %c0_i32, %c0_i32_0 : i32, i32
  }
  func.func @transform_2(%arg0: i32) -> (i32, i32) {
    %c0_i32 = arith.constant 0 : i32
    %c0_i32_0 = arith.constant 0 : i32
    %c0_i32_1 = arith.constant 0 : i32
    return %c0_i32, %c0_i32_0 : i32, i32
  }
  func.func @transform_3(%arg0: i32) -> (i32, i32, i32) {
    %c0_i32 = arith.constant 0 : i32
    %c0_i32_0 = arith.constant 0 : i32
    %c0_i32_1 = arith.constant 0 : i32
    %c0_i32_2 = arith.constant 0 : i32
    return %c0_i32, %c0_i32_0, %c0_i32_1 : i32, i32, i32
  }
  func.func @transform_4(%arg0: i32) -> (i32, i32) {
    %c0_i32 = arith.constant 0 : i32
    %c0_i32_0 = arith.constant 0 : i32
    %c0_i32_1 = arith.constant 0 : i32
    return %c0_i32, %c0_i32_0 : i32, i32
  }
  func.func @transform_5(%arg0: i32) -> (i32, i32) {
    %c0_i32 = arith.constant 0 : i32
    %c0_i32_0 = arith.constant 0 : i32
    %c0_i32_1 = arith.constant 0 : i32
    return %c0_i32, %c0_i32_0 : i32, i32
  }
  func.func @transform_6(%arg0: i32) -> (i32, i32) {
    %c0_i32 = arith.constant 0 : i32
    %c0_i32_0 = arith.constant 0 : i32
    %c0_i32_1 = arith.constant 0 : i32
    return %c0_i32, %c0_i32_0 : i32, i32
  }
  func.func @transform_7(%arg0: i32) -> (i32, i32) {
    %c0_i32 = arith.constant 0 : i32
    %c0_i32_0 = arith.constant 0 : i32
    %c0_i32_1 = arith.constant 0 : i32
    return %c0_i32, %c0_i32_0 : i32, i32
  }
  func.func @transform_8(%arg0: i32) -> (i32, i32) {
    %c0_i32 = arith.constant 0 : i32
    %c0_i32_0 = arith.constant 0 : i32
    %c0_i32_1 = arith.constant 0 : i32
    return %c0_i32, %c0_i32_0 : i32, i32
  }
  func.func @transform_9(%arg0: i32) -> (i32, i32) {
    %c0_i32 = arith.constant 0 : i32
    %c0_i32_0 = arith.constant 0 : i32
    %c0_i32_1 = arith.constant 0 : i32
    return %c0_i32, %c0_i32_0 : i32, i32
  }
  func.func @transform_10(%arg0: i32) -> (i32, i32) {
    %c0_i32 = arith.constant 0 : i32
    %c0_i32_0 = arith.constant 0 : i32
    %c0_i32_1 = arith.constant 0 : i32
    return %c0_i32, %c0_i32_0 : i32, i32
  }
  func.func @transform_11(%arg0: i32) -> (i32, i32) {
    %c0_i32 = arith.constant 0 : i32
    %c0_i32_0 = arith.constant 0 : i32
    %c0_i32_1 = arith.constant 0 : i32
    return %c0_i32, %c0_i32_0 : i32, i32
  }
  func.func @transform_12(%arg0: i32) -> (i32, i32) {
    %c0_i32 = arith.constant 0 : i32
    %c0_i32_0 = arith.constant 0 : i32
    %c0_i32_1 = arith.constant 0 : i32
    return %c0_i32, %c0_i32_0 : i32, i32
  }
  func.func @transform_13(%arg0: i32) -> i32 {
    %c0_i32 = arith.constant 0 : i32
    %c0_i32_0 = arith.constant 0 : i32
    return %c0_i32 : i32
  }
  func.func @transform_14(%arg0: i32) -> (i32, i32) {
    %c0_i32 = arith.constant 0 : i32
    %c0_i32_0 = arith.constant 0 : i32
    %c0_i32_1 = arith.constant 0 : i32
    return %c0_i32, %c0_i32_0 : i32, i32
  }
  func.func @transform_15(%arg0: i32) -> (i32, i32) {
    %c0_i32 = arith.constant 0 : i32
    %c0_i32_0 = arith.constant 0 : i32
    %c0_i32_1 = arith.constant 0 : i32
    return %c0_i32, %c0_i32_0 : i32, i32
  }
  func.func @transform_16(%arg0: i32) -> (i32, i32) {
    %c0_i32 = arith.constant 0 : i32
    %c0_i32_0 = arith.constant 0 : i32
    %c0_i32_1 = arith.constant 0 : i32
    return %c0_i32, %c0_i32_0 : i32, i32
  }
  func.func @transform_17(%arg0: i32) -> (i32, i32) {
    %c0_i32 = arith.constant 0 : i32
    %c0_i32_0 = arith.constant 0 : i32
    %c0_i32_1 = arith.constant 0 : i32
    return %c0_i32, %c0_i32_0 : i32, i32
  }
  func.func @transform_18(%arg0: i32) -> (i32, i32, i32) {
    %c0_i32 = arith.constant 0 : i32
    %c0_i32_0 = arith.constant 0 : i32
    %c0_i32_1 = arith.constant 0 : i32
    %c0_i32_2 = arith.constant 0 : i32
    return %c0_i32, %c0_i32_0, %c0_i32_1 : i32, i32, i32
  }
  func.func @transform_19(%arg0: i32) -> (i32, i32, i32) {
    %c0_i32 = arith.constant 0 : i32
    %c0_i32_0 = arith.constant 0 : i32
    %c0_i32_1 = arith.constant 0 : i32
    %c0_i32_2 = arith.constant 0 : i32
    return %c0_i32, %c0_i32_0, %c0_i32_1 : i32, i32, i32
  }
  func.func @transform_20(%arg0: i32) -> (i32, i32, i32, i32) {
    %c0_i32 = arith.constant 0 : i32
    %c0_i32_0 = arith.constant 0 : i32
    %c0_i32_1 = arith.constant 0 : i32
    %c0_i32_2 = arith.constant 0 : i32
    return %arg0, %c0_i32, %c0_i32_0, %c0_i32_1 : i32, i32, i32, i32
  }
}

</mosaic_0001>

<llo_original>
// kernel: sil_block_forward.1
$region0: #{sil_block_forward.1}
  #allocation0 [shape = 'u32[]', space=smem, size = 0x4, offset = 0x4, fixed_abs, tag = 'smem constant byte address 0x4 - core index']
  #allocation1 [shape = 'u32[144,128]{1,0:T(1,128)}', space=vmem, size = 0x12000, scoped, tag = 'internal scratch']
  #allocation2 [shape = 'f32[16,4,96]{2,1,0:T(4,128)}', space=vmem, size = 0x8000, scoped, tag = 'scratch operand']
  %s0 = inlined_call_operand.vmem [shape: f32[2,64,32], index: 0, kind: input, shape index: {}]
  %s1 = inlined_call_operand.vmem [shape: f32[16,64], index: 1, kind: input, shape index: {}]
  %s2 = inlined_call_operand.vmem [shape: f32[64,16], index: 2, kind: input, shape index: {}]
  %s3 = inlined_call_operand.vmem [shape: f32[4,64,1], index: 3, kind: input, shape index: {}]
  %s4 = inlined_call_operand.vmem [shape: f32[32,16], index: 4, kind: input, shape index: {}]
  %s5 = inlined_call_operand.vmem [shape: f32[1,16], index: 5, kind: input, shape index: {}]
  %s6 = inlined_call_operand.vmem [shape: f32[16,16], index: 6, kind: input, shape index: {}]
  %s7 = inlined_call_operand.vmem [shape: f32[1,16], index: 7, kind: input, shape index: {}]
  %s8 = inlined_call_operand.vmem [shape: f32[16,32], index: 8, kind: input, shape index: {}]
  %s9 = inlined_call_operand.vmem [shape: f32[16,32], index: 9, kind: input, shape index: {}]
  %s10 = inlined_call_operand.vmem [shape: f32[1,32], index: 10, kind: input, shape index: {}]
  %s11 = inlined_call_operand.vmem [shape: f32[1,32], index: 11, kind: input, shape index: {}]
  %s12 = inlined_call_operand.vmem [shape: f32[1,32], index: 12, kind: input, shape index: {}]
  %s13 = inlined_call_operand.vmem [shape: f32[3], index: 13, kind: input, shape index: {}]
  %s14 = inlined_call_operand.vmem [shape: f32[32,96], index: 14, kind: input, shape index: {}]
  %s15 = inlined_call_operand.vmem [shape: f32[32,96], index: 15, kind: input, shape index: {}]
  %s16 = inlined_call_operand.vmem [shape: f32[1,96], index: 16, kind: input, shape index: {}]
  %s17 = inlined_call_operand.vmem [shape: f32[1,96], index: 17, kind: input, shape index: {}]
  %s18 = inlined_call_operand.vmem [shape: f32[1,1,32], index: 18, kind: input, shape index: {}]
  %s19 = inlined_call_operand.vmem [shape: f32[1,1,32], index: 19, kind: input, shape index: {}]
  %s20 = inlined_call_operand.vmem [shape: f32[2,16,4,32], index: 20, kind: output, shape index: {}]
  %s21 = sld [smem:[#allocation0]]
  $region124: #{sil_block_forward.1} parent=0
    _
  %s23 = ssub.s32 1, %s21
  %s24 = scalar_select 0, %s23, %s21
  $region1: #{sil_block_forward.1} parent=0
    #allocation3 [shape = 'u8[512]{0}', space=smem, size = 0x200, scoped, tag = 'input window, operand 13, single buffered']
    #allocation4 [shape = 's32[2]{0}', space=sflag, size = 0x8, scoped, tag = 'scoped memory for sil_block_forward.1']
    %25 = vsyncpa [#allocation4], 0
    loop: start=0, step=1, limit=4
    $region2: #{sil_block_forward.1} parent=1 // loop_pre_header
      _
    $region3: #{sil_block_forward.1} parent=1 // loop_header
      %s27 = sphi 0, %s31
      %p28 = scmp.ge.s32.totalorder %s27, 4
      %s37 = sphi 0, %s39
      %s40 = sphi 0, %s37
      %s41 = sphi 0, %s40
      %s57 = sphi 0, %s41
      %s61 = sphi 0, %s61
      %s63 = sphi 0, %s61
      %s64 = sphi 0, %s63
      %s78 = sphi 0, %s64
      %s82 = sphi 0, %s82
      %s84 = sphi 0, %s82
      %s85 = sphi 0, %s84
      %s99 = sphi 0, %s85
      %s103 = sphi 0, %s103
      %s105 = sphi 0, %s103
      %s106 = sphi 0, %s105
      %s120 = sphi 0, %s106
      %s124 = sphi 0, %s124
      %s126 = sphi 0, %s124
      %s127 = sphi 0, %s126
      %s141 = sphi 0, %s127
      %s145 = sphi 0, %s145
      %s147 = sphi 0, %s145
      %s148 = sphi 0, %s147
      %s162 = sphi 0, %s148
      %s166 = sphi 0, %s166
      %s168 = sphi 0, %s166
      %s169 = sphi 0, %s168
      %s183 = sphi 0, %s169
      %s187 = sphi 0, %s187
      %s189 = sphi 0, %s187
      %s190 = sphi 0, %s189
      %s204 = sphi 0, %s190
      %s208 = sphi 0, %s208
      %s210 = sphi 0, %s208
      %s211 = sphi 0, %s210
      %s225 = sphi 0, %s211
      %s229 = sphi 0, %s229
      %s231 = sphi 0, %s229
      %s232 = sphi 0, %s231
      %s246 = sphi 0, %s232
      %s250 = sphi 0, %s250
      %s252 = sphi 0, %s250
      %s253 = sphi 0, %s252
      %s267 = sphi 0, %s253
      %s271 = sphi 0, %s271
      %s273 = sphi 0, %s271
      %s274 = sphi 0, %s273
      %s288 = sphi 0, %s274
      %s292 = sphi 0, %s292
      %s294 = sphi 0, %s292
      %s295 = sphi 0, %s294
      %s309 = sphi 0, %s295
      %s313 = sphi 0, %s313
      %s315 = sphi 0, %s313
      %s316 = sphi 0, %s315
      %s330 = sphi 0, %s316
      %s334 = sphi 0, %s334
      %s336 = sphi 0, %s334
      %s337 = sphi 0, %s336
      %s351 = sphi 0, %s337
      %s355 = sphi 0, %s355
      %s357 = sphi 0, %s355
      %s358 = sphi 0, %s357
      %s372 = sphi 0, %s358
      %s376 = sphi 0, %s376
      %s378 = sphi 0, %s376
      %s379 = sphi 0, %s378
      %s393 = sphi 0, %s379
      %s397 = sphi 0, %s397
      %s399 = sphi 0, %s397
      %s400 = sphi 0, %s399
      %s414 = sphi 0, %s400
      %s418 = sphi 0, %s418
      %s420 = sphi 0, %s418
      %s421 = sphi 0, %s420
      %s435 = sphi 0, %s421
      %s439 = sphi 0, %s439
      %s441 = sphi 0, %s439
      %s442 = sphi 0, %s441
      %s456 = sphi 0, %s442
      %s462 = sphi 0, %s464
      %s465 = sphi 0, %s462
      %s466 = sphi 0, %s465
      %s482 = sphi 0, %s466
    $region4: #{sil_block_forward.1} parent=1 // loop_header_branch
      %30 = sbr.rel (%p28) target = $region8
    $region5: #{sil_block_forward.1} parent=1 // loop_body
      %s32 = ssub.s32 %s27, 1
      %s33 = ssub.s32 %s27, 2
      %s34 = sadd.s32 %s27, 1
      %s35 = ssub.s32 %s27, %s34
      %p36 = scmp.eq.s32.totalorder %s35, 0
      %s38 = sadd.s32 %s37, 1
      %s39 = scalar_select %p36, %s37, %s38
      %p42 = pneg %p36
      %p43 = scmp.eq.s32.totalorder %s27, 1
      %p44 = por %p42, %p43
      %p45 = scmp.ne.s32.totalorder %s37, %s40
      %p46 = scmp.eq.s32.totalorder %s27, 0
      %p47 = por %p45, %p46
      %p48 = scmp.ne.s32.totalorder %s37, %s40
      %p49 = scmp.eq.s32.totalorder %s32, 1
      %p50 = por %p48, %p49
      %p51 = scmp.ne.s32.totalorder %s40, %s41
      %p52 = scmp.eq.s32.totalorder %s32, 0
      %p53 = por %p51, %p52
      %p54 = scmp.ne.s32.totalorder %s40, %s41
      %p55 = scmp.eq.s32.totalorder %s33, 1
      %p56 = por %p54, %p55
      %p58 = scmp.ne.s32.totalorder %s41, %s57
      %p59 = scmp.eq.s32.totalorder %s33, 0
      %p60 = por %p58, %p59
      %s62 = sadd.s32 %s61, 1
      %p65 = scmp.eq.s32.totalorder %s27, 1
      %p66 = scmp.ne.s32.totalorder %s61, %s63
      %p67 = scmp.eq.s32.totalorder %s27, 0
      %p68 = por %p66, %p67
      %p69 = scmp.ne.s32.totalorder %s61, %s63
      %p70 = scmp.eq.s32.totalorder %s32, 1
      %p71 = por %p69, %p70
      %p72 = scmp.ne.s32.totalorder %s63, %s64
      %p73 = scmp.eq.s32.totalorder %s32, 0
      %p74 = por %p72, %p73
      %p75 = scmp.ne.s32.totalorder %s63, %s64
      %p76 = scmp.eq.s32.totalorder %s33, 1
      %p77 = por %p75, %p76
      %p79 = scmp.ne.s32.totalorder %s64, %s78
      %p80 = scmp.eq.s32.totalorder %s33, 0
      %p81 = por %p79, %p80
      %s83 = sadd.s32 %s82, 1
      %p86 = scmp.eq.s32.totalorder %s27, 1
      %p87 = scmp.ne.s32.totalorder %s82, %s84
      %p88 = scmp.eq.s32.totalorder %s27, 0
      %p89 = por %p87, %p88
      %p90 = scmp.ne.s32.totalorder %s82, %s84
      %p91 = scmp.eq.s32.totalorder %s32, 1
      %p92 = por %p90, %p91
      %p93 = scmp.ne.s32.totalorder %s84, %s85
      %p94 = scmp.eq.s32.totalorder %s32, 0
      %p95 = por %p93, %p94
      %p96 = scmp.ne.s32.totalorder %s84, %s85
      %p97 = scmp.eq.s32.totalorder %s33, 1
      %p98 = por %p96, %p97
      %p100 = scmp.ne.s32.totalorder %s85, %s99
      %p101 = scmp.eq.s32.totalorder %s33, 0
      %p102 = por %p100, %p101
      %s104 = sadd.s32 %s103, 1
      %p107 = scmp.eq.s32.totalorder %s27, 1
      %p108 = scmp.ne.s32.totalorder %s103, %s105
      %p109 = scmp.eq.s32.totalorder %s27, 0
      %p110 = por %p108, %p109
      %p111 = scmp.ne.s32.totalorder %s103, %s105
      %p112 = scmp.eq.s32.totalorder %s32, 1
      %p113 = por %p111, %p112
      %p114 = scmp.ne.s32.totalorder %s105, %s106
      %p115 = scmp.eq.s32.totalorder %s32, 0
      %p116 = por %p114, %p115
      %p117 = scmp.ne.s32.totalorder %s105, %s106
      %p118 = scmp.eq.s32.totalorder %s33, 1
      %p119 = por %p117, %p118
      %p121 = scmp.ne.s32.totalorder %s106, %s120
      %p122 = scmp.eq.s32.totalorder %s33, 0
      %p123 = por %p121, %p122
      %s125 = sadd.s32 %s124, 1
      %p128 = scmp.eq.s32.totalorder %s27, 1
      %p129 = scmp.ne.s32.totalorder %s124, %s126
      %p130 = scmp.eq.s32.totalorder %s27, 0
      %p131 = por %p129, %p130
      %p132 = scmp.ne.s32.totalorder %s124, %s126
      %p133 = scmp.eq.s32.totalorder %s32, 1
      %p134 = por %p132, %p133
      %p135 = scmp.ne.s32.totalorder %s126, %s127
      %p136 = scmp.eq.s32.totalorder %s32, 0
      %p137 = por %p135, %p136
      %p138 = scmp.ne.s32.totalorder %s126, %s127
      %p139 = scmp.eq.s32.totalorder %s33, 1
      %p140 = por %p138, %p139
      %p142 = scmp.ne.s32.totalorder %s127, %s141
      %p143 = scmp.eq.s32.totalorder %s33, 0
      %p144 = por %p142, %p143
      %s146 = sadd.s32 %s145, 1
      %p149 = scmp.eq.s32.totalorder %s27, 1
      %p150 = scmp.ne.s32.totalorder %s145, %s147
      %p151 = scmp.eq.s32.totalorder %s27, 0
      %p152 = por %p150, %p151
      %p153 = scmp.ne.s32.totalorder %s145, %s147
      %p154 = scmp.eq.s32.totalorder %s32, 1
      %p155 = por %p153, %p154
      %p156 = scmp.ne.s32.totalorder %s147, %s148
      %p157 = scmp.eq.s32.totalorder %s32, 0
      %p158 = por %p156, %p157
      %p159 = scmp.ne.s32.totalorder %s147, %s148
      %p160 = scmp.eq.s32.totalorder %s33, 1
      %p161 = por %p159, %p160
      %p163 = scmp.ne.s32.totalorder %s148, %s162
      %p164 = scmp.eq.s32.totalorder %s33, 0
      %p165 = por %p163, %p164
      %s167 = sadd.s32 %s166, 1
      %p170 = scmp.eq.s32.totalorder %s27, 1
      %p171 = scmp.ne.s32.totalorder %s166, %s168
      %p172 = scmp.eq.s32.totalorder %s27, 0
      %p173 = por %p171, %p172
      %p174 = scmp.ne.s32.totalorder %s166, %s168
      %p175 = scmp.eq.s32.totalorder %s32, 1
      %p176 = por %p174, %p175
      %p177 = scmp.ne.s32.totalorder %s168, %s169
      %p178 = scmp.eq.s32.totalorder %s32, 0
      %p179 = por %p177, %p178
      %p180 = scmp.ne.s32.totalorder %s168, %s169
      %p181 = scmp.eq.s32.totalorder %s33, 1
      %p182 = por %p180, %p181
      %p184 = scmp.ne.s32.totalorder %s169, %s183
      %p185 = scmp.eq.s32.totalorder %s33, 0
      %p186 = por %p184, %p185
      %s188 = sadd.s32 %s187, 1
      %p191 = scmp.eq.s32.totalorder %s27, 1
      %p192 = scmp.ne.s32.totalorder %s187, %s189
      %p193 = scmp.eq.s32.totalorder %s27, 0
      %p194 = por %p192, %p193
      %p195 = scmp.ne.s32.totalorder %s187, %s189
      %p196 = scmp.eq.s32.totalorder %s32, 1
      %p197 = por %p195, %p196
      %p198 = scmp.ne.s32.totalorder %s189, %s190
      %p199 = scmp.eq.s32.totalorder %s32, 0
      %p200 = por %p198, %p199
      %p201 = scmp.ne.s32.totalorder %s189, %s190
      %p202 = scmp.eq.s32.totalorder %s33, 1
      %p203 = por %p201, %p202
      %p205 = scmp.ne.s32.totalorder %s190, %s204
      %p206 = scmp.eq.s32.totalorder %s33, 0
      %p207 = por %p205, %p206
      %s209 = sadd.s32 %s208, 1
      %p212 = scmp.eq.s32.totalorder %s27, 1
      %p213 = scmp.ne.s32.totalorder %s208, %s210
      %p214 = scmp.eq.s32.totalorder %s27, 0
      %p215 = por %p213, %p214
      %p216 = scmp.ne.s32.totalorder %s208, %s210
      %p217 = scmp.eq.s32.totalorder %s32, 1
      %p218 = por %p216, %p217
      %p219 = scmp.ne.s32.totalorder %s210, %s211
      %p220 = scmp.eq.s32.totalorder %s32, 0
      %p221 = por %p219, %p220
      %p222 = scmp.ne.s32.totalorder %s210, %s211
      %p223 = scmp.eq.s32.totalorder %s33, 1
      %p224 = por %p222, %p223
      %p226 = scmp.ne.s32.totalorder %s211, %s225
      %p227 = scmp.eq.s32.totalorder %s33, 0
      %p228 = por %p226, %p227
      %s230 = sadd.s32 %s229, 1
      %p233 = scmp.eq.s32.totalorder %s27, 1
      %p234 = scmp.ne.s32.totalorder %s229, %s231
      %p235 = scmp.eq.s32.totalorder %s27, 0
      %p236 = por %p234, %p235
      %p237 = scmp.ne.s32.totalorder %s229, %s231
      %p238 = scmp.eq.s32.totalorder %s32, 1
      %p239 = por %p237, %p238
      %p240 = scmp.ne.s32.totalorder %s231, %s232
      %p241 = scmp.eq.s32.totalorder %s32, 0
      %p242 = por %p240, %p241
      %p243 = scmp.ne.s32.totalorder %s231, %s232
      %p244 = scmp.eq.s32.totalorder %s33, 1
      %p245 = por %p243, %p244
      %p247 = scmp.ne.s32.totalorder %s232, %s246
      %p248 = scmp.eq.s32.totalorder %s33, 0
      %p249 = por %p247, %p248
      %s251 = sadd.s32 %s250, 1
      %p254 = scmp.eq.s32.totalorder %s27, 1
      %p255 = scmp.ne.s32.totalorder %s250, %s252
      %p256 = scmp.eq.s32.totalorder %s27, 0
      %p257 = por %p255, %p256
      %p258 = scmp.ne.s32.totalorder %s250, %s252
      %p259 = scmp.eq.s32.totalorder %s32, 1
      %p260 = por %p258, %p259
      %p261 = scmp.ne.s32.totalorder %s252, %s253
      %p262 = scmp.eq.s32.totalorder %s32, 0
      %p263 = por %p261, %p262
      %p264 = scmp.ne.s32.totalorder %s252, %s253
      %p265 = scmp.eq.s32.totalorder %s33, 1
      %p266 = por %p264, %p265
      %p268 = scmp.ne.s32.totalorder %s253, %s267
      %p269 = scmp.eq.s32.totalorder %s33, 0
      %p270 = por %p268, %p269
      %s272 = sadd.s32 %s271, 1
      %p275 = scmp.eq.s32.totalorder %s27, 1
      %p276 = scmp.ne.s32.totalorder %s271, %s273
      %p277 = scmp.eq.s32.totalorder %s27, 0
      %p278 = por %p276, %p277
      %p279 = scmp.ne.s32.totalorder %s271, %s273
      %p280 = scmp.eq.s32.totalorder %s32, 1
      %p281 = por %p279, %p280
      %p282 = scmp.ne.s32.totalorder %s273, %s274
      %p283 = scmp.eq.s32.totalorder %s32, 0
      %p284 = por %p282, %p283
      %p285 = scmp.ne.s32.totalorder %s273, %s274
      %p286 = scmp.eq.s32.totalorder %s33, 1
      %p287 = por %p285, %p286
      %p289 = scmp.ne.s32.totalorder %s274, %s288
      %p290 = scmp.eq.s32.totalorder %s33, 0
      %p291 = por %p289, %p290
      %s293 = sadd.s32 %s292, 1
      %p296 = scmp.eq.s32.totalorder %s27, 1
      %p297 = scmp.ne.s32.totalorder %s292, %s294
      %p298 = scmp.eq.s32.totalorder %s27, 0
      %p299 = por %p297, %p298
      %p300 = scmp.ne.s32.totalorder %s292, %s294
      %p301 = scmp.eq.s32.totalorder %s32, 1
      %p302 = por %p300, %p301
      %p303 = scmp.ne.s32.totalorder %s294, %s295
      %p304 = scmp.eq.s32.totalorder %s32, 0
      %p305 = por %p303, %p304
      %p306 = scmp.ne.s32.totalorder %s294, %s295
      %p307 = scmp.eq.s32.totalorder %s33, 1
      %p308 = por %p306, %p307
      %p310 = scmp.ne.s32.totalorder %s295, %s309
      %p311 = scmp.eq.s32.totalorder %s33, 0
      %p312 = por %p310, %p311
      %s314 = sadd.s32 %s313, 1
      %p317 = scmp.eq.s32.totalorder %s27, 1
      %p318 = scmp.ne.s32.totalorder %s313, %s315
      %p319 = scmp.eq.s32.totalorder %s27, 0
      %p320 = por %p318, %p319
      %p321 = scmp.ne.s32.totalorder %s313, %s315
      %p322 = scmp.eq.s32.totalorder %s32, 1
      %p323 = por %p321, %p322
      %p324 = scmp.ne.s32.totalorder %s315, %s316
      %p325 = scmp.eq.s32.totalorder %s32, 0
      %p326 = por %p324, %p325
      %p327 = scmp.ne.s32.totalorder %s315, %s316
      %p328 = scmp.eq.s32.totalorder %s33, 1
      %p329 = por %p327, %p328
      %p331 = scmp.ne.s32.totalorder %s316, %s330
      %p332 = scmp.eq.s32.totalorder %s33, 0
      %p333 = por %p331, %p332
      %s335 = sadd.s32 %s334, 1
      %p338 = scmp.eq.s32.totalorder %s27, 1
      %p339 = scmp.ne.s32.totalorder %s334, %s336
      %p340 = scmp.eq.s32.totalorder %s27, 0
      %p341 = por %p339, %p340
      %p342 = scmp.ne.s32.totalorder %s334, %s336
      %p343 = scmp.eq.s32.totalorder %s32, 1
      %p344 = por %p342, %p343
      %p345 = scmp.ne.s32.totalorder %s336, %s337
      %p346 = scmp.eq.s32.totalorder %s32, 0
      %p347 = por %p345, %p346
      %p348 = scmp.ne.s32.totalorder %s336, %s337
      %p349 = scmp.eq.s32.totalorder %s33, 1
      %p350 = por %p348, %p349
      %p352 = scmp.ne.s32.totalorder %s337, %s351
      %p353 = scmp.eq.s32.totalorder %s33, 0
      %p354 = por %p352, %p353
      %s356 = sadd.s32 %s355, 1
      %p359 = scmp.eq.s32.totalorder %s27, 1
      %p360 = scmp.ne.s32.totalorder %s355, %s357
      %p361 = scmp.eq.s32.totalorder %s27, 0
      %p362 = por %p360, %p361
      %p363 = scmp.ne.s32.totalorder %s355, %s357
      %p364 = scmp.eq.s32.totalorder %s32, 1
      %p365 = por %p363, %p364
      %p366 = scmp.ne.s32.totalorder %s357, %s358
      %p367 = scmp.eq.s32.totalorder %s32, 0
      %p368 = por %p366, %p367
      %p369 = scmp.ne.s32.totalorder %s357, %s358
      %p370 = scmp.eq.s32.totalorder %s33, 1
      %p371 = por %p369, %p370
      %p373 = scmp.ne.s32.totalorder %s358, %s372
      %p374 = scmp.eq.s32.totalorder %s33, 0
      %p375 = por %p373, %p374
      %s377 = sadd.s32 %s376, 1
      %p380 = scmp.eq.s32.totalorder %s27, 1
      %p381 = scmp.ne.s32.totalorder %s376, %s378
      %p382 = scmp.eq.s32.totalorder %s27, 0
      %p383 = por %p381, %p382
      %p384 = scmp.ne.s32.totalorder %s376, %s378
      %p385 = scmp.eq.s32.totalorder %s32, 1
      %p386 = por %p384, %p385
      %p387 = scmp.ne.s32.totalorder %s378, %s379
      %p388 = scmp.eq.s32.totalorder %s32, 0
      %p389 = por %p387, %p388
      %p390 = scmp.ne.s32.totalorder %s378, %s379
      %p391 = scmp.eq.s32.totalorder %s33, 1
      %p392 = por %p390, %p391
      %p394 = scmp.ne.s32.totalorder %s379, %s393
      %p395 = scmp.eq.s32.totalorder %s33, 0
      %p396 = por %p394, %p395
      %s398 = sadd.s32 %s397, 1
      %p401 = scmp.eq.s32.totalorder %s27, 1
      %p402 = scmp.ne.s32.totalorder %s397, %s399
      %p403 = scmp.eq.s32.totalorder %s27, 0
      %p404 = por %p402, %p403
      %p405 = scmp.ne.s32.totalorder %s397, %s399
      %p406 = scmp.eq.s32.totalorder %s32, 1
      %p407 = por %p405, %p406
      %p408 = scmp.ne.s32.totalorder %s399, %s400
      %p409 = scmp.eq.s32.totalorder %s32, 0
      %p410 = por %p408, %p409
      %p411 = scmp.ne.s32.totalorder %s399, %s400
      %p412 = scmp.eq.s32.totalorder %s33, 1
      %p413 = por %p411, %p412
      %p415 = scmp.ne.s32.totalorder %s400, %s414
      %p416 = scmp.eq.s32.totalorder %s33, 0
      %p417 = por %p415, %p416
      %s419 = sadd.s32 %s418, 1
      %p422 = scmp.eq.s32.totalorder %s27, 1
      %p423 = scmp.ne.s32.totalorder %s418, %s420
      %p424 = scmp.eq.s32.totalorder %s27, 0
      %p425 = por %p423, %p424
      %p426 = scmp.ne.s32.totalorder %s418, %s420
      %p427 = scmp.eq.s32.totalorder %s32, 1
      %p428 = por %p426, %p427
      %p429 = scmp.ne.s32.totalorder %s420, %s421
      %p430 = scmp.eq.s32.totalorder %s32, 0
      %p431 = por %p429, %p430
      %p432 = scmp.ne.s32.totalorder %s420, %s421
      %p433 = scmp.eq.s32.totalorder %s33, 1
      %p434 = por %p432, %p433
      %p436 = scmp.ne.s32.totalorder %s421, %s435
      %p437 = scmp.eq.s32.totalorder %s33, 0
      %p438 = por %p436, %p437
      %s440 = sadd.s32 %s439, 1
      %p443 = scmp.eq.s32.totalorder %s27, 1
      %p444 = scmp.ne.s32.totalorder %s439, %s441
      %p445 = scmp.eq.s32.totalorder %s27, 0
      %p446 = por %p444, %p445
      %p447 = scmp.ne.s32.totalorder %s439, %s441
      %p448 = scmp.eq.s32.totalorder %s32, 1
      %p449 = por %p447, %p448
      %p450 = scmp.ne.s32.totalorder %s441, %s442
      %p451 = scmp.eq.s32.totalorder %s32, 0
      %p452 = por %p450, %p451
      %p453 = scmp.ne.s32.totalorder %s441, %s442
      %p454 = scmp.eq.s32.totalorder %s33, 1
      %p455 = por %p453, %p454
      %p457 = scmp.ne.s32.totalorder %s442, %s456
      %p458 = scmp.eq.s32.totalorder %s33, 0
      %p459 = por %p457, %p458
      %s460 = ssub.s32 %s27, %s34
      %p461 = scmp.eq.s32.totalorder %s460, 0
      %s463 = sadd.s32 %s462, 1
      %s464 = scalar_select %p461, %s462, %s463
      %p467 = pneg %p461
      %p468 = scmp.eq.s32.totalorder %s27, 1
      %p469 = por %p467, %p468
      %p470 = scmp.ne.s32.totalorder %s462, %s465
      %p471 = scmp.eq.s32.totalorder %s27, 0
      %p472 = por %p470, %p471
      %p473 = scmp.ne.s32.totalorder %s462, %s465
      %p474 = scmp.eq.s32.totalorder %s32, 1
      %p475 = por %p473, %p474
      %p476 = scmp.ne.s32.totalorder %s465, %s466
      %p477 = scmp.eq.s32.totalorder %s32, 0
      %p478 = por %p476, %p477
      %p479 = scmp.ne.s32.totalorder %s465, %s466
      %p480 = scmp.eq.s32.totalorder %s33, 1
      %p481 = por %p479, %p480
      %p483 = scmp.ne.s32.totalorder %s466, %s482
      %p484 = scmp.eq.s32.totalorder %s33, 0
      %p485 = por %p483, %p484
      %p486 = scmp.le.s32.totalorder 1, %s27
      %p487 = scmp.lt.s32.totalorder %s27, 3
      %p488 = pnand %p486, %p487
      %p489 = pneg %p488
      // Predicated region
      $region9: #{sil_block_forward.1} parent=5 // pred_check
        _
      $region10: #{sil_block_forward.1} parent=5 // pred_check_branch
        %491 = sbr.rel (%p488) target = $region12
      $region11: #{sil_block_forward.1} parent=5 // pred_region
        %s492 = ssub.s32 %s27, 1
        // Predicated region
        $region13: #{sil_block_forward.1} parent=11 // pred_check
          %p493 = pneg %p74
        $region14: #{sil_block_forward.1} parent=11 // pred_check_branch
          %495 = sbr.rel (%p493) target = $region16
        $region15: #{sil_block_forward.1} parent=11 // pred_region
          _
        $region16: #{sil_block_forward.1} parent=11 // pred_fallthru
          _
        // Predicated region
        $region17: #{sil_block_forward.1} parent=11 // pred_check
          %p496 = pneg %p95
        $region18: #{sil_block_forward.1} parent=11 // pred_check_branch
          %498 = sbr.rel (%p496) target = $region20
        $region19: #{sil_block_forward.1} parent=11 // pred_region
          _
        $region20: #{sil_block_forward.1} parent=11 // pred_fallthru
          _
        // Predicated region
        $region21: #{sil_block_forward.1} parent=11 // pred_check
          %p499 = pneg %p116
        $region22: #{sil_block_forward.1} parent=11 // pred_check_branch
          %501 = sbr.rel (%p499) target = $region24
        $region23: #{sil_block_forward.1} parent=11 // pred_region
          _
        $region24: #{sil_block_forward.1} parent=11 // pred_fallthru
          _
        // Predicated region
        $region25: #{sil_block_forward.1} parent=11 // pred_check
          %p502 = pneg %p137
        $region26: #{sil_block_forward.1} parent=11 // pred_check_branch
          %504 = sbr.rel (%p502) target = $region28
        $region27: #{sil_block_forward.1} parent=11 // pred_region
          _
        $region28: #{sil_block_forward.1} parent=11 // pred_fallthru
          _
        // Predicated region
        $region29: #{sil_block_forward.1} parent=11 // pred_check
          %p505 = pneg %p158
        $region30: #{sil_block_forward.1} parent=11 // pred_check_branch
          %507 = sbr.rel (%p505) target = $region32
        $region31: #{sil_block_forward.1} parent=11 // pred_region
          _
        $region32: #{sil_block_forward.1} parent=11 // pred_fallthru
          _
        // Predicated region
        $region33: #{sil_block_forward.1} parent=11 // pred_check
          %p508 = pneg %p179
        $region34: #{sil_block_forward.1} parent=11 // pred_check_branch
          %510 = sbr.rel (%p508) target = $region36
        $region35: #{sil_block_forward.1} parent=11 // pred_region
          _
        $region36: #{sil_block_forward.1} parent=11 // pred_fallthru
          _
        // Predicated region
        $region37: #{sil_block_forward.1} parent=11 // pred_check
          %p511 = pneg %p200
        $region38: #{sil_block_forward.1} parent=11 // pred_check_branch
          %513 = sbr.rel (%p511) target = $region40
        $region39: #{sil_block_forward.1} parent=11 // pred_region
          _
        $region40: #{sil_block_forward.1} parent=11 // pred_fallthru
          _
        // Predicated region
        $region41: #{sil_block_forward.1} parent=11 // pred_check
          %p514 = pneg %p221
        $region42: #{sil_block_forward.1} parent=11 // pred_check_branch
          %516 = sbr.rel (%p514) target = $region44
        $region43: #{sil_block_forward.1} parent=11 // pred_region
          _
        $region44: #{sil_block_forward.1} parent=11 // pred_fallthru
          _
        // Predicated region
        $region45: #{sil_block_forward.1} parent=11 // pred_check
          %p517 = pneg %p242
        $region46: #{sil_block_forward.1} parent=11 // pred_check_branch
          %519 = sbr.rel (%p517) target = $region48
        $region47: #{sil_block_forward.1} parent=11 // pred_region
          _
        $region48: #{sil_block_forward.1} parent=11 // pred_fallthru
          _
        // Predicated region
        $region49: #{sil_block_forward.1} parent=11 // pred_check
          %p520 = pneg %p263
        $region50: #{sil_block_forward.1} parent=11 // pred_check_branch
          %522 = sbr.rel (%p520) target = $region52
        $region51: #{sil_block_forward.1} parent=11 // pred_region
          _
        $region52: #{sil_block_forward.1} parent=11 // pred_fallthru
          _
        // Predicated region
        $region53: #{sil_block_forward.1} parent=11 // pred_check
          %p523 = pneg %p284
        $region54: #{sil_block_forward.1} parent=11 // pred_check_branch
          %525 = sbr.rel (%p523) target = $region56
        $region55: #{sil_block_forward.1} parent=11 // pred_region
          _
        $region56: #{sil_block_forward.1} parent=11 // pred_fallthru
          _
        // Predicated region
        $region57: #{sil_block_forward.1} parent=11 // pred_check
          %p526 = pneg %p305
        $region58: #{sil_block_forward.1} parent=11 // pred_check_branch
          %528 = sbr.rel (%p526) target = $region60
        $region59: #{sil_block_forward.1} parent=11 // pred_region
          _
        $region60: #{sil_block_forward.1} parent=11 // pred_fallthru
          _
        // Predicated region
        $region61: #{sil_block_forward.1} parent=11 // pred_check
          %p529 = pneg %p326
        $region62: #{sil_block_forward.1} parent=11 // pred_check_branch
          %531 = sbr.rel (%p529) target = $region64
        $region63: #{sil_block_forward.1} parent=11 // pred_region
          %s533 = ssub.s32 16, 16
          %534 = vsyncadd [#allocation4], %s533
          %s536 = sshll.u32 %s13, 4
          %s537 = int_to_ptr.vmem [resolvable:$true] %s536
          %539 = dma.vmem_to_smem %s537, 16, [#allocation3], [#allocation4]
        $region64: #{sil_block_forward.1} parent=11 // pred_fallthru
          _
        // Predicated region
        $region65: #{sil_block_forward.1} parent=11 // pred_check
          %p540 = pneg %p347
        $region66: #{sil_block_forward.1} parent=11 // pred_check_branch
          %542 = sbr.rel (%p540) target = $region68
        $region67: #{sil_block_forward.1} parent=11 // pred_region
          _
        $region68: #{sil_block_forward.1} parent=11 // pred_fallthru
          _
        // Predicated region
        $region69: #{sil_block_forward.1} parent=11 // pred_check
          %p543 = pneg %p368
        $region70: #{sil_block_forward.1} parent=11 // pred_check_branch
          %545 = sbr.rel (%p543) target = $region72
        $region71: #{sil_block_forward.1} parent=11 // pred_region
          _
        $region72: #{sil_block_forward.1} parent=11 // pred_fallthru
          _
        // Predicated region
        $region73: #{sil_block_forward.1} parent=11 // pred_check
          %p546 = pneg %p389
        $region74: #{sil_block_forward.1} parent=11 // pred_check_branch
          %548 = sbr.rel (%p546) target = $region76
        $region75: #{sil_block_forward.1} parent=11 // pred_region
          _
        $region76: #{sil_block_forward.1} parent=11 // pred_fallthru
          _
        // Predicated region
        $region77: #{sil_block_forward.1} parent=11 // pred_check
          %p549 = pneg %p410
        $region78: #{sil_block_forward.1} parent=11 // pred_check_branch
          %551 = sbr.rel (%p549) target = $region80
        $region79: #{sil_block_forward.1} parent=11 // pred_region
          _
        $region80: #{sil_block_forward.1} parent=11 // pred_fallthru
          _
        // Predicated region
        $region81: #{sil_block_forward.1} parent=11 // pred_check
          %p552 = pneg %p431
        $region82: #{sil_block_forward.1} parent=11 // pred_check_branch
          %554 = sbr.rel (%p552) target = $region84
        $region83: #{sil_block_forward.1} parent=11 // pred_region
          _
        $region84: #{sil_block_forward.1} parent=11 // pred_fallthru
          _
        // Predicated region
        $region85: #{sil_block_forward.1} parent=11 // pred_check
          %p555 = pneg %p452
        $region86: #{sil_block_forward.1} parent=11 // pred_check_branch
          %557 = sbr.rel (%p555) target = $region88
        $region87: #{sil_block_forward.1} parent=11 // pred_region
          _
        $region88: #{sil_block_forward.1} parent=11 // pred_fallthru
          _
      $region12: #{sil_block_forward.1} parent=5 // pred_fallthru
        _
      %p558 = scmp.lt.s32.totalorder %s27, 2
      // Predicated region
      $region89: #{sil_block_forward.1} parent=5 // pred_check
        %p559 = pneg %p558
      $region90: #{sil_block_forward.1} parent=5 // pred_check_branch
        %561 = sbr.rel (%p559) target = $region92
      $region91: #{sil_block_forward.1} parent=5 // pred_region
        // Predicated region
        $region93: #{sil_block_forward.1} parent=91 // pred_check
          %p562 = pneg %p47
        $region94: #{sil_block_forward.1} parent=91 // pred_check_branch
          %564 = sbr.rel (%p562) target = $region96
        $region95: #{sil_block_forward.1} parent=91 // pred_region
          %p565 = scmp.lt.s32.totalorder %s27, 1
          %s566 = scalar_select %p565, %s27, 1
          %s567 = smul.addr %s566, 8
          %s568 = smul.addr %s567, 8
          %s569 = scalar_lea.vmem %s0, %s568
        $region96: #{sil_block_forward.1} parent=91 // pred_fallthru
          _
      $region92: #{sil_block_forward.1} parent=5 // pred_fallthru
        _
      %p570 = scmp.le.s32.totalorder 1, %s27
      %p571 = scmp.lt.s32.totalorder %s27, 3
      %p572 = pnand %p570, %p571
      %p573 = pneg %p572
      // Predicated region
      $region97: #{sil_block_forward.1} parent=5 // pred_check
        _
      $region98: #{sil_block_forward.1} parent=5 // pred_check_branch
        %575 = sbr.rel (%p572) target = $region100
      $region99: #{sil_block_forward.1} parent=5 // pred_region
        %s576 = ssub.s32 %s27, 1
        // Predicated region
        $region101: #{sil_block_forward.1} parent=99 // pred_check
          %p577 = pneg %p326
        $region102: #{sil_block_forward.1} parent=99 // pred_check_branch
          %579 = sbr.rel (%p577) target = $region104
        $region103: #{sil_block_forward.1} parent=99 // pred_region
          %580 = dma.done [#allocation4], 16
        $region104: #{sil_block_forward.1} parent=99 // pred_fallthru
          _
        %581 = sfence
        %p582 = scmp.lt.s32.totalorder %s32, 1
        %s583 = scalar_select %p582, %s32, 1
        %s584 = smul.addr %s583, 8
        %s585 = smul.addr %s584, 8
        %s586 = scalar_lea.vmem %s0, %s585
        %p587 = pneg %p53
        %p588 = pneg %p50
        %p589 = pneg %p74
        %p590 = pneg %p71
        %p591 = pneg %p95
        %p592 = pneg %p92
        %p593 = pneg %p116
        %p594 = pneg %p113
        %p595 = pneg %p137
        %p596 = pneg %p134
        %p597 = pneg %p158
        %p598 = pneg %p155
        %p599 = pneg %p179
        %p600 = pneg %p176
        %p601 = pneg %p200
        %p602 = pneg %p197
        %p603 = pneg %p221
        %p604 = pneg %p218
        %p605 = pneg %p242
        %p606 = pneg %p239
        %p607 = pneg %p263
        %p608 = pneg %p260
        %p609 = pneg %p284
        %p610 = pneg %p281
        %p611 = pneg %p305
        %p612 = pneg %p302
        %p613 = pneg %p326
        %p614 = pneg %p323
        %p615 = pneg %p347
        %p616 = pneg %p344
        %p617 = pneg %p368
        %p618 = pneg %p365
        %p619 = pneg %p389
        %p620 = pneg %p386
        %p621 = pneg %p410
        %p622 = pneg %p407
        %p623 = pneg %p431
        %p624 = pneg %p428
        %p625 = pneg %p452
        %p626 = pneg %p449
        %p627 = pneg %p478
        %p628 = pneg %p475
        %p629 = scmp.lt.s32.totalorder %s32, 1
        %s630 = scalar_select %p629, %s32, 1
        %s631 = smul.addr %s630, 16
        %s632 = smul.addr %s631, 4
        %s633 = scalar_lea.vmem %s20, %s632
        %p634 = scmp.lt.s32.totalorder %s32, 1
        %s635 = scalar_select %p634, %s32, 1
        %s636 = smul.addr %s635, 8
        %s637 = smul.addr %s636, 8
        %s638 = scalar_lea.vmem %s0, %s637
        %p639 = scmp.lt.s32.totalorder %s32, 1
        %s640 = scalar_select %p639, %s32, 1
        %s641 = smul.addr %s640, 16
        %s642 = smul.addr %s641, 4
        %s643 = scalar_lea.vmem %s20, %s642
        %s644 = sld [smem:[#allocation3]]
        %s645 = sld [smem:[#allocation3 + $0x1]]
        %s646 = sld [smem:[#allocation3 + $0x2]]
        %v647 = vld [vmem:[%s638] sm:$0xff]
        %v648 = vld [vmem:[%s638 + $0x8] sm:$0xff]
        %v649 = vld [vmem:[%s638 + $0x10] sm:$0xff]
        %v650 = vld [vmem:[%s638 + $0x18] sm:$0xff]
        %v651 = vld [vmem:[%s638 + $0x20] sm:$0xff]
        %v652 = vld [vmem:[%s638 + $0x28] sm:$0xff]
        %v653 = vld [vmem:[%s638 + $0x30] sm:$0xff]
        %v654 = vld [vmem:[%s638 + $0x38] sm:$0xff]
        %v655 = vld [vmem:[%s4] sm:$0xff]
        %v656 = vld [vmem:[%s4 + $0x8] sm:$0xff]
        %v657 = vld [vmem:[%s4 + $0x10] sm:$0xff]
        %v658 = vld [vmem:[%s4 + $0x18] sm:$0xff]
        %v659 = vld [vmem:[%s5] sm:$0x1]
        %v661 = vlaneseq
        %v662 = vshrl.u32 %v661, 7
        %v663 = vsub.s32 0, %v662
        %v664 = vrot.slane %v659, %v663
        %vm666 = vcmask 261120
        %v668 = vsel %vm666, %v647, 0
        %v671 = vsel %vm666, %v648, 0
        %v674 = vsel %vm666, %v649, 0
        %v677 = vsel %vm666, %v650, 0
        %v680 = vsel %vm666, %v651, 0
        %v683 = vsel %vm666, %v652, 0
        %v686 = vsel %vm666, %v653, 0
        %v689 = vsel %vm666, %v654, 0
        %691 = vmatprep.subr.mxu0 0.0
        %692 = vmatpush1.msra.mxu0 %v655
        %693 = vmatprep.subr.mxu0 0.0
        %694 = vmatpush1.msra.mxu0 %v656
        %695 = vmatprep.subr.mxu0 0.0
        %696 = vmatpush1.msra.mxu0 %v657
        %697 = vmatprep.subr.mxu0 0.0
        %698 = vmatpush1.msra.mxu0 %v658
        %699 = vmatprep.subr.mxu0 0.0
        %700 = vmatpush1.msra.mxu0 0.0
        %701 = vmatprep.subr.mxu0 0.0
        %702 = vmatpush1.msra.mxu0 0.0
        %703 = vmatprep.subr.mxu0 0.0
        %704 = vmatpush1.msra.mxu0 0.0
        %705 = vmatprep.subr.mxu0 0.0
        %706 = vmatpush1.msra.mxu0 0.0
        %707 = vmatprep.subr.mxu0 0.0
        %708 = vmatpush1.msra.mxu0 0.0
        %709 = vmatprep.subr.mxu0 0.0
        %710 = vmatpush1.msra.mxu0 0.0
        %711 = vmatprep.subr.mxu0 0.0
        %712 = vmatpush1.msra.mxu0 0.0
        %713 = vmatprep.subr.mxu0 0.0
        %714 = vmatpush1.msra.mxu0 0.0
        %715 = vmatprep.subr.mxu0 0.0
        %716 = vmatpush1.msra.mxu0 0.0
        %717 = vmatprep.subr.mxu0 0.0
        %718 = vmatpush1.msra.mxu0 0.0
        %719 = vmatprep.subr.mxu0 0.0
        %720 = vmatpush1.msra.mxu0 0.0
        %721 = vmatprep.subr.mxu0 0.0
        %722 = vmatpush1.msra.mxu0 0.0
        %723 = vmatprep.subr.mxu0 0.0
        %724 = vmatpush1.msra.mxu0 0.0
        %725 = vmatprep.subr.mxu0 0.0
        %726 = vmatpush1.msra.mxu0 0.0
        %727 = vmatprep.subr.mxu0 0.0
        %728 = vmatpush1.msra.mxu0 0.0
        %729 = vmatprep.subr.mxu0 0.0
        %730 = vmatpush1.msra.mxu0 0.0
        %731 = vmatprep.subr.mxu0 0.0
        %732 = vmatpush1.msra.mxu0 0.0
        %733 = vmatprep.subr.mxu0 0.0
        %734 = vmatpush1.msra.mxu0 0.0
        %735 = vmatprep.subr.mxu0 0.0
        %736 = vmatpush1.msra.mxu0 0.0
        %737 = vmatprep.subr.mxu0 0.0
        %738 = vmatpush1.msra.mxu0 0.0
        %739 = vmatprep.subr.mxu0 0.0
        %740 = vmatpush1.msra.mxu0 0.0
        %741 = vmatprep.subr.mxu0 0.0
        %742 = vmatpush1.msra.mxu0 0.0
        %743 = vmatprep.subr.mxu0 0.0
        %744 = vmatpush1.msra.mxu0 0.0
        %745 = vmatprep.subr.mxu0 0.0
        %746 = vmatpush1.msra.mxu0 0.0
        %747 = vmatprep.subr.mxu0 0.0
        %748 = vmatpush1.msra.mxu0 0.0
        %749 = vmatprep.subr.mxu0 0.0
        %750 = vmatpush1.msra.mxu0 0.0
        %751 = vmatprep.subr.mxu0 0.0
        %752 = vmatpush1.msra.mxu0 0.0
        %753 = vmatprep.subr.mxu0 0.0
        %754 = vmatpush1.msra.mxu0 0.0
        %755 = vmatprep.mubr.f32.mxu0 0.0
        %756 = vmatmul.mubr.f32.gmra.mrb[0].mxu0 %v668
        %v757 = vpop.f32.mrb[0].mxu0
        %v758 = vadd.f32 %v664, %v757
        %v759 = vpop.f32.mrb[0].mxu0
        %760 = vmatprep.mubr.f32.mxu0 0.0
        %761 = vmatmul.mubr.f32.gmra.mrb[0].mxu0 %v671
        %v762 = vpop.f32.mrb[0].mxu0
        %v763 = vadd.f32 %v664, %v762
        %v764 = vpop.f32.mrb[0].mxu0
        %765 = vmatprep.mubr.f32.mxu0 0.0
        %766 = vmatmul.mubr.f32.gmra.mrb[0].mxu0 %v674
        %v767 = vpop.f32.mrb[0].mxu0
        %v768 = vadd.f32 %v664, %v767
        %v769 = vpop.f32.mrb[0].mxu0
        %770 = vmatprep.mubr.f32.mxu0 0.0
        %771 = vmatmul.mubr.f32.gmra.mrb[0].mxu0 %v677
        %v772 = vpop.f32.mrb[0].mxu0
        %v773 = vadd.f32 %v664, %v772
        %v774 = vpop.f32.mrb[0].mxu0
        %775 = vmatprep.mubr.f32.mxu0 0.0
        %776 = vmatmul.mubr.f32.gmra.mrb[0].mxu0 %v680
        %v777 = vpop.f32.mrb[0].mxu0
        %v778 = vadd.f32 %v664, %v777
        %v779 = vpop.f32.mrb[0].mxu0
        %780 = vmatprep.mubr.f32.mxu0 0.0
        %781 = vmatmul.mubr.f32.gmra.mrb[0].mxu0 %v683
        %v782 = vpop.f32.mrb[0].mxu0
        %v783 = vadd.f32 %v664, %v782
        %v784 = vpop.f32.mrb[0].mxu0
        %785 = vmatprep.mubr.f32.mxu0 0.0
        %786 = vmatmul.mubr.f32.gmra.mrb[0].mxu0 %v686
        %v787 = vpop.f32.mrb[0].mxu0
        %v788 = vadd.f32 %v664, %v787
        %v789 = vpop.f32.mrb[0].mxu0
        %790 = vmatprep.mubr.f32.mxu0 0.0
        %791 = vmatmul.mubr.f32.gmra.mrb[0].mxu0 %v689
        %v792 = vpop.f32.mrb[0].mxu0
        %v793 = vadd.f32 %v664, %v792
        %v794 = vpop.f32.mrb[0].mxu0
        %795 = vdwg.mxu0
        %vm796 = vcmp.ge.f32.partialorder %v758, 0.0
        %vm797 = vcmp.ge.f32.partialorder %v763, 0.0
        %vm798 = vcmp.ge.f32.partialorder %v768, 0.0
        %vm799 = vcmp.ge.f32.partialorder %v773, 0.0
        %vm800 = vcmp.ge.f32.partialorder %v778, 0.0
        %vm801 = vcmp.ge.f32.partialorder %v783, 0.0
        %vm802 = vcmp.ge.f32.partialorder %v788, 0.0
        %vm803 = vcmp.ge.f32.partialorder %v793, 0.0
        %v804 = vstv %s644
        %v805 = vmul.f32 %v804, %v758
        %v806 = vmul.f32 %v804, %v763
        %v807 = vmul.f32 %v804, %v768
        %v808 = vmul.f32 %v804, %v773
        %v809 = vmul.f32 %v804, %v778
        %v810 = vmul.f32 %v804, %v783
        %v811 = vmul.f32 %v804, %v788
        %v812 = vmul.f32 %v804, %v793
        %v813 = vsel %vm796, %v758, %v805
        %v814 = vsel %vm797, %v763, %v806
        %v815 = vsel %vm798, %v768, %v807
        %v816 = vsel %vm799, %v773, %v808
        %v817 = vsel %vm800, %v778, %v809
        %v818 = vsel %vm801, %v783, %v810
        %v819 = vsel %vm802, %v788, %v811
        %v820 = vsel %vm803, %v793, %v812
        %v821 = vld [vmem:[%s1] sm:$0xff]
        %v822 = vld [vmem:[%s1 + $0x8] sm:$0xff]
        %vm823 = vcmask 523264
        %v825 = vsel %vm823, %v821, 0
        %v828 = vsel %vm823, %v822, 0
        %830 = vmatprep.subr.mxu0 0.0
        %v831 = vand.u32 %v813, 4294901760
        %832 = vmatpush1.msra.mxu0 %v831
        %833 = vmatprep.subr.mxu0 0.0
        %v834 = vand.u32 %v814, 4294901760
        %835 = vmatpush1.msra.mxu0 %v834
        %836 = vmatprep.subr.mxu0 0.0
        %v837 = vand.u32 %v815, 4294901760
        %838 = vmatpush1.msra.mxu0 %v837
        %839 = vmatprep.subr.mxu0 0.0
        %v840 = vand.u32 %v816, 4294901760
        %841 = vmatpush1.msra.mxu0 %v840
        %842 = vmatprep.subr.mxu0 0.0
        %v843 = vand.u32 %v817, 4294901760
        %844 = vmatpush1.msra.mxu0 %v843
        %845 = vmatprep.subr.mxu0 0.0
        %v846 = vand.u32 %v818, 4294901760
        %847 = vmatpush1.msra.mxu0 %v846
        %848 = vmatprep.subr.mxu0 0.0
        %v849 = vand.u32 %v819, 4294901760
        %850 = vmatpush1.msra.mxu0 %v849
        %851 = vmatprep.subr.mxu0 0.0
        %v852 = vand.u32 %v820, 4294901760
        %853 = vmatpush1.msra.mxu0 %v852
        %854 = vmatprep.subr.mxu0 0.0
        %855 = vmatpush1.msra.mxu0 0.0
        %856 = vmatprep.subr.mxu0 0.0
        %857 = vmatpush1.msra.mxu0 0.0
        %858 = vmatprep.subr.mxu0 0.0
        %859 = vmatpush1.msra.mxu0 0.0
        %860 = vmatprep.subr.mxu0 0.0
        %861 = vmatpush1.msra.mxu0 0.0
        %862 = vmatprep.subr.mxu0 0.0
        %863 = vmatpush1.msra.mxu0 0.0
        %864 = vmatprep.subr.mxu0 0.0
        %865 = vmatpush1.msra.mxu0 0.0
        %866 = vmatprep.subr.mxu0 0.0
        %867 = vmatpush1.msra.mxu0 0.0
        %868 = vmatprep.subr.mxu0 0.0
        %869 = vmatpush1.msra.mxu0 0.0
        %870 = vmatprep.subr.mxu0 0.0
        %871 = vmatpush1.msra.mxu0 0.0
        %872 = vmatprep.subr.mxu0 0.0
        %873 = vmatpush1.msra.mxu0 0.0
        %874 = vmatprep.subr.mxu0 0.0
        %875 = vmatpush1.msra.mxu0 0.0
        %876 = vmatprep.subr.mxu0 0.0
        %877 = vmatpush1.msra.mxu0 0.0
        %878 = vmatprep.subr.mxu0 0.0
        %879 = vmatpush1.msra.mxu0 0.0
        %880 = vmatprep.subr.mxu0 0.0
        %881 = vmatpush1.msra.mxu0 0.0
        %882 = vmatprep.subr.mxu0 0.0
        %883 = vmatpush1.msra.mxu0 0.0
        %884 = vmatprep.subr.mxu0 0.0
        %885 = vmatpush1.msra.mxu0 0.0
        %886 = vmatprep.subr.mxu0 0.0
        %887 = vmatpush1.msra.mxu0 0.0
        %888 = vmatprep.subr.mxu0 0.0
        %889 = vmatpush1.msra.mxu0 0.0
        %890 = vmatprep.subr.mxu0 0.0
        %891 = vmatpush1.msra.mxu0 0.0
        %892 = vmatprep.subr.mxu0 0.0
        %893 = vmatpush1.msra.mxu0 0.0
        %894 = vmatprep.subr.mxu0 0.0
        %895 = vmatpush1.msra.mxu0 0.0
        %896 = vmatprep.subr.mxu0 0.0
        %897 = vmatpush1.msra.mxu0 0.0
        %898 = vmatprep.subr.mxu0 0.0
        %899 = vmatpush1.msra.mxu0 0.0
        %900 = vmatprep.subr.mxu0 0.0
        %901 = vmatpush1.msra.mxu0 0.0
        %902 = vmatprep.mubr.f32.mxu0 0.0
        %v903 = vand.u32 %v825, 4294901760
        %v904 = vsub.f32 %v825, %v903
        %v905 = vand.u32 %v904, 4294901760
        %v906 = vsub.f32 %v904, %v905
        %v907 = vand.u32 %v906, 4294901760
        %908 = vmatmul.mubr.f32.gmra.mrb[0].mxu0 %v907
        %v909 = vpop.f32.mrb[0].mxu0
        %v910 = vadd.f32 0.0, %v909
        %v911 = vpop.f32.mrb[0].mxu0
        %912 = vmatprep.mubr.f32.mxu0 0.0
        %v913 = vand.u32 %v828, 4294901760
        %v914 = vsub.f32 %v828, %v913
        %v915 = vand.u32 %v914, 4294901760
        %v916 = vsub.f32 %v914, %v915
        %v917 = vand.u32 %v916, 4294901760
        %918 = vmatmul.mubr.f32.gmra.mrb[0].mxu0 %v917
        %v919 = vpop.f32.mrb[0].mxu0
        %v920 = vadd.f32 0.0, %v919
        %v921 = vpop.f32.mrb[0].mxu0
        %922 = vdwg.mxu0
        %923 = vmatprep.subr.mxu0 0.0
        %v924 = vand.u32 %v813, 4294901760
        %v925 = vsub.f32 %v813, %v924
        %v926 = vand.u32 %v925, 4294901760
        %v927 = vsub.f32 %v925, %v926
        %v928 = vand.u32 %v927, 4294901760
        %929 = vmatpush1.msra.mxu0 %v928
        %930 = vmatprep.subr.mxu0 0.0
        %v931 = vand.u32 %v814, 4294901760
        %v932 = vsub.f32 %v814, %v931
        %v933 = vand.u32 %v932, 4294901760
        %v934 = vsub.f32 %v932, %v933
        %v935 = vand.u32 %v934, 4294901760
        %936 = vmatpush1.msra.mxu0 %v935
        %937 = vmatprep.subr.mxu0 0.0
        %v938 = vand.u32 %v815, 4294901760
        %v939 = vsub.f32 %v815, %v938
        %v940 = vand.u32 %v939, 4294901760
        %v941 = vsub.f32 %v939, %v940
        %v942 = vand.u32 %v941, 4294901760
        %943 = vmatpush1.msra.mxu0 %v942
        %944 = vmatprep.subr.mxu0 0.0
        %v945 = vand.u32 %v816, 4294901760
        %v946 = vsub.f32 %v816, %v945
        %v947 = vand.u32 %v946, 4294901760
        %v948 = vsub.f32 %v946, %v947
        %v949 = vand.u32 %v948, 4294901760
        %950 = vmatpush1.msra.mxu0 %v949
        %951 = vmatprep.subr.mxu0 0.0
        %v952 = vand.u32 %v817, 4294901760
        %v953 = vsub.f32 %v817, %v952
        %v954 = vand.u32 %v953, 4294901760
        %v955 = vsub.f32 %v953, %v954
        %v956 = vand.u32 %v955, 4294901760
        %957 = vmatpush1.msra.mxu0 %v956
        %958 = vmatprep.subr.mxu0 0.0
        %v959 = vand.u32 %v818, 4294901760
        %v960 = vsub.f32 %v818, %v959
        %v961 = vand.u32 %v960, 4294901760
        %v962 = vsub.f32 %v960, %v961
        %v963 = vand.u32 %v962, 4294901760
        %964 = vmatpush1.msra.mxu0 %v963
        %965 = vmatprep.subr.mxu0 0.0
        %v966 = vand.u32 %v819, 4294901760
        %v967 = vsub.f32 %v819, %v966
        %v968 = vand.u32 %v967, 4294901760
        %v969 = vsub.f32 %v967, %v968
        %v970 = vand.u32 %v969, 4294901760
        %971 = vmatpush1.msra.mxu0 %v970
        %972 = vmatprep.subr.mxu0 0.0
        %v973 = vand.u32 %v820, 4294901760
        %v974 = vsub.f32 %v820, %v973
        %v975 = vand.u32 %v974, 4294901760
        %v976 = vsub.f32 %v974, %v975
        %v977 = vand.u32 %v976, 4294901760
        %978 = vmatpush1.msra.mxu0 %v977
        %979 = vmatprep.subr.mxu0 0.0
        %980 = vmatpush1.msra.mxu0 0.0
        %981 = vmatprep.subr.mxu0 0.0
        %982 = vmatpush1.msra.mxu0 0.0
        %983 = vmatprep.subr.mxu0 0.0
        %984 = vmatpush1.msra.mxu0 0.0
        %985 = vmatprep.subr.mxu0 0.0
        %986 = vmatpush1.msra.mxu0 0.0
        %987 = vmatprep.subr.mxu0 0.0
        %988 = vmatpush1.msra.mxu0 0.0
        %989 = vmatprep.subr.mxu0 0.0
        %990 = vmatpush1.msra.mxu0 0.0
        %991 = vmatprep.subr.mxu0 0.0
        %992 = vmatpush1.msra.mxu0 0.0
        %993 = vmatprep.subr.mxu0 0.0
        %994 = vmatpush1.msra.mxu0 0.0
        %995 = vmatprep.subr.mxu0 0.0
        %996 = vmatpush1.msra.mxu0 0.0
        %997 = vmatprep.subr.mxu0 0.0
        %998 = vmatpush1.msra.mxu0 0.0
        %999 = vmatprep.subr.mxu0 0.0
        %1000 = vmatpush1.msra.mxu0 0.0
        %1001 = vmatprep.subr.mxu0 0.0
        %1002 = vmatpush1.msra.mxu0 0.0
        %1003 = vmatprep.subr.mxu0 0.0
        %1004 = vmatpush1.msra.mxu0 0.0
        %1005 = vmatprep.subr.mxu0 0.0
        %1006 = vmatpush1.msra.mxu0 0.0
        %1007 = vmatprep.subr.mxu0 0.0
        %1008 = vmatpush1.msra.mxu0 0.0
        %1009 = vmatprep.subr.mxu0 0.0
        %1010 = vmatpush1.msra.mxu0 0.0
        %1011 = vmatprep.subr.mxu0 0.0
        %1012 = vmatpush1.msra.mxu0 0.0
        %1013 = vmatprep.subr.mxu0 0.0
        %1014 = vmatpush1.msra.mxu0 0.0
        %1015 = vmatprep.subr.mxu0 0.0
        %1016 = vmatpush1.msra.mxu0 0.0
        %1017 = vmatprep.subr.mxu0 0.0
        %1018 = vmatpush1.msra.mxu0 0.0
        %1019 = vmatprep.subr.mxu0 0.0
        %1020 = vmatpush1.msra.mxu0 0.0
        %1021 = vmatprep.subr.mxu0 0.0
        %1022 = vmatpush1.msra.mxu0 0.0
        %1023 = vmatprep.subr.mxu0 0.0
        %1024 = vmatpush1.msra.mxu0 0.0
        %1025 = vmatprep.subr.mxu0 0.0
        %1026 = vmatpush1.msra.mxu0 0.0
        %1027 = vmatprep.mubr.f32.mxu0 0.0
        %v1028 = vand.u32 %v825, 4294901760
        %1029 = vmatmul.mubr.f32.gmra.mrb[0].mxu0 %v1028
        %v1030 = vpop.f32.mrb[0].mxu0
        %v1031 = vadd.f32 %v910, %v1030
        %v1032 = vpop.f32.mrb[0].mxu0
        %1033 = vmatprep.mubr.f32.mxu0 0.0
        %v1034 = vand.u32 %v828, 4294901760
        %1035 = vmatmul.mubr.f32.gmra.mrb[0].mxu0 %v1034
        %v1036 = vpop.f32.mrb[0].mxu0
        %v1037 = vadd.f32 %v920, %v1036
        %v1038 = vpop.f32.mrb[0].mxu0
        %1039 = vdwg.mxu0
        %1040 = vmatprep.subr.mxu0 0.0
        %v1041 = vand.u32 %v813, 4294901760
        %v1042 = vsub.f32 %v813, %v1041
        %1043 = vmatpush1.msra.mxu0 %v1042
        %1044 = vmatprep.subr.mxu0 0.0
        %v1045 = vand.u32 %v814, 4294901760
        %v1046 = vsub.f32 %v814, %v1045
        %1047 = vmatpush1.msra.mxu0 %v1046
        %1048 = vmatprep.subr.mxu0 0.0
        %v1049 = vand.u32 %v815, 4294901760
        %v1050 = vsub.f32 %v815, %v1049
        %1051 = vmatpush1.msra.mxu0 %v1050
        %1052 = vmatprep.subr.mxu0 0.0
        %v1053 = vand.u32 %v816, 4294901760
        %v1054 = vsub.f32 %v816, %v1053
        %1055 = vmatpush1.msra.mxu0 %v1054
        %1056 = vmatprep.subr.mxu0 0.0
        %v1057 = vand.u32 %v817, 4294901760
        %v1058 = vsub.f32 %v817, %v1057
        %1059 = vmatpush1.msra.mxu0 %v1058
        %1060 = vmatprep.subr.mxu0 0.0
        %v1061 = vand.u32 %v818, 4294901760
        %v1062 = vsub.f32 %v818, %v1061
        %1063 = vmatpush1.msra.mxu0 %v1062
        %1064 = vmatprep.subr.mxu0 0.0
        %v1065 = vand.u32 %v819, 4294901760
        %v1066 = vsub.f32 %v819, %v1065
        %1067 = vmatpush1.msra.mxu0 %v1066
        %1068 = vmatprep.subr.mxu0 0.0
        %v1069 = vand.u32 %v820, 4294901760
        %v1070 = vsub.f32 %v820, %v1069
        %1071 = vmatpush1.msra.mxu0 %v1070
        %1072 = vmatprep.subr.mxu0 0.0
        %1073 = vmatpush1.msra.mxu0 0.0
        %1074 = vmatprep.subr.mxu0 0.0
        %1075 = vmatpush1.msra.mxu0 0.0
        %1076 = vmatprep.subr.mxu0 0.0
        %1077 = vmatpush1.msra.mxu0 0.0
        %1078 = vmatprep.subr.mxu0 0.0
        %1079 = vmatpush1.msra.mxu0 0.0
        %1080 = vmatprep.subr.mxu0 0.0
        %1081 = vmatpush1.msra.mxu0 0.0
        %1082 = vmatprep.subr.mxu0 0.0
        %1083 = vmatpush1.msra.mxu0 0.0
        %1084 = vmatprep.subr.mxu0 0.0
        %1085 = vmatpush1.msra.mxu0 0.0
        %1086 = vmatprep.subr.mxu0 0.0
        %1087 = vmatpush1.msra.mxu0 0.0
        %1088 = vmatprep.subr.mxu0 0.0
        %1089 = vmatpush1.msra.mxu0 0.0
        %1090 = vmatprep.subr.mxu0 0.0
        %1091 = vmatpush1.msra.mxu0 0.0
        %1092 = vmatprep.subr.mxu0 0.0
        %1093 = vmatpush1.msra.mxu0 0.0
        %1094 = vmatprep.subr.mxu0 0.0
        %1095 = vmatpush1.msra.mxu0 0.0
        %1096 = vmatprep.subr.mxu0 0.0
        %1097 = vmatpush1.msra.mxu0 0.0
        %1098 = vmatprep.subr.mxu0 0.0
        %1099 = vmatpush1.msra.mxu0 0.0
        %1100 = vmatprep.subr.mxu0 0.0
        %1101 = vmatpush1.msra.mxu0 0.0
        %1102 = vmatprep.subr.mxu0 0.0
        %1103 = vmatpush1.msra.mxu0 0.0
        %1104 = vmatprep.subr.mxu0 0.0
        %1105 = vmatpush1.msra.mxu0 0.0
        %1106 = vmatprep.subr.mxu0 0.0
        %1107 = vmatpush1.msra.mxu0 0.0
        %1108 = vmatprep.subr.mxu0 0.0
        %1109 = vmatpush1.msra.mxu0 0.0
        %1110 = vmatprep.subr.mxu0 0.0
        %1111 = vmatpush1.msra.mxu0 0.0
        %1112 = vmatprep.subr.mxu0 0.0
        %1113 = vmatpush1.msra.mxu0 0.0
        %1114 = vmatprep.subr.mxu0 0.0
        %1115 = vmatpush1.msra.mxu0 0.0
        %1116 = vmatprep.subr.mxu0 0.0
        %1117 = vmatpush1.msra.mxu0 0.0
        %1118 = vmatprep.subr.mxu0 0.0
        %1119 = vmatpush1.msra.mxu0 0.0
        %1120 = vmatprep.mubr.f32.mxu0 0.0
        %v1121 = vand.u32 %v825, 4294901760
        %v1122 = vsub.f32 %v825, %v1121
        %1123 = vmatmul.mubr.f32.gmra.mrb[0].mxu0 %v1122
        %v1124 = vpop.f32.mrb[0].mxu0
        %v1125 = vadd.f32 %v1031, %v1124
        %v1126 = vpop.f32.mrb[0].mxu0
        %1127 = vmatprep.mubr.f32.mxu0 0.0
        %v1128 = vand.u32 %v828, 4294901760
        %v1129 = vsub.f32 %v828, %v1128
        %1130 = vmatmul.mubr.f32.gmra.mrb[0].mxu0 %v1129
        %v1131 = vpop.f32.mrb[0].mxu0
        %v1132 = vadd.f32 %v1037, %v1131
        %v1133 = vpop.f32.mrb[0].mxu0
        %1134 = vdwg.mxu0
        %1135 = vmatprep.subr.mxu0 0.0
        %v1136 = vand.u32 %v813, 4294901760
        %1137 = vmatpush1.msra.mxu0 %v1136
        %1138 = vmatprep.subr.mxu0 0.0
        %v1139 = vand.u32 %v814, 4294901760
        %1140 = vmatpush1.msra.mxu0 %v1139
        %1141 = vmatprep.subr.mxu0 0.0
        %v1142 = vand.u32 %v815, 4294901760
        %1143 = vmatpush1.msra.mxu0 %v1142
        %1144 = vmatprep.subr.mxu0 0.0
        %v1145 = vand.u32 %v816, 4294901760
        %1146 = vmatpush1.msra.mxu0 %v1145
        %1147 = vmatprep.subr.mxu0 0.0
        %v1148 = vand.u32 %v817, 4294901760
        %1149 = vmatpush1.msra.mxu0 %v1148
        %1150 = vmatprep.subr.mxu0 0.0
        %v1151 = vand.u32 %v818, 4294901760
        %1152 = vmatpush1.msra.mxu0 %v1151
        %1153 = vmatprep.subr.mxu0 0.0
        %v1154 = vand.u32 %v819, 4294901760
        %1155 = vmatpush1.msra.mxu0 %v1154
        %1156 = vmatprep.subr.mxu0 0.0
        %v1157 = vand.u32 %v820, 4294901760
        %1158 = vmatpush1.msra.mxu0 %v1157
        %1159 = vmatprep.subr.mxu0 0.0
        %1160 = vmatpush1.msra.mxu0 0.0
        %1161 = vmatprep.subr.mxu0 0.0
        %1162 = vmatpush1.msra.mxu0 0.0
        %1163 = vmatprep.subr.mxu0 0.0
        %1164 = vmatpush1.msra.mxu0 0.0
        %1165 = vmatprep.subr.mxu0 0.0
        %1166 = vmatpush1.msra.mxu0 0.0
        %1167 = vmatprep.subr.mxu0 0.0
        %1168 = vmatpush1.msra.mxu0 0.0
        %1169 = vmatprep.subr.mxu0 0.0
        %1170 = vmatpush1.msra.mxu0 0.0
        %1171 = vmatprep.subr.mxu0 0.0
        %1172 = vmatpush1.msra.mxu0 0.0
        %1173 = vmatprep.subr.mxu0 0.0
        %1174 = vmatpush1.msra.mxu0 0.0
        %1175 = vmatprep.subr.mxu0 0.0
        %1176 = vmatpush1.msra.mxu0 0.0
        %1177 = vmatprep.subr.mxu0 0.0
        %1178 = vmatpush1.msra.mxu0 0.0
        %1179 = vmatprep.subr.mxu0 0.0
        %1180 = vmatpush1.msra.mxu0 0.0
        %1181 = vmatprep.subr.mxu0 0.0
        %1182 = vmatpush1.msra.mxu0 0.0
        %1183 = vmatprep.subr.mxu0 0.0
        %1184 = vmatpush1.msra.mxu0 0.0
        %1185 = vmatprep.subr.mxu0 0.0
        %1186 = vmatpush1.msra.mxu0 0.0
        %1187 = vmatprep.subr.mxu0 0.0
        %1188 = vmatpush1.msra.mxu0 0.0
        %1189 = vmatprep.subr.mxu0 0.0
        %1190 = vmatpush1.msra.mxu0 0.0
        %1191 = vmatprep.subr.mxu0 0.0
        %1192 = vmatpush1.msra.mxu0 0.0
        %1193 = vmatprep.subr.mxu0 0.0
        %1194 = vmatpush1.msra.mxu0 0.0
        %1195 = vmatprep.subr.mxu0 0.0
        %1196 = vmatpush1.msra.mxu0 0.0
        %1197 = vmatprep.subr.mxu0 0.0
        %1198 = vmatpush1.msra.mxu0 0.0
        %1199 = vmatprep.subr.mxu0 0.0
        %1200 = vmatpush1.msra.mxu0 0.0
        %1201 = vmatprep.subr.mxu0 0.0
        %1202 = vmatpush1.msra.mxu0 0.0
        %1203 = vmatprep.subr.mxu0 0.0
        %1204 = vmatpush1.msra.mxu0 0.0
        %1205 = vmatprep.subr.mxu0 0.0
        %1206 = vmatpush1.msra.mxu0 0.0
        %1207 = vmatprep.mubr.f32.mxu0 0.0
        %v1208 = vand.u32 %v825, 4294901760
        %v1209 = vsub.f32 %v825, %v1208
        %v1210 = vand.u32 %v1209, 4294901760
        %1211 = vmatmul.mubr.f32.gmra.mrb[0].mxu0 %v1210
        %v1212 = vpop.f32.mrb[0].mxu0
        %v1213 = vadd.f32 %v1125, %v1212
        %v1214 = vpop.f32.mrb[0].mxu0
        %1215 = vmatprep.mubr.f32.mxu0 0.0
        %v1216 = vand.u32 %v828, 4294901760
        %v1217 = vsub.f32 %v828, %v1216
        %v1218 = vand.u32 %v1217, 4294901760
        %1219 = vmatmul.mubr.f32.gmra.mrb[0].mxu0 %v1218
        %v1220 = vpop.f32.mrb[0].mxu0
        %v1221 = vadd.f32 %v1132, %v1220
        %v1222 = vpop.f32.mrb[0].mxu0
        %1223 = vdwg.mxu0
        %1224 = vmatprep.subr.mxu0 0.0
        %v1225 = vand.u32 %v813, 4294901760
        %v1226 = vsub.f32 %v813, %v1225
        %v1227 = vand.u32 %v1226, 4294901760
        %1228 = vmatpush1.msra.mxu0 %v1227
        %1229 = vmatprep.subr.mxu0 0.0
        %v1230 = vand.u32 %v814, 4294901760
        %v1231 = vsub.f32 %v814, %v1230
        %v1232 = vand.u32 %v1231, 4294901760
        %1233 = vmatpush1.msra.mxu0 %v1232
        %1234 = vmatprep.subr.mxu0 0.0
        %v1235 = vand.u32 %v815, 4294901760
        %v1236 = vsub.f32 %v815, %v1235
        %v1237 = vand.u32 %v1236, 4294901760
        %1238 = vmatpush1.msra.mxu0 %v1237
        %1239 = vmatprep.subr.mxu0 0.0
        %v1240 = vand.u32 %v816, 4294901760
        %v1241 = vsub.f32 %v816, %v1240
        %v1242 = vand.u32 %v1241, 4294901760
        %1243 = vmatpush1.msra.mxu0 %v1242
        %1244 = vmatprep.subr.mxu0 0.0
        %v1245 = vand.u32 %v817, 4294901760
        %v1246 = vsub.f32 %v817, %v1245
        %v1247 = vand.u32 %v1246, 4294901760
        %1248 = vmatpush1.msra.mxu0 %v1247
        %1249 = vmatprep.subr.mxu0 0.0
        %v1250 = vand.u32 %v818, 4294901760
        %v1251 = vsub.f32 %v818, %v1250
        %v1252 = vand.u32 %v1251, 4294901760
        %1253 = vmatpush1.msra.mxu0 %v1252
        %1254 = vmatprep.subr.mxu0 0.0
        %v1255 = vand.u32 %v819, 4294901760
        %v1256 = vsub.f32 %v819, %v1255
        %v1257 = vand.u32 %v1256, 4294901760
        %1258 = vmatpush1.msra.mxu0 %v1257
        %1259 = vmatprep.subr.mxu0 0.0
        %v1260 = vand.u32 %v820, 4294901760
        %v1261 = vsub.f32 %v820, %v1260
        %v1262 = vand.u32 %v1261, 4294901760
        %1263 = vmatpush1.msra.mxu0 %v1262
        %1264 = vmatprep.subr.mxu0 0.0
        %1265 = vmatpush1.msra.mxu0 0.0
        %1266 = vmatprep.subr.mxu0 0.0
        %1267 = vmatpush1.msra.mxu0 0.0
        %1268 = vmatprep.subr.mxu0 0.0
        %1269 = vmatpush1.msra.mxu0 0.0
        %1270 = vmatprep.subr.mxu0 0.0
        %1271 = vmatpush1.msra.mxu0 0.0
        %1272 = vmatprep.subr.mxu0 0.0
        %1273 = vmatpush1.msra.mxu0 0.0
        %1274 = vmatprep.subr.mxu0 0.0
        %1275 = vmatpush1.msra.mxu0 0.0
        %1276 = vmatprep.subr.mxu0 0.0
        %1277 = vmatpush1.msra.mxu0 0.0
        %1278 = vmatprep.subr.mxu0 0.0
        %1279 = vmatpush1.msra.mxu0 0.0
        %1280 = vmatprep.subr.mxu0 0.0
        %1281 = vmatpush1.msra.mxu0 0.0
        %1282 = vmatprep.subr.mxu0 0.0
        %1283 = vmatpush1.msra.mxu0 0.0
        %1284 = vmatprep.subr.mxu0 0.0
        %1285 = vmatpush1.msra.mxu0 0.0
        %1286 = vmatprep.subr.mxu0 0.0
        %1287 = vmatpush1.msra.mxu0 0.0
        %1288 = vmatprep.subr.mxu0 0.0
        %1289 = vmatpush1.msra.mxu0 0.0
        %1290 = vmatprep.subr.mxu0 0.0
        %1291 = vmatpush1.msra.mxu0 0.0
        %1292 = vmatprep.subr.mxu0 0.0
        %1293 = vmatpush1.msra.mxu0 0.0
        %1294 = vmatprep.subr.mxu0 0.0
        %1295 = vmatpush1.msra.mxu0 0.0
        %1296 = vmatprep.subr.mxu0 0.0
        %1297 = vmatpush1.msra.mxu0 0.0
        %1298 = vmatprep.subr.mxu0 0.0
        %1299 = vmatpush1.msra.mxu0 0.0
        %1300 = vmatprep.subr.mxu0 0.0
        %1301 = vmatpush1.msra.mxu0 0.0
        %1302 = vmatprep.subr.mxu0 0.0
        %1303 = vmatpush1.msra.mxu0 0.0
        %1304 = vmatprep.subr.mxu0 0.0
        %1305 = vmatpush1.msra.mxu0 0.0
        %1306 = vmatprep.subr.mxu0 0.0
        %1307 = vmatpush1.msra.mxu0 0.0
        %1308 = vmatprep.subr.mxu0 0.0
        %1309 = vmatpush1.msra.mxu0 0.0
        %1310 = vmatprep.subr.mxu0 0.0
        %1311 = vmatpush1.msra.mxu0 0.0
        %1312 = vmatprep.mubr.f32.mxu0 0.0
        %v1313 = vand.u32 %v825, 4294901760
        %1314 = vmatmul.mubr.f32.gmra.mrb[0].mxu0 %v1313
        %v1315 = vpop.f32.mrb[0].mxu0
        %v1316 = vadd.f32 %v1213, %v1315
        %v1317 = vpop.f32.mrb[0].mxu0
        %1318 = vmatprep.mubr.f32.mxu0 0.0
        %v1319 = vand.u32 %v828, 4294901760
        %1320 = vmatmul.mubr.f32.gmra.mrb[0].mxu0 %v1319
        %v1321 = vpop.f32.mrb[0].mxu0
        %v1322 = vadd.f32 %v1221, %v1321
        %v1323 = vpop.f32.mrb[0].mxu0
        %1324 = vdwg.mxu0
        %1325 = vmatprep.subr.mxu0 0.0
        %v1326 = vand.u32 %v813, 4294901760
        %1327 = vmatpush1.msra.mxu0 %v1326
        %1328 = vmatprep.subr.mxu0 0.0
        %v1329 = vand.u32 %v814, 4294901760
        %1330 = vmatpush1.msra.mxu0 %v1329
        %1331 = vmatprep.subr.mxu0 0.0
        %v1332 = vand.u32 %v815, 4294901760
        %1333 = vmatpush1.msra.mxu0 %v1332
        %1334 = vmatprep.subr.mxu0 0.0
        %v1335 = vand.u32 %v816, 4294901760
        %1336 = vmatpush1.msra.mxu0 %v1335
        %1337 = vmatprep.subr.mxu0 0.0
        %v1338 = vand.u32 %v817, 4294901760
        %1339 = vmatpush1.msra.mxu0 %v1338
        %1340 = vmatprep.subr.mxu0 0.0
        %v1341 = vand.u32 %v818, 4294901760
        %1342 = vmatpush1.msra.mxu0 %v1341
        %1343 = vmatprep.subr.mxu0 0.0
        %v1344 = vand.u32 %v819, 4294901760
        %1345 = vmatpush1.msra.mxu0 %v1344
        %1346 = vmatprep.subr.mxu0 0.0
        %v1347 = vand.u32 %v820, 4294901760
        %1348 = vmatpush1.msra.mxu0 %v1347
        %1349 = vmatprep.subr.mxu0 0.0
        %1350 = vmatpush1.msra.mxu0 0.0
        %1351 = vmatprep.subr.mxu0 0.0
        %1352 = vmatpush1.msra.mxu0 0.0
        %1353 = vmatprep.subr.mxu0 0.0
        %1354 = vmatpush1.msra.mxu0 0.0
        %1355 = vmatprep.subr.mxu0 0.0
        %1356 = vmatpush1.msra.mxu0 0.0
        %1357 = vmatprep.subr.mxu0 0.0
        %1358 = vmatpush1.msra.mxu0 0.0
        %1359 = vmatprep.subr.mxu0 0.0
        %1360 = vmatpush1.msra.mxu0 0.0
        %1361 = vmatprep.subr.mxu0 0.0
        %1362 = vmatpush1.msra.mxu0 0.0
        %1363 = vmatprep.subr.mxu0 0.0
        %1364 = vmatpush1.msra.mxu0 0.0
        %1365 = vmatprep.subr.mxu0 0.0
        %1366 = vmatpush1.msra.mxu0 0.0
        %1367 = vmatprep.subr.mxu0 0.0
        %1368 = vmatpush1.msra.mxu0 0.0
        %1369 = vmatprep.subr.mxu0 0.0
        %1370 = vmatpush1.msra.mxu0 0.0
        %1371 = vmatprep.subr.mxu0 0.0
        %1372 = vmatpush1.msra.mxu0 0.0
        %1373 = vmatprep.subr.mxu0 0.0
        %1374 = vmatpush1.msra.mxu0 0.0
        %1375 = vmatprep.subr.mxu0 0.0
        %1376 = vmatpush1.msra.mxu0 0.0
        %1377 = vmatprep.subr.mxu0 0.0
        %1378 = vmatpush1.msra.mxu0 0.0
        %1379 = vmatprep.subr.mxu0 0.0
        %1380 = vmatpush1.msra.mxu0 0.0
        %1381 = vmatprep.subr.mxu0 0.0
        %1382 = vmatpush1.msra.mxu0 0.0
        %1383 = vmatprep.subr.mxu0 0.0
        %1384 = vmatpush1.msra.mxu0 0.0
        %1385 = vmatprep.subr.mxu0 0.0
        %1386 = vmatpush1.msra.mxu0 0.0
        %1387 = vmatprep.subr.mxu0 0.0
        %1388 = vmatpush1.msra.mxu0 0.0
        %1389 = vmatprep.subr.mxu0 0.0
        %1390 = vmatpush1.msra.mxu0 0.0
        %1391 = vmatprep.subr.mxu0 0.0
        %1392 = vmatpush1.msra.mxu0 0.0
        %1393 = vmatprep.subr.mxu0 0.0
        %1394 = vmatpush1.msra.mxu0 0.0
        %1395 = vmatprep.subr.mxu0 0.0
        %1396 = vmatpush1.msra.mxu0 0.0
        %1397 = vmatprep.mubr.f32.mxu0 0.0
        %v1398 = vand.u32 %v825, 4294901760
        %1399 = vmatmul.mubr.f32.gmra.mrb[0].mxu0 %v1398
        %v1400 = vpop.f32.mrb[0].mxu0
        %v1401 = vadd.f32 %v1316, %v1400
        %v1402 = vpop.f32.mrb[0].mxu0
        %1403 = vmatprep.mubr.f32.mxu0 0.0
        %v1404 = vand.u32 %v828, 4294901760
        %1405 = vmatmul.mubr.f32.gmra.mrb[0].mxu0 %v1404
        %v1406 = vpop.f32.mrb[0].mxu0
        %v1407 = vadd.f32 %v1322, %v1406
        %v1408 = vpop.f32.mrb[0].mxu0
        %1409 = vdwg.mxu0
        %v1410 = vld [vmem:[%s6] sm:$0xff]
        %v1411 = vld [vmem:[%s6 + $0x8] sm:$0xff]
        %v1412 = vld [vmem:[%s7] sm:$0x1]
        %v1414 = vlaneseq
        %v1415 = vshrl.u32 %v1414, 7
        %v1416 = vsub.s32 0, %v1415
        %v1417 = vrot.slane %v1412, %v1416
        %vm1419 = vcmask 130048
        %v1421 = vsel %vm1419, %v1401, 0
        %v1424 = vsel %vm1419, %v1407, 0
        %1426 = vmatprep.subr.mxu0 0.0
        %1427 = vmatpush1.msra.mxu0 %v1410
        %1428 = vmatprep.subr.mxu0 0.0
        %1429 = vmatpush1.msra.mxu0 %v1411
        %1430 = vmatprep.subr.mxu0 0.0
        %1431 = vmatpush1.msra.mxu0 0.0
        %1432 = vmatprep.subr.mxu0 0.0
        %1433 = vmatpush1.msra.mxu0 0.0
        %1434 = vmatprep.subr.mxu0 0.0
        %1435 = vmatpush1.msra.mxu0 0.0
        %1436 = vmatprep.subr.mxu0 0.0
        %1437 = vmatpush1.msra.mxu0 0.0
        %1438 = vmatprep.subr.mxu0 0.0
        %1439 = vmatpush1.msra.mxu0 0.0
        %1440 = vmatprep.subr.mxu0 0.0
        %1441 = vmatpush1.msra.mxu0 0.0
        %1442 = vmatprep.subr.mxu0 0.0
        %1443 = vmatpush1.msra.mxu0 0.0
        %1444 = vmatprep.subr.mxu0 0.0
        %1445 = vmatpush1.msra.mxu0 0.0
        %1446 = vmatprep.subr.mxu0 0.0
        %1447 = vmatpush1.msra.mxu0 0.0
        %1448 = vmatprep.subr.mxu0 0.0
        %1449 = vmatpush1.msra.mxu0 0.0
        %1450 = vmatprep.subr.mxu0 0.0
        %1451 = vmatpush1.msra.mxu0 0.0
        %1452 = vmatprep.subr.mxu0 0.0
        %1453 = vmatpush1.msra.mxu0 0.0
        %1454 = vmatprep.subr.mxu0 0.0
        %1455 = vmatpush1.msra.mxu0 0.0
        %1456 = vmatprep.subr.mxu0 0.0
        %1457 = vmatpush1.msra.mxu0 0.0
        %1458 = vmatprep.subr.mxu0 0.0
        %1459 = vmatpush1.msra.mxu0 0.0
        %1460 = vmatprep.subr.mxu0 0.0
        %1461 = vmatpush1.msra.mxu0 0.0
        %1462 = vmatprep.subr.mxu0 0.0
        %1463 = vmatpush1.msra.mxu0 0.0
        %1464 = vmatprep.subr.mxu0 0.0
        %1465 = vmatpush1.msra.mxu0 0.0
        %1466 = vmatprep.subr.mxu0 0.0
        %1467 = vmatpush1.msra.mxu0 0.0
        %1468 = vmatprep.subr.mxu0 0.0
        %1469 = vmatpush1.msra.mxu0 0.0
        %1470 = vmatprep.subr.mxu0 0.0
        %1471 = vmatpush1.msra.mxu0 0.0
        %1472 = vmatprep.subr.mxu0 0.0
        %1473 = vmatpush1.msra.mxu0 0.0
        %1474 = vmatprep.subr.mxu0 0.0
        %1475 = vmatpush1.msra.mxu0 0.0
        %1476 = vmatprep.subr.mxu0 0.0
        %1477 = vmatpush1.msra.mxu0 0.0
        %1478 = vmatprep.subr.mxu0 0.0
        %1479 = vmatpush1.msra.mxu0 0.0
        %1480 = vmatprep.subr.mxu0 0.0
        %1481 = vmatpush1.msra.mxu0 0.0
        %1482 = vmatprep.subr.mxu0 0.0
        %1483 = vmatpush1.msra.mxu0 0.0
        %1484 = vmatprep.subr.mxu0 0.0
        %1485 = vmatpush1.msra.mxu0 0.0
        %1486 = vmatprep.subr.mxu0 0.0
        %1487 = vmatpush1.msra.mxu0 0.0
        %1488 = vmatprep.subr.mxu0 0.0
        %1489 = vmatpush1.msra.mxu0 0.0
        %1490 = vmatprep.mubr.f32.mxu0 0.0
        %1491 = vmatmul.mubr.f32.gmra.mrb[0].mxu0 %v1421
        %v1492 = vpop.f32.mrb[0].mxu0
        %v1493 = vadd.f32 %v1417, %v1492
        %v1494 = vpop.f32.mrb[0].mxu0
        %1495 = vmatprep.mubr.f32.mxu0 0.0
        %1496 = vmatmul.mubr.f32.gmra.mrb[0].mxu0 %v1424
        %v1497 = vpop.f32.mrb[0].mxu0
        %v1498 = vadd.f32 %v1417, %v1497
        %v1499 = vpop.f32.mrb[0].mxu0
        %1500 = vdwg.mxu0
        %vm1501 = vcmp.ge.f32.partialorder %v1493, 0.0
        %vm1502 = vcmp.ge.f32.partialorder %v1498, 0.0
        %v1503 = vstv %s645
        %v1504 = vmul.f32 %v1503, %v1493
        %v1505 = vmul.f32 %v1503, %v1498
        %v1506 = vsel %vm1501, %v1493, %v1504
        %v1507 = vsel %vm1502, %v1498, %v1505
        %v1508 = vld [vmem:[%s9] sm:$0xff]
        %v1509 = vld [vmem:[%s9 + $0x8] sm:$0xff]
        %v1511 = vsel %vm1419, %v1506, 0
        %v1514 = vsel %vm1419, %v1507, 0
        %1516 = vmatprep.subr.mxu0 0.0
        %1517 = vmatpush1.msra.mxu0 %v1508
        %1518 = vmatprep.subr.mxu0 0.0
        %1519 = vmatpush1.msra.mxu0 %v1509
        %1520 = vmatprep.subr.mxu0 0.0
        %1521 = vmatpush1.msra.mxu0 0.0
        %1522 = vmatprep.subr.mxu0 0.0
        %1523 = vmatpush1.msra.mxu0 0.0
        %1524 = vmatprep.subr.mxu0 0.0
        %1525 = vmatpush1.msra.mxu0 0.0
        %1526 = vmatprep.subr.mxu0 0.0
        %1527 = vmatpush1.msra.mxu0 0.0
        %1528 = vmatprep.subr.mxu0 0.0
        %1529 = vmatpush1.msra.mxu0 0.0
        %1530 = vmatprep.subr.mxu0 0.0
        %1531 = vmatpush1.msra.mxu0 0.0
        %1532 = vmatprep.subr.mxu0 0.0
        %1533 = vmatpush1.msra.mxu0 0.0
        %1534 = vmatprep.subr.mxu0 0.0
        %1535 = vmatpush1.msra.mxu0 0.0
        %1536 = vmatprep.subr.mxu0 0.0
        %1537 = vmatpush1.msra.mxu0 0.0
        %1538 = vmatprep.subr.mxu0 0.0
        %1539 = vmatpush1.msra.mxu0 0.0
        %1540 = vmatprep.subr.mxu0 0.0
        %1541 = vmatpush1.msra.mxu0 0.0
        %1542 = vmatprep.subr.mxu0 0.0
        %1543 = vmatpush1.msra.mxu0 0.0
        %1544 = vmatprep.subr.mxu0 0.0
        %1545 = vmatpush1.msra.mxu0 0.0
        %1546 = vmatprep.subr.mxu0 0.0
        %1547 = vmatpush1.msra.mxu0 0.0
        %1548 = vmatprep.subr.mxu0 0.0
        %1549 = vmatpush1.msra.mxu0 0.0
        %1550 = vmatprep.subr.mxu0 0.0
        %1551 = vmatpush1.msra.mxu0 0.0
        %1552 = vmatprep.subr.mxu0 0.0
        %1553 = vmatpush1.msra.mxu0 0.0
        %1554 = vmatprep.subr.mxu0 0.0
        %1555 = vmatpush1.msra.mxu0 0.0
        %1556 = vmatprep.subr.mxu0 0.0
        %1557 = vmatpush1.msra.mxu0 0.0
        %1558 = vmatprep.subr.mxu0 0.0
        %1559 = vmatpush1.msra.mxu0 0.0
        %1560 = vmatprep.subr.mxu0 0.0
        %1561 = vmatpush1.msra.mxu0 0.0
        %1562 = vmatprep.subr.mxu0 0.0
        %1563 = vmatpush1.msra.mxu0 0.0
        %1564 = vmatprep.subr.mxu0 0.0
        %1565 = vmatpush1.msra.mxu0 0.0
        %1566 = vmatprep.subr.mxu0 0.0
        %1567 = vmatpush1.msra.mxu0 0.0
        %1568 = vmatprep.subr.mxu0 0.0
        %1569 = vmatpush1.msra.mxu0 0.0
        %1570 = vmatprep.subr.mxu0 0.0
        %1571 = vmatpush1.msra.mxu0 0.0
        %1572 = vmatprep.subr.mxu0 0.0
        %1573 = vmatpush1.msra.mxu0 0.0
        %1574 = vmatprep.subr.mxu0 0.0
        %1575 = vmatpush1.msra.mxu0 0.0
        %1576 = vmatprep.subr.mxu0 0.0
        %1577 = vmatpush1.msra.mxu0 0.0
        %1578 = vmatprep.subr.mxu0 0.0
        %1579 = vmatpush1.msra.mxu0 0.0
        %1580 = vmatprep.mubr.f32.mxu0 0.0
        %1581 = vmatmul.mubr.f32.gmra.mrb[0].mxu0 %v1511
        %v1582 = vpop.f32.mrb[0].mxu0
        %v1583 = vadd.f32 0.0, %v1582
        %v1584 = vpop.f32.mrb[0].mxu0
        %1585 = vmatprep.mubr.f32.mxu0 0.0
        %1586 = vmatmul.mubr.f32.gmra.mrb[0].mxu0 %v1514
        %v1587 = vpop.f32.mrb[0].mxu0
        %v1588 = vadd.f32 0.0, %v1587
        %v1589 = vpop.f32.mrb[0].mxu0
        %1590 = vdwg.mxu0
        %v1591 = vld [vmem:[%s2] sm:$0xff]
        %v1592 = vld [vmem:[%s2 + $0x8] sm:$0xff]
        %v1593 = vld [vmem:[%s2 + $0x10] sm:$0xff]
        %v1594 = vld [vmem:[%s2 + $0x18] sm:$0xff]
        %v1595 = vld [vmem:[%s2 + $0x20] sm:$0xff]
        %v1596 = vld [vmem:[%s2 + $0x28] sm:$0xff]
        %v1597 = vld [vmem:[%s2 + $0x30] sm:$0xff]
        %v1598 = vld [vmem:[%s2 + $0x38] sm:$0xff]
        %v1600 = vsel %vm1419, %v1591, 0
        %v1603 = vsel %vm1419, %v1592, 0
        %v1606 = vsel %vm1419, %v1593, 0
        %v1609 = vsel %vm1419, %v1594, 0
        %v1612 = vsel %vm1419, %v1595, 0
        %v1615 = vsel %vm1419, %v1596, 0
        %v1618 = vsel %vm1419, %v1597, 0
        %v1621 = vsel %vm1419, %v1598, 0
        %1623 = vmatprep.subr.mxu0 0.0
        %v1624 = vand.u32 %v1583, 4294901760
        %1625 = vmatpush1.msra.mxu0 %v1624
        %1626 = vmatprep.subr.mxu0 0.0
        %v1627 = vand.u32 %v1588, 4294901760
        %1628 = vmatpush1.msra.mxu0 %v1627
        %1629 = vmatprep.subr.mxu0 0.0
        %1630 = vmatpush1.msra.mxu0 0.0
        %1631 = vmatprep.subr.mxu0 0.0
        %1632 = vmatpush1.msra.mxu0 0.0
        %1633 = vmatprep.subr.mxu0 0.0
        %1634 = vmatpush1.msra.mxu0 0.0
        %1635 = vmatprep.subr.mxu0 0.0
        %1636 = vmatpush1.msra.mxu0 0.0
        %1637 = vmatprep.subr.mxu0 0.0
        %1638 = vmatpush1.msra.mxu0 0.0
        %1639 = vmatprep.subr.mxu0 0.0
        %1640 = vmatpush1.msra.mxu0 0.0
        %1641 = vmatprep.subr.mxu0 0.0
        %1642 = vmatpush1.msra.mxu0 0.0
        %1643 = vmatprep.subr.mxu0 0.0
        %1644 = vmatpush1.msra.mxu0 0.0
        %1645 = vmatprep.subr.mxu0 0.0
        %1646 = vmatpush1.msra.mxu0 0.0
        %1647 = vmatprep.subr.mxu0 0.0
        %1648 = vmatpush1.msra.mxu0 0.0
        %1649 = vmatprep.subr.mxu0 0.0
        %1650 = vmatpush1.msra.mxu0 0.0
        %1651 = vmatprep.subr.mxu0 0.0
        %1652 = vmatpush1.msra.mxu0 0.0
        %1653 = vmatprep.subr.mxu0 0.0
        %1654 = vmatpush1.msra.mxu0 0.0
        %1655 = vmatprep.subr.mxu0 0.0
        %1656 = vmatpush1.msra.mxu0 0.0
        %1657 = vmatprep.subr.mxu0 0.0
        %1658 = vmatpush1.msra.mxu0 0.0
        %1659 = vmatprep.subr.mxu0 0.0
        %1660 = vmatpush1.msra.mxu0 0.0
        %1661 = vmatprep.subr.mxu0 0.0
        %1662 = vmatpush1.msra.mxu0 0.0
        %1663 = vmatprep.subr.mxu0 0.0
        %1664 = vmatpush1.msra.mxu0 0.0
        %1665 = vmatprep.subr.mxu0 0.0
        %1666 = vmatpush1.msra.mxu0 0.0
        %1667 = vmatprep.subr.mxu0 0.0
        %1668 = vmatpush1.msra.mxu0 0.0
        %1669 = vmatprep.subr.mxu0 0.0
        %1670 = vmatpush1.msra.mxu0 0.0
        %1671 = vmatprep.subr.mxu0 0.0
        %1672 = vmatpush1.msra.mxu0 0.0
        %1673 = vmatprep.subr.mxu0 0.0
        %1674 = vmatpush1.msra.mxu0 0.0
        %1675 = vmatprep.subr.mxu0 0.0
        %1676 = vmatpush1.msra.mxu0 0.0
        %1677 = vmatprep.subr.mxu0 0.0
        %1678 = vmatpush1.msra.mxu0 0.0
        %1679 = vmatprep.subr.mxu0 0.0
        %1680 = vmatpush1.msra.mxu0 0.0
        %1681 = vmatprep.subr.mxu0 0.0
        %1682 = vmatpush1.msra.mxu0 0.0
        %1683 = vmatprep.subr.mxu0 0.0
        %1684 = vmatpush1.msra.mxu0 0.0
        %1685 = vmatprep.subr.mxu0 0.0
        %1686 = vmatpush1.msra.mxu0 0.0
        %1687 = vmatprep.subr.mxu0 0.0
        %1688 = vmatpush1.msra.mxu0 0.0
        %1689 = vmatprep.mubr.f32.mxu0 0.0
        %v1690 = vand.u32 %v1600, 4294901760
        %v1691 = vsub.f32 %v1600, %v1690
        %v1692 = vand.u32 %v1691, 4294901760
        %v1693 = vsub.f32 %v1691, %v1692
        %v1694 = vand.u32 %v1693, 4294901760
        %1695 = vmatmul.mubr.f32.gmra.mrb[0].mxu0 %v1694
        %v1696 = vpop.f32.mrb[0].mxu0
        %v1697 = vadd.f32 0.0, %v1696
        %v1698 = vpop.f32.mrb[0].mxu0
        %1699 = vmatprep.mubr.f32.mxu0 0.0
        %v1700 = vand.u32 %v1603, 4294901760
        %v1701 = vsub.f32 %v1603, %v1700
        %v1702 = vand.u32 %v1701, 4294901760
        %v1703 = vsub.f32 %v1701, %v1702
        %v1704 = vand.u32 %v1703, 4294901760
        %1705 = vmatmul.mubr.f32.gmra.mrb[0].mxu0 %v1704
        %v1706 = vpop.f32.mrb[0].mxu0
        %v1707 = vadd.f32 0.0, %v1706
        %v1708 = vpop.f32.mrb[0].mxu0
        %1709 = vmatprep.mubr.f32.mxu0 0.0
        %v1710 = vand.u32 %v1606, 4294901760
        %v1711 = vsub.f32 %v1606, %v1710
        %v1712 = vand.u32 %v1711, 4294901760
        %v1713 = vsub.f32 %v1711, %v1712
        %v1714 = vand.u32 %v1713, 4294901760
        %1715 = vmatmul.mubr.f32.gmra.mrb[0].mxu0 %v1714
        %v1716 = vpop.f32.mrb[0].mxu0
        %v1717 = vadd.f32 0.0, %v1716
        %v1718 = vpop.f32.mrb[0].mxu0
        %1719 = vmatprep.mubr.f32.mxu0 0.0
        %v1720 = vand.u32 %v1609, 4294901760
        %v1721 = vsub.f32 %v1609, %v1720
        %v1722 = vand.u32 %v1721, 4294901760
        %v1723 = vsub.f32 %v1721, %v1722
        %v1724 = vand.u32 %v1723, 4294901760
        %1725 = vmatmul.mubr.f32.gmra.mrb[0].mxu0 %v1724
        %v1726 = vpop.f32.mrb[0].mxu0
        %v1727 = vadd.f32 0.0, %v1726
        %v1728 = vpop.f32.mrb[0].mxu0
        %1729 = vmatprep.mubr.f32.mxu0 0.0
        %v1730 = vand.u32 %v1612, 4294901760
        %v1731 = vsub.f32 %v1612, %v1730
        %v1732 = vand.u32 %v1731, 4294901760
        %v1733 = vsub.f32 %v1731, %v1732
        %v1734 = vand.u32 %v1733, 4294901760
        %1735 = vmatmul.mubr.f32.gmra.mrb[0].mxu0 %v1734
        %v1736 = vpop.f32.mrb[0].mxu0
        %v1737 = vadd.f32 0.0, %v1736
        %v1738 = vpop.f32.mrb[0].mxu0
        %1739 = vmatprep.mubr.f32.mxu0 0.0
        %v1740 = vand.u32 %v1615, 4294901760
        %v1741 = vsub.f32 %v1615, %v1740
        %v1742 = vand.u32 %v1741, 4294901760
        %v1743 = vsub.f32 %v1741, %v1742
        %v1744 = vand.u32 %v1743, 4294901760
        %1745 = vmatmul.mubr.f32.gmra.mrb[0].mxu0 %v1744
        %v1746 = vpop.f32.mrb[0].mxu0
        %v1747 = vadd.f32 0.0, %v1746
        %v1748 = vpop.f32.mrb[0].mxu0
        %1749 = vmatprep.mubr.f32.mxu0 0.0
        %v1750 = vand.u32 %v1618, 4294901760
        %v1751 = vsub.f32 %v1618, %v1750
        %v1752 = vand.u32 %v1751, 4294901760
        %v1753 = vsub.f32 %v1751, %v1752
        %v1754 = vand.u32 %v1753, 4294901760
        %1755 = vmatmul.mubr.f32.gmra.mrb[0].mxu0 %v1754
        %v1756 = vpop.f32.mrb[0].mxu0
        %v1757 = vadd.f32 0.0, %v1756
        %v1758 = vpop.f32.mrb[0].mxu0
        %1759 = vmatprep.mubr.f32.mxu0 0.0
        %v1760 = vand.u32 %v1621, 4294901760
        %v1761 = vsub.f32 %v1621, %v1760
        %v1762 = vand.u32 %v1761, 4294901760
        %v1763 = vsub.f32 %v1761, %v1762
        %v1764 = vand.u32 %v1763, 4294901760
        %1765 = vmatmul.mubr.f32.gmra.mrb[0].mxu0 %v1764
        %v1766 = vpop.f32.mrb[0].mxu0
        %v1767 = vadd.f32 0.0, %v1766
        %v1768 = vpop.f32.mrb[0].mxu0
        %1769 = vdwg.mxu0
        %1770 = vmatprep.subr.mxu0 0.0
        %v1771 = vand.u32 %v1583, 4294901760
        %v1772 = vsub.f32 %v1583, %v1771
        %v1773 = vand.u32 %v1772, 4294901760
        %v1774 = vsub.f32 %v1772, %v1773
        %v1775 = vand.u32 %v1774, 4294901760
        %1776 = vmatpush1.msra.mxu0 %v1775
        %1777 = vmatprep.subr.mxu0 0.0
        %v1778 = vand.u32 %v1588, 4294901760
        %v1779 = vsub.f32 %v1588, %v1778
        %v1780 = vand.u32 %v1779, 4294901760
        %v1781 = vsub.f32 %v1779, %v1780
        %v1782 = vand.u32 %v1781, 4294901760
        %1783 = vmatpush1.msra.mxu0 %v1782
        %1784 = vmatprep.subr.mxu0 0.0
        %1785 = vmatpush1.msra.mxu0 0.0
        %1786 = vmatprep.subr.mxu0 0.0
        %1787 = vmatpush1.msra.mxu0 0.0
        %1788 = vmatprep.subr.mxu0 0.0
        %1789 = vmatpush1.msra.mxu0 0.0
        %1790 = vmatprep.subr.mxu0 0.0
        %1791 = vmatpush1.msra.mxu0 0.0
        %1792 = vmatprep.subr.mxu0 0.0
        %1793 = vmatpush1.msra.mxu0 0.0
        %1794 = vmatprep.subr.mxu0 0.0
        %1795 = vmatpush1.msra.mxu0 0.0
        %1796 = vmatprep.subr.mxu0 0.0
        %1797 = vmatpush1.msra.mxu0 0.0
        %1798 = vmatprep.subr.mxu0 0.0
        %1799 = vmatpush1.msra.mxu0 0.0
        %1800 = vmatprep.subr.mxu0 0.0
        %1801 = vmatpush1.msra.mxu0 0.0
        %1802 = vmatprep.subr.mxu0 0.0
        %1803 = vmatpush1.msra.mxu0 0.0
        %1804 = vmatprep.subr.mxu0 0.0
        %1805 = vmatpush1.msra.mxu0 0.0
        %1806 = vmatprep.subr.mxu0 0.0
        %1807 = vmatpush1.msra.mxu0 0.0
        %1808 = vmatprep.subr.mxu0 0.0
        %1809 = vmatpush1.msra.mxu0 0.0
        %1810 = vmatprep.subr.mxu0 0.0
        %1811 = vmatpush1.msra.mxu0 0.0
        %1812 = vmatprep.subr.mxu0 0.0
        %1813 = vmatpush1.msra.mxu0 0.0
        %1814 = vmatprep.subr.mxu0 0.0
        %1815 = vmatpush1.msra.mxu0 0.0
        %1816 = vmatprep.subr.mxu0 0.0
        %1817 = vmatpush1.msra.mxu0 0.0
        %1818 = vmatprep.subr.mxu0 0.0
        %1819 = vmatpush1.msra.mxu0 0.0
        %1820 = vmatprep.subr.mxu0 0.0
        %1821 = vmatpush1.msra.mxu0 0.0
        %1822 = vmatprep.subr.mxu0 0.0
        %1823 = vmatpush1.msra.mxu0 0.0
        %1824 = vmatprep.subr.mxu0 0.0
        %1825 = vmatpush1.msra.mxu0 0.0
        %1826 = vmatprep.subr.mxu0 0.0
        %1827 = vmatpush1.msra.mxu0 0.0
        %1828 = vmatprep.subr.mxu0 0.0
        %1829 = vmatpush1.msra.mxu0 0.0
        %1830 = vmatprep.subr.mxu0 0.0
        %1831 = vmatpush1.msra.mxu0 0.0
        %1832 = vmatprep.subr.mxu0 0.0
        %1833 = vmatpush1.msra.mxu0 0.0
        %1834 = vmatprep.subr.mxu0 0.0
        %1835 = vmatpush1.msra.mxu0 0.0
        %1836 = vmatprep.subr.mxu0 0.0
        %1837 = vmatpush1.msra.mxu0 0.0
        %1838 = vmatprep.subr.mxu0 0.0
        %1839 = vmatpush1.msra.mxu0 0.0
        %1840 = vmatprep.subr.mxu0 0.0
        %1841 = vmatpush1.msra.mxu0 0.0
        %1842 = vmatprep.subr.mxu0 0.0
        %1843 = vmatpush1.msra.mxu0 0.0
        %1844 = vmatprep.mubr.f32.mxu0 0.0
        %v1845 = vand.u32 %v1600, 4294901760
        %1846 = vmatmul.mubr.f32.gmra.mrb[0].mxu0 %v1845
        %v1847 = vpop.f32.mrb[0].mxu0
        %v1848 = vadd.f32 %v1697, %v1847
        %v1849 = vpop.f32.mrb[0].mxu0
        %1850 = vmatprep.mubr.f32.mxu0 0.0
        %v1851 = vand.u32 %v1603, 4294901760
        %1852 = vmatmul.mubr.f32.gmra.mrb[0].mxu0 %v1851
        %v1853 = vpop.f32.mrb[0].mxu0
        %v1854 = vadd.f32 %v1707, %v1853
        %v1855 = vpop.f32.mrb[0].mxu0
        %1856 = vmatprep.mubr.f32.mxu0 0.0
        %v1857 = vand.u32 %v1606, 4294901760
        %1858 = vmatmul.mubr.f32.gmra.mrb[0].mxu0 %v1857
        %v1859 = vpop.f32.mrb[0].mxu0
        %v1860 = vadd.f32 %v1717, %v1859
        %v1861 = vpop.f32.mrb[0].mxu0
        %1862 = vmatprep.mubr.f32.mxu0 0.0
        %v1863 = vand.u32 %v1609, 4294901760
        %1864 = vmatmul.mubr.f32.gmra.mrb[0].mxu0 %v1863
        %v1865 = vpop.f32.mrb[0].mxu0
        %v1866 = vadd.f32 %v1727, %v1865
        %v1867 = vpop.f32.mrb[0].mxu0
        %1868 = vmatprep.mubr.f32.mxu0 0.0
        %v1869 = vand.u32 %v1612, 4294901760
        %1870 = vmatmul.mubr.f32.gmra.mrb[0].mxu0 %v1869
        %v1871 = vpop.f32.mrb[0].mxu0
        %v1872 = vadd.f32 %v1737, %v1871
        %v1873 = vpop.f32.mrb[0].mxu0
        %1874 = vmatprep.mubr.f32.mxu0 0.0
        %v1875 = vand.u32 %v1615, 4294901760
        %1876 = vmatmul.mubr.f32.gmra.mrb[0].mxu0 %v1875
        %v1877 = vpop.f32.mrb[0].mxu0
        %v1878 = vadd.f32 %v1747, %v1877
        %v1879 = vpop.f32.mrb[0].mxu0
        %1880 = vmatprep.mubr.f32.mxu0 0.0
        %v1881 = vand.u32 %v1618, 4294901760
        %1882 = vmatmul.mubr.f32.gmra.mrb[0].mxu0 %v1881
        %v1883 = vpop.f32.mrb[0].mxu0
        %v1884 = vadd.f32 %v1757, %v1883
        %v1885 = vpop.f32.mrb[0].mxu0
        %1886 = vmatprep.mubr.f32.mxu0 0.0
        %v1887 = vand.u32 %v1621, 4294901760
        %1888 = vmatmul.mubr.f32.gmra.mrb[0].mxu0 %v1887
        %v1889 = vpop.f32.mrb[0].mxu0
        %v1890 = vadd.f32 %v1767, %v1889
        %v1891 = vpop.f32.mrb[0].mxu0
        %1892 = vdwg.mxu0
        %1893 = vmatprep.subr.mxu0 0.0
        %v1894 = vand.u32 %v1583, 4294901760
        %v1895 = vsub.f32 %v1583, %v1894
        %1896 = vmatpush1.msra.mxu0 %v1895
        %1897 = vmatprep.subr.mxu0 0.0
        %v1898 = vand.u32 %v1588, 4294901760
        %v1899 = vsub.f32 %v1588, %v1898
        %1900 = vmatpush1.msra.mxu0 %v1899
        %1901 = vmatprep.subr.mxu0 0.0
        %1902 = vmatpush1.msra.mxu0 0.0
        %1903 = vmatprep.subr.mxu0 0.0
        %1904 = vmatpush1.msra.mxu0 0.0
        %1905 = vmatprep.subr.mxu0 0.0
        %1906 = vmatpush1.msra.mxu0 0.0
        %1907 = vmatprep.subr.mxu0 0.0
        %1908 = vmatpush1.msra.mxu0 0.0
        %1909 = vmatprep.subr.mxu0 0.0
        %1910 = vmatpush1.msra.mxu0 0.0
        %1911 = vmatprep.subr.mxu0 0.0
        %1912 = vmatpush1.msra.mxu0 0.0
        %1913 = vmatprep.subr.mxu0 0.0
        %1914 = vmatpush1.msra.mxu0 0.0
        %1915 = vmatprep.subr.mxu0 0.0
        %1916 = vmatpush1.msra.mxu0 0.0
        %1917 = vmatprep.subr.mxu0 0.0
        %1918 = vmatpush1.msra.mxu0 0.0
        %1919 = vmatprep.subr.mxu0 0.0
        %1920 = vmatpush1.msra.mxu0 0.0
        %1921 = vmatprep.subr.mxu0 0.0
        %1922 = vmatpush1.msra.mxu0 0.0
        %1923 = vmatprep.subr.mxu0 0.0
        %1924 = vmatpush1.msra.mxu0 0.0
        %1925 = vmatprep.subr.mxu0 0.0
        %1926 = vmatpush1.msra.mxu0 0.0
        %1927 = vmatprep.subr.mxu0 0.0
        %1928 = vmatpush1.msra.mxu0 0.0
        %1929 = vmatprep.subr.mxu0 0.0
        %1930 = vmatpush1.msra.mxu0 0.0
        %1931 = vmatprep.subr.mxu0 0.0
        %1932 = vmatpush1.msra.mxu0 0.0
        %1933 = vmatprep.subr.mxu0 0.0
        %1934 = vmatpush1.msra.mxu0 0.0
        %1935 = vmatprep.subr.mxu0 0.0
        %1936 = vmatpush1.msra.mxu0 0.0
        %1937 = vmatprep.subr.mxu0 0.0
        %1938 = vmatpush1.msra.mxu0 0.0
        %1939 = vmatprep.subr.mxu0 0.0
        %1940 = vmatpush1.msra.mxu0 0.0
        %1941 = vmatprep.subr.mxu0 0.0
        %1942 = vmatpush1.msra.mxu0 0.0
        %1943 = vmatprep.subr.mxu0 0.0
        %1944 = vmatpush1.msra.mxu0 0.0
        %1945 = vmatprep.subr.mxu0 0.0
        %1946 = vmatpush1.msra.mxu0 0.0
        %1947 = vmatprep.subr.mxu0 0.0
        %1948 = vmatpush1.msra.mxu0 0.0
        %1949 = vmatprep.subr.mxu0 0.0
        %1950 = vmatpush1.msra.mxu0 0.0
        %1951 = vmatprep.subr.mxu0 0.0
        %1952 = vmatpush1.msra.mxu0 0.0
        %1953 = vmatprep.subr.mxu0 0.0
        %1954 = vmatpush1.msra.mxu0 0.0
        %1955 = vmatprep.subr.mxu0 0.0
        %1956 = vmatpush1.msra.mxu0 0.0
        %1957 = vmatprep.subr.mxu0 0.0
        %1958 = vmatpush1.msra.mxu0 0.0
        %1959 = vmatprep.subr.mxu0 0.0
        %1960 = vmatpush1.msra.mxu0 0.0
        %1961 = vmatprep.mubr.f32.mxu0 0.0
        %v1962 = vand.u32 %v1600, 4294901760
        %v1963 = vsub.f32 %v1600, %v1962
        %1964 = vmatmul.mubr.f32.gmra.mrb[0].mxu0 %v1963
        %v1965 = vpop.f32.mrb[0].mxu0
        %v1966 = vadd.f32 %v1848, %v1965
        %v1967 = vpop.f32.mrb[0].mxu0
        %1968 = vmatprep.mubr.f32.mxu0 0.0
        %v1969 = vand.u32 %v1603, 4294901760
        %v1970 = vsub.f32 %v1603, %v1969
        %1971 = vmatmul.mubr.f32.gmra.mrb[0].mxu0 %v1970
        %v1972 = vpop.f32.mrb[0].mxu0
        %v1973 = vadd.f32 %v1854, %v1972
        %v1974 = vpop.f32.mrb[0].mxu0
        %1975 = vmatprep.mubr.f32.mxu0 0.0
        %v1976 = vand.u32 %v1606, 4294901760
        %v1977 = vsub.f32 %v1606, %v1976
        %1978 = vmatmul.mubr.f32.gmra.mrb[0].mxu0 %v1977
        %v1979 = vpop.f32.mrb[0].mxu0
        %v1980 = vadd.f32 %v1860, %v1979
        %v1981 = vpop.f32.mrb[0].mxu0
        %1982 = vmatprep.mubr.f32.mxu0 0.0
        %v1983 = vand.u32 %v1609, 4294901760
        %v1984 = vsub.f32 %v1609, %v1983
        %1985 = vmatmul.mubr.f32.gmra.mrb[0].mxu0 %v1984
        %v1986 = vpop.f32.mrb[0].mxu0
        %v1987 = vadd.f32 %v1866, %v1986
        %v1988 = vpop.f32.mrb[0].mxu0
        %1989 = vmatprep.mubr.f32.mxu0 0.0
        %v1990 = vand.u32 %v1612, 4294901760
        %v1991 = vsub.f32 %v1612, %v1990
        %1992 = vmatmul.mubr.f32.gmra.mrb[0].mxu0 %v1991
        %v1993 = vpop.f32.mrb[0].mxu0
        %v1994 = vadd.f32 %v1872, %v1993
        %v1995 = vpop.f32.mrb[0].mxu0
        %1996 = vmatprep.mubr.f32.mxu0 0.0
        %v1997 = vand.u32 %v1615, 4294901760
        %v1998 = vsub.f32 %v1615, %v1997
        %1999 = vmatmul.mubr.f32.gmra.mrb[0].mxu0 %v1998
        %v2000 = vpop.f32.mrb[0].mxu0
        %v2001 = vadd.f32 %v1878, %v2000
        %v2002 = vpop.f32.mrb[0].mxu0
        %2003 = vmatprep.mubr.f32.mxu0 0.0
        %v2004 = vand.u32 %v1618, 4294901760
        %v2005 = vsub.f32 %v1618, %v2004
        %2006 = vmatmul.mubr.f32.gmra.mrb[0].mxu0 %v2005
        %v2007 = vpop.f32.mrb[0].mxu0
        %v2008 = vadd.f32 %v1884, %v2007
        %v2009 = vpop.f32.mrb[0].mxu0
        %2010 = vmatprep.mubr.f32.mxu0 0.0
        %v2011 = vand.u32 %v1621, 4294901760
        %v2012 = vsub.f32 %v1621, %v2011
        %2013 = vmatmul.mubr.f32.gmra.mrb[0].mxu0 %v2012
        %v2014 = vpop.f32.mrb[0].mxu0
        %v2015 = vadd.f32 %v1890, %v2014
        %v2016 = vpop.f32.mrb[0].mxu0
        %2017 = vdwg.mxu0
        %2018 = vmatprep.subr.mxu0 0.0
        %v2019 = vand.u32 %v1583, 4294901760
        %2020 = vmatpush1.msra.mxu0 %v2019
        %2021 = vmatprep.subr.mxu0 0.0
        %v2022 = vand.u32 %v1588, 4294901760
        %2023 = vmatpush1.msra.mxu0 %v2022
        %2024 = vmatprep.subr.mxu0 0.0
        %2025 = vmatpush1.msra.mxu0 0.0
        %2026 = vmatprep.subr.mxu0 0.0
        %2027 = vmatpush1.msra.mxu0 0.0
        %2028 = vmatprep.subr.mxu0 0.0
        %2029 = vmatpush1.msra.mxu0 0.0
        %2030 = vmatprep.subr.mxu0 0.0
        %2031 = vmatpush1.msra.mxu0 0.0
        %2032 = vmatprep.subr.mxu0 0.0
        %2033 = vmatpush1.msra.mxu0 0.0
        %2034 = vmatprep.subr.mxu0 0.0
        %2035 = vmatpush1.msra.mxu0 0.0
        %2036 = vmatprep.subr.mxu0 0.0
        %2037 = vmatpush1.msra.mxu0 0.0
        %2038 = vmatprep.subr.mxu0 0.0
        %2039 = vmatpush1.msra.mxu0 0.0
        %2040 = vmatprep.subr.mxu0 0.0
        %2041 = vmatpush1.msra.mxu0 0.0
        %2042 = vmatprep.subr.mxu0 0.0
        %2043 = vmatpush1.msra.mxu0 0.0
        %2044 = vmatprep.subr.mxu0 0.0
        %2045 = vmatpush1.msra.mxu0 0.0
        %2046 = vmatprep.subr.mxu0 0.0
        %2047 = vmatpush1.msra.mxu0 0.0
        %2048 = vmatprep.subr.mxu0 0.0
        %2049 = vmatpush1.msra.mxu0 0.0
        %2050 = vmatprep.subr.mxu0 0.0
        %2051 = vmatpush1.msra.mxu0 0.0
        %2052 = vmatprep.subr.mxu0 0.0
        %2053 = vmatpush1.msra.mxu0 0.0
        %2054 = vmatprep.subr.mxu0 0.0
        %2055 = vmatpush1.msra.mxu0 0.0
        %2056 = vmatprep.subr.mxu0 0.0
        %2057 = vmatpush1.msra.mxu0 0.0
        %2058 = vmatprep.subr.mxu0 0.0
        %2059 = vmatpush1.msra.mxu0 0.0
        %2060 = vmatprep.subr.mxu0 0.0
        %2061 = vmatpush1.msra.mxu0 0.0
        %2062 = vmatprep.subr.mxu0 0.0
        %2063 = vmatpush1.msra.mxu0 0.0
        %2064 = vmatprep.subr.mxu0 0.0
        %2065 = vmatpush1.msra.mxu0 0.0
        %2066 = vmatprep.subr.mxu0 0.0
        %2067 = vmatpush1.msra.mxu0 0.0
        %2068 = vmatprep.subr.mxu0 0.0
        %2069 = vmatpush1.msra.mxu0 0.0
        %2070 = vmatprep.subr.mxu0 0.0
        %2071 = vmatpush1.msra.mxu0 0.0
        %2072 = vmatprep.subr.mxu0 0.0
        %2073 = vmatpush1.msra.mxu0 0.0
        %2074 = vmatprep.subr.mxu0 0.0
        %2075 = vmatpush1.msra.mxu0 0.0
        %2076 = vmatprep.subr.mxu0 0.0
        %2077 = vmatpush1.msra.mxu0 0.0
        %2078 = vmatprep.subr.mxu0 0.0
        %2079 = vmatpush1.msra.mxu0 0.0
        %2080 = vmatprep.subr.mxu0 0.0
        %2081 = vmatpush1.msra.mxu0 0.0
        %2082 = vmatprep.subr.mxu0 0.0
        %2083 = vmatpush1.msra.mxu0 0.0
        %2084 = vmatprep.mubr.f32.mxu0 0.0
        %v2085 = vand.u32 %v1600, 4294901760
        %v2086 = vsub.f32 %v1600, %v2085
        %v2087 = vand.u32 %v2086, 4294901760
        %2088 = vmatmul.mubr.f32.gmra.mrb[0].mxu0 %v2087
        %v2089 = vpop.f32.mrb[0].mxu0
        %v2090 = vadd.f32 %v1966, %v2089
        %v2091 = vpop.f32.mrb[0].mxu0
        %2092 = vmatprep.mubr.f32.mxu0 0.0
        %v2093 = vand.u32 %v1603, 4294901760
        %v2094 = vsub.f32 %v1603, %v2093
        %v2095 = vand.u32 %v2094, 4294901760
        %2096 = vmatmul.mubr.f32.gmra.mrb[0].mxu0 %v2095
        %v2097 = vpop.f32.mrb[0].mxu0
        %v2098 = vadd.f32 %v1973, %v2097
        %v2099 = vpop.f32.mrb[0].mxu0
        %2100 = vmatprep.mubr.f32.mxu0 0.0
        %v2101 = vand.u32 %v1606, 4294901760
        %v2102 = vsub.f32 %v1606, %v2101
        %v2103 = vand.u32 %v2102, 4294901760
        %2104 = vmatmul.mubr.f32.gmra.mrb[0].mxu0 %v2103
        %v2105 = vpop.f32.mrb[0].mxu0
        %v2106 = vadd.f32 %v1980, %v2105
        %v2107 = vpop.f32.mrb[0].mxu0
        %2108 = vmatprep.mubr.f32.mxu0 0.0
        %v2109 = vand.u32 %v1609, 4294901760
        %v2110 = vsub.f32 %v1609, %v2109
        %v2111 = vand.u32 %v2110, 4294901760
        %2112 = vmatmul.mubr.f32.gmra.mrb[0].mxu0 %v2111
        %v2113 = vpop.f32.mrb[0].mxu0
        %v2114 = vadd.f32 %v1987, %v2113
        %v2115 = vpop.f32.mrb[0].mxu0
        %2116 = vmatprep.mubr.f32.mxu0 0.0
        %v2117 = vand.u32 %v1612, 4294901760
        %v2118 = vsub.f32 %v1612, %v2117
        %v2119 = vand.u32 %v2118, 4294901760
        %2120 = vmatmul.mubr.f32.gmra.mrb[0].mxu0 %v2119
        %v2121 = vpop.f32.mrb[0].mxu0
        %v2122 = vadd.f32 %v1994, %v2121
        %v2123 = vpop.f32.mrb[0].mxu0
        %2124 = vmatprep.mubr.f32.mxu0 0.0
        %v2125 = vand.u32 %v1615, 4294901760
        %v2126 = vsub.f32 %v1615, %v2125
        %v2127 = vand.u32 %v2126, 4294901760
        %2128 = vmatmul.mubr.f32.gmra.mrb[0].mxu0 %v2127
        %v2129 = vpop.f32.mrb[0].mxu0
        %v2130 = vadd.f32 %v2001, %v2129
        %v2131 = vpop.f32.mrb[0].mxu0
        %2132 = vmatprep.mubr.f32.mxu0 0.0
        %v2133 = vand.u32 %v1618, 4294901760
        %v2134 = vsub.f32 %v1618, %v2133
        %v2135 = vand.u32 %v2134, 4294901760
        %2136 = vmatmul.mubr.f32.gmra.mrb[0].mxu0 %v2135
        %v2137 = vpop.f32.mrb[0].mxu0
        %v2138 = vadd.f32 %v2008, %v2137
        %v2139 = vpop.f32.mrb[0].mxu0
        %2140 = vmatprep.mubr.f32.mxu0 0.0
        %v2141 = vand.u32 %v1621, 4294901760
        %v2142 = vsub.f32 %v1621, %v2141
        %v2143 = vand.u32 %v2142, 4294901760
        %2144 = vmatmul.mubr.f32.gmra.mrb[0].mxu0 %v2143
        %v2145 = vpop.f32.mrb[0].mxu0
        %v2146 = vadd.f32 %v2015, %v2145
        %v2147 = vpop.f32.mrb[0].mxu0
        %2148 = vdwg.mxu0
        %2149 = vmatprep.subr.mxu0 0.0
        %v2150 = vand.u32 %v1583, 4294901760
        %v2151 = vsub.f32 %v1583, %v2150
        %v2152 = vand.u32 %v2151, 4294901760
        %2153 = vmatpush1.msra.mxu0 %v2152
        %2154 = vmatprep.subr.mxu0 0.0
        %v2155 = vand.u32 %v1588, 4294901760
        %v2156 = vsub.f32 %v1588, %v2155
        %v2157 = vand.u32 %v2156, 4294901760
        %2158 = vmatpush1.msra.mxu0 %v2157
        %2159 = vmatprep.subr.mxu0 0.0
        %2160 = vmatpush1.msra.mxu0 0.0
        %2161 = vmatprep.subr.mxu0 0.0
        %2162 = vmatpush1.msra.mxu0 0.0
        %2163 = vmatprep.subr.mxu0 0.0
        %2164 = vmatpush1.msra.mxu0 0.0
        %2165 = vmatprep.subr.mxu0 0.0
        %2166 = vmatpush1.msra.mxu0 0.0
        %2167 = vmatprep.subr.mxu0 0.0
        %2168 = vmatpush1.msra.mxu0 0.0
        %2169 = vmatprep.subr.mxu0 0.0
        %2170 = vmatpush1.msra.mxu0 0.0
        %2171 = vmatprep.subr.mxu0 0.0
        %2172 = vmatpush1.msra.mxu0 0.0
        %2173 = vmatprep.subr.mxu0 0.0
        %2174 = vmatpush1.msra.mxu0 0.0
        %2175 = vmatprep.subr.mxu0 0.0
        %2176 = vmatpush1.msra.mxu0 0.0
        %2177 = vmatprep.subr.mxu0 0.0
        %2178 = vmatpush1.msra.mxu0 0.0
        %2179 = vmatprep.subr.mxu0 0.0
        %2180 = vmatpush1.msra.mxu0 0.0
        %2181 = vmatprep.subr.mxu0 0.0
        %2182 = vmatpush1.msra.mxu0 0.0
        %2183 = vmatprep.subr.mxu0 0.0
        %2184 = vmatpush1.msra.mxu0 0.0
        %2185 = vmatprep.subr.mxu0 0.0
        %2186 = vmatpush1.msra.mxu0 0.0
        %2187 = vmatprep.subr.mxu0 0.0
        %2188 = vmatpush1.msra.mxu0 0.0
        %2189 = vmatprep.subr.mxu0 0.0
        %2190 = vmatpush1.msra.mxu0 0.0
        %2191 = vmatprep.subr.mxu0 0.0
        %2192 = vmatpush1.msra.mxu0 0.0
        %2193 = vmatprep.subr.mxu0 0.0
        %2194 = vmatpush1.msra.mxu0 0.0
        %2195 = vmatprep.subr.mxu0 0.0
        %2196 = vmatpush1.msra.mxu0 0.0
        %2197 = vmatprep.subr.mxu0 0.0
        %2198 = vmatpush1.msra.mxu0 0.0
        %2199 = vmatprep.subr.mxu0 0.0
        %2200 = vmatpush1.msra.mxu0 0.0
        %2201 = vmatprep.subr.mxu0 0.0
        %2202 = vmatpush1.msra.mxu0 0.0
        %2203 = vmatprep.subr.mxu0 0.0
        %2204 = vmatpush1.msra.mxu0 0.0
        %2205 = vmatprep.subr.mxu0 0.0
        %2206 = vmatpush1.msra.mxu0 0.0
        %2207 = vmatprep.subr.mxu0 0.0
        %2208 = vmatpush1.msra.mxu0 0.0
        %2209 = vmatprep.subr.mxu0 0.0
        %2210 = vmatpush1.msra.mxu0 0.0
        %2211 = vmatprep.subr.mxu0 0.0
        %2212 = vmatpush1.msra.mxu0 0.0
        %2213 = vmatprep.subr.mxu0 0.0
        %2214 = vmatpush1.msra.mxu0 0.0
        %2215 = vmatprep.subr.mxu0 0.0
        %2216 = vmatpush1.msra.mxu0 0.0
        %2217 = vmatprep.subr.mxu0 0.0
        %2218 = vmatpush1.msra.mxu0 0.0
        %2219 = vmatprep.mubr.f32.mxu0 0.0
        %v2220 = vand.u32 %v1600, 4294901760
        %2221 = vmatmul.mubr.f32.gmra.mrb[0].mxu0 %v2220
        %v2222 = vpop.f32.mrb[0].mxu0
        %v2223 = vadd.f32 %v2090, %v2222
        %v2224 = vpop.f32.mrb[0].mxu0
        %2225 = vmatprep.mubr.f32.mxu0 0.0
        %v2226 = vand.u32 %v1603, 4294901760
        %2227 = vmatmul.mubr.f32.gmra.mrb[0].mxu0 %v2226
        %v2228 = vpop.f32.mrb[0].mxu0
        %v2229 = vadd.f32 %v2098, %v2228
        %v2230 = vpop.f32.mrb[0].mxu0
        %2231 = vmatprep.mubr.f32.mxu0 0.0
        %v2232 = vand.u32 %v1606, 4294901760
        %2233 = vmatmul.mubr.f32.gmra.mrb[0].mxu0 %v2232
        %v2234 = vpop.f32.mrb[0].mxu0
        %v2235 = vadd.f32 %v2106, %v2234
        %v2236 = vpop.f32.mrb[0].mxu0
        %2237 = vmatprep.mubr.f32.mxu0 0.0
        %v2238 = vand.u32 %v1609, 4294901760
        %2239 = vmatmul.mubr.f32.gmra.mrb[0].mxu0 %v2238
        %v2240 = vpop.f32.mrb[0].mxu0
        %v2241 = vadd.f32 %v2114, %v2240
        %v2242 = vpop.f32.mrb[0].mxu0
        %2243 = vmatprep.mubr.f32.mxu0 0.0
        %v2244 = vand.u32 %v1612, 4294901760
        %2245 = vmatmul.mubr.f32.gmra.mrb[0].mxu0 %v2244
        %v2246 = vpop.f32.mrb[0].mxu0
        %v2247 = vadd.f32 %v2122, %v2246
        %v2248 = vpop.f32.mrb[0].mxu0
        %2249 = vmatprep.mubr.f32.mxu0 0.0
        %v2250 = vand.u32 %v1615, 4294901760
        %2251 = vmatmul.mubr.f32.gmra.mrb[0].mxu0 %v2250
        %v2252 = vpop.f32.mrb[0].mxu0
        %v2253 = vadd.f32 %v2130, %v2252
        %v2254 = vpop.f32.mrb[0].mxu0
        %2255 = vmatprep.mubr.f32.mxu0 0.0
        %v2256 = vand.u32 %v1618, 4294901760
        %2257 = vmatmul.mubr.f32.gmra.mrb[0].mxu0 %v2256
        %v2258 = vpop.f32.mrb[0].mxu0
        %v2259 = vadd.f32 %v2138, %v2258
        %v2260 = vpop.f32.mrb[0].mxu0
        %2261 = vmatprep.mubr.f32.mxu0 0.0
        %v2262 = vand.u32 %v1621, 4294901760
        %2263 = vmatmul.mubr.f32.gmra.mrb[0].mxu0 %v2262
        %v2264 = vpop.f32.mrb[0].mxu0
        %v2265 = vadd.f32 %v2146, %v2264
        %v2266 = vpop.f32.mrb[0].mxu0
        %2267 = vdwg.mxu0
        %2268 = vmatprep.subr.mxu0 0.0
        %v2269 = vand.u32 %v1583, 4294901760
        %2270 = vmatpush1.msra.mxu0 %v2269
        %2271 = vmatprep.subr.mxu0 0.0
        %v2272 = vand.u32 %v1588, 4294901760
        %2273 = vmatpush1.msra.mxu0 %v2272
        %2274 = vmatprep.subr.mxu0 0.0
        %2275 = vmatpush1.msra.mxu0 0.0
        %2276 = vmatprep.subr.mxu0 0.0
        %2277 = vmatpush1.msra.mxu0 0.0
        %2278 = vmatprep.subr.mxu0 0.0
        %2279 = vmatpush1.msra.mxu0 0.0
        %2280 = vmatprep.subr.mxu0 0.0
        %2281 = vmatpush1.msra.mxu0 0.0
        %2282 = vmatprep.subr.mxu0 0.0
        %2283 = vmatpush1.msra.mxu0 0.0
        %2284 = vmatprep.subr.mxu0 0.0
        %2285 = vmatpush1.msra.mxu0 0.0
        %2286 = vmatprep.subr.mxu0 0.0
        %2287 = vmatpush1.msra.mxu0 0.0
        %2288 = vmatprep.subr.mxu0 0.0
        %2289 = vmatpush1.msra.mxu0 0.0
        %2290 = vmatprep.subr.mxu0 0.0
        %2291 = vmatpush1.msra.mxu0 0.0
        %2292 = vmatprep.subr.mxu0 0.0
        %2293 = vmatpush1.msra.mxu0 0.0
        %2294 = vmatprep.subr.mxu0 0.0
        %2295 = vmatpush1.msra.mxu0 0.0
        %2296 = vmatprep.subr.mxu0 0.0
        %2297 = vmatpush1.msra.mxu0 0.0
        %2298 = vmatprep.subr.mxu0 0.0
        %2299 = vmatpush1.msra.mxu0 0.0
        %2300 = vmatprep.subr.mxu0 0.0
        %2301 = vmatpush1.msra.mxu0 0.0
        %2302 = vmatprep.subr.mxu0 0.0
        %2303 = vmatpush1.msra.mxu0 0.0
        %2304 = vmatprep.subr.mxu0 0.0
        %2305 = vmatpush1.msra.mxu0 0.0
        %2306 = vmatprep.subr.mxu0 0.0
        %2307 = vmatpush1.msra.mxu0 0.0
        %2308 = vmatprep.subr.mxu0 0.0
        %2309 = vmatpush1.msra.mxu0 0.0
        %2310 = vmatprep.subr.mxu0 0.0
        %2311 = vmatpush1.msra.mxu0 0.0
        %2312 = vmatprep.subr.mxu0 0.0
        %2313 = vmatpush1.msra.mxu0 0.0
        %2314 = vmatprep.subr.mxu0 0.0
        %2315 = vmatpush1.msra.mxu0 0.0
        %2316 = vmatprep.subr.mxu0 0.0
        %2317 = vmatpush1.msra.mxu0 0.0
        %2318 = vmatprep.subr.mxu0 0.0
        %2319 = vmatpush1.msra.mxu0 0.0
        %2320 = vmatprep.subr.mxu0 0.0
        %2321 = vmatpush1.msra.mxu0 0.0
        %2322 = vmatprep.subr.mxu0 0.0
        %2323 = vmatpush1.msra.mxu0 0.0
        %2324 = vmatprep.subr.mxu0 0.0
        %2325 = vmatpush1.msra.mxu0 0.0
        %2326 = vmatprep.subr.mxu0 0.0
        %2327 = vmatpush1.msra.mxu0 0.0
        %2328 = vmatprep.subr.mxu0 0.0
        %2329 = vmatpush1.msra.mxu0 0.0
        %2330 = vmatprep.subr.mxu0 0.0
        %2331 = vmatpush1.msra.mxu0 0.0
        %2332 = vmatprep.subr.mxu0 0.0
        %2333 = vmatpush1.msra.mxu0 0.0
        %2334 = vmatprep.mubr.f32.mxu0 0.0
        %v2335 = vand.u32 %v1600, 4294901760
        %2336 = vmatmul.mubr.f32.gmra.mrb[0].mxu0 %v2335
        %v2337 = vpop.f32.mrb[0].mxu0
        %v2338 = vadd.f32 %v2223, %v2337
        %v2339 = vpop.f32.mrb[0].mxu0
        %2340 = vmatprep.mubr.f32.mxu0 0.0
        %v2341 = vand.u32 %v1603, 4294901760
        %2342 = vmatmul.mubr.f32.gmra.mrb[0].mxu0 %v2341
        %v2343 = vpop.f32.mrb[0].mxu0
        %v2344 = vadd.f32 %v2229, %v2343
        %v2345 = vpop.f32.mrb[0].mxu0
        %2346 = vmatprep.mubr.f32.mxu0 0.0
        %v2347 = vand.u32 %v1606, 4294901760
        %2348 = vmatmul.mubr.f32.gmra.mrb[0].mxu0 %v2347
        %v2349 = vpop.f32.mrb[0].mxu0
        %v2350 = vadd.f32 %v2235, %v2349
        %v2351 = vpop.f32.mrb[0].mxu0
        %2352 = vmatprep.mubr.f32.mxu0 0.0
        %v2353 = vand.u32 %v1609, 4294901760
        %2354 = vmatmul.mubr.f32.gmra.mrb[0].mxu0 %v2353
        %v2355 = vpop.f32.mrb[0].mxu0
        %v2356 = vadd.f32 %v2241, %v2355
        %v2357 = vpop.f32.mrb[0].mxu0
        %2358 = vmatprep.mubr.f32.mxu0 0.0
        %v2359 = vand.u32 %v1612, 4294901760
        %2360 = vmatmul.mubr.f32.gmra.mrb[0].mxu0 %v2359
        %v2361 = vpop.f32.mrb[0].mxu0
        %v2362 = vadd.f32 %v2247, %v2361
        %v2363 = vpop.f32.mrb[0].mxu0
        %2364 = vmatprep.mubr.f32.mxu0 0.0
        %v2365 = vand.u32 %v1615, 4294901760
        %2366 = vmatmul.mubr.f32.gmra.mrb[0].mxu0 %v2365
        %v2367 = vpop.f32.mrb[0].mxu0
        %v2368 = vadd.f32 %v2253, %v2367
        %v2369 = vpop.f32.mrb[0].mxu0
        %2370 = vmatprep.mubr.f32.mxu0 0.0
        %v2371 = vand.u32 %v1618, 4294901760
        %2372 = vmatmul.mubr.f32.gmra.mrb[0].mxu0 %v2371
        %v2373 = vpop.f32.mrb[0].mxu0
        %v2374 = vadd.f32 %v2259, %v2373
        %v2375 = vpop.f32.mrb[0].mxu0
        %2376 = vmatprep.mubr.f32.mxu0 0.0
        %v2377 = vand.u32 %v1621, 4294901760
        %2378 = vmatmul.mubr.f32.gmra.mrb[0].mxu0 %v2377
        %v2379 = vpop.f32.mrb[0].mxu0
        %v2380 = vadd.f32 %v2265, %v2379
        %v2381 = vpop.f32.mrb[0].mxu0
        %2382 = vdwg.mxu0
        %v2383 = vld [vmem:[%s8] sm:$0xff]
        %v2384 = vld [vmem:[%s8 + $0x8] sm:$0xff]
        %v2386 = vsel %vm1419, %v813, 0
        %v2389 = vsel %vm1419, %v814, 0
        %v2392 = vsel %vm1419, %v815, 0
        %v2395 = vsel %vm1419, %v816, 0
        %v2398 = vsel %vm1419, %v817, 0
        %v2401 = vsel %vm1419, %v818, 0
        %v2404 = vsel %vm1419, %v819, 0
        %v2407 = vsel %vm1419, %v820, 0
        %2409 = vmatprep.subr.mxu0 0.0
        %2410 = vmatpush1.msra.mxu0 %v2383
        %2411 = vmatprep.subr.mxu0 0.0
        %2412 = vmatpush1.msra.mxu0 %v2384
        %2413 = vmatprep.subr.mxu0 0.0
        %2414 = vmatpush1.msra.mxu0 0.0
        %2415 = vmatprep.subr.mxu0 0.0
        %2416 = vmatpush1.msra.mxu0 0.0
        %2417 = vmatprep.subr.mxu0 0.0
        %2418 = vmatpush1.msra.mxu0 0.0
        %2419 = vmatprep.subr.mxu0 0.0
        %2420 = vmatpush1.msra.mxu0 0.0
        %2421 = vmatprep.subr.mxu0 0.0
        %2422 = vmatpush1.msra.mxu0 0.0
        %2423 = vmatprep.subr.mxu0 0.0
        %2424 = vmatpush1.msra.mxu0 0.0
        %2425 = vmatprep.subr.mxu0 0.0
        %2426 = vmatpush1.msra.mxu0 0.0
        %2427 = vmatprep.subr.mxu0 0.0
        %2428 = vmatpush1.msra.mxu0 0.0
        %2429 = vmatprep.subr.mxu0 0.0
        %2430 = vmatpush1.msra.mxu0 0.0
        %2431 = vmatprep.subr.mxu0 0.0
        %2432 = vmatpush1.msra.mxu0 0.0
        %2433 = vmatprep.subr.mxu0 0.0
        %2434 = vmatpush1.msra.mxu0 0.0
        %2435 = vmatprep.subr.mxu0 0.0
        %2436 = vmatpush1.msra.mxu0 0.0
        %2437 = vmatprep.subr.mxu0 0.0
        %2438 = vmatpush1.msra.mxu0 0.0
        %2439 = vmatprep.subr.mxu0 0.0
        %2440 = vmatpush1.msra.mxu0 0.0
        %2441 = vmatprep.subr.mxu0 0.0
        %2442 = vmatpush1.msra.mxu0 0.0
        %2443 = vmatprep.subr.mxu0 0.0
        %2444 = vmatpush1.msra.mxu0 0.0
        %2445 = vmatprep.subr.mxu0 0.0
        %2446 = vmatpush1.msra.mxu0 0.0
        %2447 = vmatprep.subr.mxu0 0.0
        %2448 = vmatpush1.msra.mxu0 0.0
        %2449 = vmatprep.subr.mxu0 0.0
        %2450 = vmatpush1.msra.mxu0 0.0
        %2451 = vmatprep.subr.mxu0 0.0
        %2452 = vmatpush1.msra.mxu0 0.0
        %2453 = vmatprep.subr.mxu0 0.0
        %2454 = vmatpush1.msra.mxu0 0.0
        %2455 = vmatprep.subr.mxu0 0.0
        %2456 = vmatpush1.msra.mxu0 0.0
        %2457 = vmatprep.subr.mxu0 0.0
        %2458 = vmatpush1.msra.mxu0 0.0
        %2459 = vmatprep.subr.mxu0 0.0
        %2460 = vmatpush1.msra.mxu0 0.0
        %2461 = vmatprep.subr.mxu0 0.0
        %2462 = vmatpush1.msra.mxu0 0.0
        %2463 = vmatprep.subr.mxu0 0.0
        %2464 = vmatpush1.msra.mxu0 0.0
        %2465 = vmatprep.subr.mxu0 0.0
        %2466 = vmatpush1.msra.mxu0 0.0
        %2467 = vmatprep.subr.mxu0 0.0
        %2468 = vmatpush1.msra.mxu0 0.0
        %2469 = vmatprep.subr.mxu0 0.0
        %2470 = vmatpush1.msra.mxu0 0.0
        %2471 = vmatprep.subr.mxu0 0.0
        %2472 = vmatpush1.msra.mxu0 0.0
        %2473 = vmatprep.mubr.f32.mxu0 0.0
        %2474 = vmatmul.mubr.f32.gmra.mrb[0].mxu0 %v2386
        %v2475 = vpop.f32.mrb[0].mxu0
        %v2476 = vadd.f32 %v2338, %v2475
        %v2477 = vpop.f32.mrb[0].mxu0
        %2478 = vmatprep.mubr.f32.mxu0 0.0
        %2479 = vmatmul.mubr.f32.gmra.mrb[0].mxu0 %v2389
        %v2480 = vpop.f32.mrb[0].mxu0
        %v2481 = vadd.f32 %v2344, %v2480
        %v2482 = vpop.f32.mrb[0].mxu0
        %2483 = vmatprep.mubr.f32.mxu0 0.0
        %2484 = vmatmul.mubr.f32.gmra.mrb[0].mxu0 %v2392
        %v2485 = vpop.f32.mrb[0].mxu0
        %v2486 = vadd.f32 %v2350, %v2485
        %v2487 = vpop.f32.mrb[0].mxu0
        %2488 = vmatprep.mubr.f32.mxu0 0.0
        %2489 = vmatmul.mubr.f32.gmra.mrb[0].mxu0 %v2395
        %v2490 = vpop.f32.mrb[0].mxu0
        %v2491 = vadd.f32 %v2356, %v2490
        %v2492 = vpop.f32.mrb[0].mxu0
        %2493 = vmatprep.mubr.f32.mxu0 0.0
        %2494 = vmatmul.mubr.f32.gmra.mrb[0].mxu0 %v2398
        %v2495 = vpop.f32.mrb[0].mxu0
        %v2496 = vadd.f32 %v2362, %v2495
        %v2497 = vpop.f32.mrb[0].mxu0
        %2498 = vmatprep.mubr.f32.mxu0 0.0
        %2499 = vmatmul.mubr.f32.gmra.mrb[0].mxu0 %v2401
        %v2500 = vpop.f32.mrb[0].mxu0
        %v2501 = vadd.f32 %v2368, %v2500
        %v2502 = vpop.f32.mrb[0].mxu0
        %2503 = vmatprep.mubr.f32.mxu0 0.0
        %2504 = vmatmul.mubr.f32.gmra.mrb[0].mxu0 %v2404
        %v2505 = vpop.f32.mrb[0].mxu0
        %v2506 = vadd.f32 %v2374, %v2505
        %v2507 = vpop.f32.mrb[0].mxu0
        %2508 = vmatprep.mubr.f32.mxu0 0.0
        %2509 = vmatmul.mubr.f32.gmra.mrb[0].mxu0 %v2407
        %v2510 = vpop.f32.mrb[0].mxu0
        %v2511 = vadd.f32 %v2380, %v2510
        %v2512 = vpop.f32.mrb[0].mxu0
        %2513 = vdwg.mxu0
        %v2514 = vld [vmem:[%s10] sm:$0x1]
        %v2516 = vlaneseq
        %v2517 = vshrl.u32 %v2516, 7
        %v2518 = vsub.s32 0, %v2517
        %v2519 = vrot.slane %v2514, %v2518
        %v2521 = vadd.f32 %v2476, %v2519
        %v2522 = vadd.f32 %v2481, %v2519
        %v2523 = vadd.f32 %v2486, %v2519
        %v2524 = vadd.f32 %v2491, %v2519
        %v2525 = vadd.f32 %v2496, %v2519
        %v2526 = vadd.f32 %v2501, %v2519
        %v2527 = vadd.f32 %v2506, %v2519
        %v2528 = vadd.f32 %v2511, %v2519
        %vm2529 = vcmp.ge.f32.partialorder %v2521, 0.0
        %vm2530 = vcmp.ge.f32.partialorder %v2522, 0.0
        %vm2531 = vcmp.ge.f32.partialorder %v2523, 0.0
        %vm2532 = vcmp.ge.f32.partialorder %v2524, 0.0
        %vm2533 = vcmp.ge.f32.partialorder %v2525, 0.0
        %vm2534 = vcmp.ge.f32.partialorder %v2526, 0.0
        %vm2535 = vcmp.ge.f32.partialorder %v2527, 0.0
        %vm2536 = vcmp.ge.f32.partialorder %v2528, 0.0
        %v2537 = vstv %s646
        %v2538 = vmul.f32 %v2537, %v2521
        %v2539 = vmul.f32 %v2537, %v2522
        %v2540 = vmul.f32 %v2537, %v2523
        %v2541 = vmul.f32 %v2537, %v2524
        %v2542 = vmul.f32 %v2537, %v2525
        %v2543 = vmul.f32 %v2537, %v2526
        %v2544 = vmul.f32 %v2537, %v2527
        %v2545 = vmul.f32 %v2537, %v2528
        %v2546 = vsel %vm2529, %v2521, %v2538
        %v2547 = vsel %vm2530, %v2522, %v2539
        %v2548 = vsel %vm2531, %v2523, %v2540
        %v2549 = vsel %vm2532, %v2524, %v2541
        %v2550 = vsel %vm2533, %v2525, %v2542
        %v2551 = vsel %vm2534, %v2526, %v2543
        %v2552 = vsel %vm2535, %v2527, %v2544
        %v2553 = vsel %vm2536, %v2528, %v2545
        %v2554 = vsel %vm666, %v2546, 0.0
        %2555 = vadd.xlane.f32.xlu0 %v2554
        %v2556 = vpop.xlane.xlu0 %2555
        %v2557 = vsel %vm666, %v2547, 0.0
        %2558 = vadd.xlane.f32.xlu0 %v2557
        %v2559 = vpop.xlane.xlu0 %2558
        %v2560 = vsel %vm666, %v2548, 0.0
        %2561 = vadd.xlane.f32.xlu0 %v2560
        %v2562 = vpop.xlane.xlu0 %2561
        %v2563 = vsel %vm666, %v2549, 0.0
        %2564 = vadd.xlane.f32.xlu0 %v2563
        %v2565 = vpop.xlane.xlu0 %2564
        %v2566 = vsel %vm666, %v2550, 0.0
        %2567 = vadd.xlane.f32.xlu0 %v2566
        %v2568 = vpop.xlane.xlu0 %2567
        %v2569 = vsel %vm666, %v2551, 0.0
        %2570 = vadd.xlane.f32.xlu0 %v2569
        %v2571 = vpop.xlane.xlu0 %2570
        %v2572 = vsel %vm666, %v2552, 0.0
        %2573 = vadd.xlane.f32.xlu0 %v2572
        %v2574 = vpop.xlane.xlu0 %2573
        %v2575 = vsel %vm666, %v2553, 0.0
        %2576 = vadd.xlane.f32.xlu0 %v2575
        %v2577 = vpop.xlane.xlu0 %2576
        %v2578 = vmul.f32 %v2546, %v2546
        %v2579 = vmul.f32 %v2547, %v2547
        %v2580 = vmul.f32 %v2548, %v2548
        %v2581 = vmul.f32 %v2549, %v2549
        %v2582 = vmul.f32 %v2550, %v2550
        %v2583 = vmul.f32 %v2551, %v2551
        %v2584 = vmul.f32 %v2552, %v2552
        %v2585 = vmul.f32 %v2553, %v2553
        %v2586 = vsel %vm666, %v2578, 0.0
        %2587 = vadd.xlane.f32.xlu0 %v2586
        %v2588 = vpop.xlane.xlu0 %2587
        %v2589 = vsel %vm666, %v2579, 0.0
        %2590 = vadd.xlane.f32.xlu0 %v2589
        %v2591 = vpop.xlane.xlu0 %2590
        %v2592 = vsel %vm666, %v2580, 0.0
        %2593 = vadd.xlane.f32.xlu0 %v2592
        %v2594 = vpop.xlane.xlu0 %2593
        %v2595 = vsel %vm666, %v2581, 0.0
        %2596 = vadd.xlane.f32.xlu0 %v2595
        %v2597 = vpop.xlane.xlu0 %2596
        %v2598 = vsel %vm666, %v2582, 0.0
        %2599 = vadd.xlane.f32.xlu0 %v2598
        %v2600 = vpop.xlane.xlu0 %2599
        %v2601 = vsel %vm666, %v2583, 0.0
        %2602 = vadd.xlane.f32.xlu0 %v2601
        %v2603 = vpop.xlane.xlu0 %2602
        %v2604 = vsel %vm666, %v2584, 0.0
        %2605 = vadd.xlane.f32.xlu0 %v2604
        %v2606 = vpop.xlane.xlu0 %2605
        %v2607 = vsel %vm666, %v2585, 0.0
        %2608 = vadd.xlane.f32.xlu0 %v2607
        %v2609 = vpop.xlane.xlu0 %2608
        %v2610 = vld [vmem:[%s3] sm:$0xff]
        %v2611 = vld [vmem:[%s3 + $0x8] sm:$0xff]
        %v2612 = vld [vmem:[%s3 + $0x10] sm:$0xff]
        %v2613 = vld [vmem:[%s3 + $0x18] sm:$0xff]
        %v2614 = vld [vmem:[%s3 + $0x20] sm:$0xff]
        %v2615 = vld [vmem:[%s3 + $0x28] sm:$0xff]
        %v2616 = vld [vmem:[%s3 + $0x30] sm:$0xff]
        %v2617 = vld [vmem:[%s3 + $0x38] sm:$0xff]
        %v2618 = vmul.f32 %v2556, %v2610
        %v2619 = vmul.f32 %v2559, %v2611
        %v2620 = vmul.f32 %v2562, %v2612
        %v2621 = vmul.f32 %v2565, %v2613
        %v2622 = vmul.f32 %v2568, %v2614
        %v2623 = vmul.f32 %v2571, %v2615
        %v2624 = vmul.f32 %v2574, %v2616
        %v2625 = vmul.f32 %v2577, %v2617
        %vm2626 = vcmask 7168
        %v2627 = vsel %vm2626, %v2618, 0.0
        %v2628 = vsel %vm2626, %v2619, 0.0
        %v2629 = vadd.f32 %v2627, %v2628
        %v2630 = vsel %vm2626, %v2620, 0.0
        %v2631 = vadd.f32 %v2629, %v2630
        %v2632 = vsel %vm2626, %v2621, 0.0
        %v2633 = vadd.f32 %v2631, %v2632
        %v2634 = vsel %vm2626, %v2622, 0.0
        %v2635 = vadd.f32 %v2633, %v2634
        %v2636 = vsel %vm2626, %v2623, 0.0
        %v2637 = vadd.f32 %v2635, %v2636
        %v2638 = vsel %vm2626, %v2624, 0.0
        %v2639 = vadd.f32 %v2637, %v2638
        %v2640 = vsel %vm2626, %v2625, 0.0
        %v2641 = vadd.f32 %v2639, %v2640
        %2642 = vadd.xlane.f32.xlu0 %v2641
        %v2643 = vpop.xlane.xlu0 %2642
        %v2644 = vrot.slane %v2643, 4
        %v2645 = vadd.f32 %v2643, %v2644
        %v2646 = vrot.slane %v2645, 2
        %v2647 = vadd.f32 %v2645, %v2646
        %v2648 = vrot.slane %v2647, 1
        %v2649 = vadd.f32 %v2647, %v2648
        %s2650 = vtos %v2649
        %s2651 = smul.f32 %s2650, 0.001953125
        %v2652 = vmul.f32 %v2588, %v2610
        %v2653 = vmul.f32 %v2591, %v2611
        %v2654 = vmul.f32 %v2594, %v2612
        %v2655 = vmul.f32 %v2597, %v2613
        %v2656 = vmul.f32 %v2600, %v2614
        %v2657 = vmul.f32 %v2603, %v2615
        %v2658 = vmul.f32 %v2606, %v2616
        %v2659 = vmul.f32 %v2609, %v2617
        %v2660 = vsel %vm2626, %v2652, 0.0
        %v2661 = vsel %vm2626, %v2653, 0.0
        %v2662 = vadd.f32 %v2660, %v2661
        %v2663 = vsel %vm2626, %v2654, 0.0
        %v2664 = vadd.f32 %v2662, %v2663
        %v2665 = vsel %vm2626, %v2655, 0.0
        %v2666 = vadd.f32 %v2664, %v2665
        %v2667 = vsel %vm2626, %v2656, 0.0
        %v2668 = vadd.f32 %v2666, %v2667
        %v2669 = vsel %vm2626, %v2657, 0.0
        %v2670 = vadd.f32 %v2668, %v2669
        %v2671 = vsel %vm2626, %v2658, 0.0
        %v2672 = vadd.f32 %v2670, %v2671
        %v2673 = vsel %vm2626, %v2659, 0.0
        %v2674 = vadd.f32 %v2672, %v2673
        %2675 = vadd.xlane.f32.xlu0 %v2674
        %v2676 = vpop.xlane.xlu0 %2675
        %v2677 = vrot.slane %v2676, 4
        %v2678 = vadd.f32 %v2676, %v2677
        %v2679 = vrot.slane %v2678, 2
        %v2680 = vadd.f32 %v2678, %v2679
        %v2681 = vrot.slane %v2680, 1
        %v2682 = vadd.f32 %v2680, %v2681
        %s2683 = vtos %v2682
        %s2684 = smul.f32 %s2683, 0.001953125
        %s2685 = smul.f32 %s2651, %s2651
        %s2686 = ssub.f32 %s2684, %s2685
        %s2687 = sadd.f32 %s2686, 1e-05
        %v2688 = vstv %s2687
        %v2689 = vrsqrt.pop %v2688
        %s2690 = vtos %v2689
        %v2691 = vstv %s2651
        %v2692 = vmul.f32 %v2610, %v2691
        %v2693 = vmul.f32 %v2611, %v2691
        %v2694 = vmul.f32 %v2612, %v2691
        %v2695 = vmul.f32 %v2613, %v2691
        %v2696 = vmul.f32 %v2614, %v2691
        %v2697 = vmul.f32 %v2615, %v2691
        %v2698 = vmul.f32 %v2616, %v2691
        %v2699 = vmul.f32 %v2617, %v2691
        %v2700 = vadd.f32 %v2692, 0.0
        %v2701 = vadd.f32 %v2693, 0.0
        %v2702 = vadd.f32 %v2694, 0.0
        %v2703 = vadd.f32 %v2695, 0.0
        %v2704 = vadd.f32 %v2696, 0.0
        %v2705 = vadd.f32 %v2697, 0.0
        %v2706 = vadd.f32 %v2698, 0.0
        %v2707 = vadd.f32 %v2699, 0.0
        %v2708 = vstv %s2690
        %v2709 = vmul.f32 %v2610, %v2708
        %v2710 = vmul.f32 %v2611, %v2708
        %v2711 = vmul.f32 %v2612, %v2708
        %v2712 = vmul.f32 %v2613, %v2708
        %v2713 = vmul.f32 %v2614, %v2708
        %v2714 = vmul.f32 %v2615, %v2708
        %v2715 = vmul.f32 %v2616, %v2708
        %v2716 = vmul.f32 %v2617, %v2708
        %v2717 = vadd.f32 %v2709, 0.0
        %v2718 = vadd.f32 %v2710, 0.0
        %v2719 = vadd.f32 %v2711, 0.0
        %v2720 = vadd.f32 %v2712, 0.0
        %v2721 = vadd.f32 %v2713, 0.0
        %v2722 = vadd.f32 %v2714, 0.0
        %v2723 = vadd.f32 %v2715, 0.0
        %v2724 = vadd.f32 %v2716, 0.0
        %s2725 = scalar_lea.vmem %s3, 64
        %v2726 = vld [vmem:[%s2725] sm:$0xff]
        %v2727 = vld [vmem:[%s2725 + $0x8] sm:$0xff]
        %v2728 = vld [vmem:[%s2725 + $0x10] sm:$0xff]
        %v2729 = vld [vmem:[%s2725 + $0x18] sm:$0xff]
        %v2730 = vld [vmem:[%s2725 + $0x20] sm:$0xff]
        %v2731 = vld [vmem:[%s2725 + $0x28] sm:$0xff]
        %v2732 = vld [vmem:[%s2725 + $0x30] sm:$0xff]
        %v2733 = vld [vmem:[%s2725 + $0x38] sm:$0xff]
        %v2734 = vmul.f32 %v2556, %v2726
        %v2735 = vmul.f32 %v2559, %v2727
        %v2736 = vmul.f32 %v2562, %v2728
        %v2737 = vmul.f32 %v2565, %v2729
        %v2738 = vmul.f32 %v2568, %v2730
        %v2739 = vmul.f32 %v2571, %v2731
        %v2740 = vmul.f32 %v2574, %v2732
        %v2741 = vmul.f32 %v2577, %v2733
        %v2742 = vsel %vm2626, %v2734, 0.0
        %v2743 = vsel %vm2626, %v2735, 0.0
        %v2744 = vadd.f32 %v2742, %v2743
        %v2745 = vsel %vm2626, %v2736, 0.0
        %v2746 = vadd.f32 %v2744, %v2745
        %v2747 = vsel %vm2626, %v2737, 0.0
        %v2748 = vadd.f32 %v2746, %v2747
        %v2749 = vsel %vm2626, %v2738, 0.0
        %v2750 = vadd.f32 %v2748, %v2749
        %v2751 = vsel %vm2626, %v2739, 0.0
        %v2752 = vadd.f32 %v2750, %v2751
        %v2753 = vsel %vm2626, %v2740, 0.0
        %v2754 = vadd.f32 %v2752, %v2753
        %v2755 = vsel %vm2626, %v2741, 0.0
        %v2756 = vadd.f32 %v2754, %v2755
        %2757 = vadd.xlane.f32.xlu0 %v2756
        %v2758 = vpop.xlane.xlu0 %2757
        %v2759 = vrot.slane %v2758, 4
        %v2760 = vadd.f32 %v2758, %v2759
        %v2761 = vrot.slane %v2760, 2
        %v2762 = vadd.f32 %v2760, %v2761
        %v2763 = vrot.slane %v2762, 1
        %v2764 = vadd.f32 %v2762, %v2763
        %s2765 = vtos %v2764
        %s2766 = smul.f32 %s2765, 0.001953125
        %v2767 = vmul.f32 %v2588, %v2726
        %v2768 = vmul.f32 %v2591, %v2727
        %v2769 = vmul.f32 %v2594, %v2728
        %v2770 = vmul.f32 %v2597, %v2729
        %v2771 = vmul.f32 %v2600, %v2730
        %v2772 = vmul.f32 %v2603, %v2731
        %v2773 = vmul.f32 %v2606, %v2732
        %v2774 = vmul.f32 %v2609, %v2733
        %v2775 = vsel %vm2626, %v2767, 0.0
        %v2776 = vsel %vm2626, %v2768, 0.0
        %v2777 = vadd.f32 %v2775, %v2776
        %v2778 = vsel %vm2626, %v2769, 0.0
        %v2779 = vadd.f32 %v2777, %v2778
        %v2780 = vsel %vm2626, %v2770, 0.0
        %v2781 = vadd.f32 %v2779, %v2780
        %v2782 = vsel %vm2626, %v2771, 0.0
        %v2783 = vadd.f32 %v2781, %v2782
        %v2784 = vsel %vm2626, %v2772, 0.0
        %v2785 = vadd.f32 %v2783, %v2784
        %v2786 = vsel %vm2626, %v2773, 0.0
        %v2787 = vadd.f32 %v2785, %v2786
        %v2788 = vsel %vm2626, %v2774, 0.0
        %v2789 = vadd.f32 %v2787, %v2788
        %2790 = vadd.xlane.f32.xlu0 %v2789
        %v2791 = vpop.xlane.xlu0 %2790
        %v2792 = vrot.slane %v2791, 4
        %v2793 = vadd.f32 %v2791, %v2792
        %v2794 = vrot.slane %v2793, 2
        %v2795 = vadd.f32 %v2793, %v2794
        %v2796 = vrot.slane %v2795, 1
        %v2797 = vadd.f32 %v2795, %v2796
        %s2798 = vtos %v2797
        %s2799 = smul.f32 %s2798, 0.001953125
        %s2800 = smul.f32 %s2766, %s2766
        %s2801 = ssub.f32 %s2799, %s2800
        %s2802 = sadd.f32 %s2801, 1e-05
        %v2803 = vstv %s2802
        %v2804 = vrsqrt.pop %v2803
        %s2805 = vtos %v2804
        %v2806 = vstv %s2766
        %v2807 = vmul.f32 %v2726, %v2806
        %v2808 = vmul.f32 %v2727, %v2806
        %v2809 = vmul.f32 %v2728, %v2806
        %v2810 = vmul.f32 %v2729, %v2806
        %v2811 = vmul.f32 %v2730, %v2806
        %v2812 = vmul.f32 %v2731, %v2806
        %v2813 = vmul.f32 %v2732, %v2806
        %v2814 = vmul.f32 %v2733, %v2806
        %v2815 = vadd.f32 %v2700, %v2807
        %v2816 = vadd.f32 %v2701, %v2808
        %v2817 = vadd.f32 %v2702, %v2809
        %v2818 = vadd.f32 %v2703, %v2810
        %v2819 = vadd.f32 %v2704, %v2811
        %v2820 = vadd.f32 %v2705, %v2812
        %v2821 = vadd.f32 %v2706, %v2813
        %v2822 = vadd.f32 %v2707, %v2814
        %v2823 = vstv %s2805
        %v2824 = vmul.f32 %v2726, %v2823
        %v2825 = vmul.f32 %v2727, %v2823
        %v2826 = vmul.f32 %v2728, %v2823
        %v2827 = vmul.f32 %v2729, %v2823
        %v2828 = vmul.f32 %v2730, %v2823
        %v2829 = vmul.f32 %v2731, %v2823
        %v2830 = vmul.f32 %v2732, %v2823
        %v2831 = vmul.f32 %v2733, %v2823
        %v2832 = vadd.f32 %v2717, %v2824
        %v2833 = vadd.f32 %v2718, %v2825
        %v2834 = vadd.f32 %v2719, %v2826
        %v2835 = vadd.f32 %v2720, %v2827
        %v2836 = vadd.f32 %v2721, %v2828
        %v2837 = vadd.f32 %v2722, %v2829
        %v2838 = vadd.f32 %v2723, %v2830
        %v2839 = vadd.f32 %v2724, %v2831
        %s2840 = scalar_lea.vmem %s3, 128
        %v2841 = vld [vmem:[%s2840] sm:$0xff]
        %v2842 = vld [vmem:[%s2840 + $0x8] sm:$0xff]
        %v2843 = vld [vmem:[%s2840 + $0x10] sm:$0xff]
        %v2844 = vld [vmem:[%s2840 + $0x18] sm:$0xff]
        %v2845 = vld [vmem:[%s2840 + $0x20] sm:$0xff]
        %v2846 = vld [vmem:[%s2840 + $0x28] sm:$0xff]
        %v2847 = vld [vmem:[%s2840 + $0x30] sm:$0xff]
        %v2848 = vld [vmem:[%s2840 + $0x38] sm:$0xff]
        %v2849 = vmul.f32 %v2556, %v2841
        %v2850 = vmul.f32 %v2559, %v2842
        %v2851 = vmul.f32 %v2562, %v2843
        %v2852 = vmul.f32 %v2565, %v2844
        %v2853 = vmul.f32 %v2568, %v2845
        %v2854 = vmul.f32 %v2571, %v2846
        %v2855 = vmul.f32 %v2574, %v2847
        %v2856 = vmul.f32 %v2577, %v2848
        %v2857 = vsel %vm2626, %v2849, 0.0
        %v2858 = vsel %vm2626, %v2850, 0.0
        %v2859 = vadd.f32 %v2857, %v2858
        %v2860 = vsel %vm2626, %v2851, 0.0
        %v2861 = vadd.f32 %v2859, %v2860
        %v2862 = vsel %vm2626, %v2852, 0.0
        %v2863 = vadd.f32 %v2861, %v2862
        %v2864 = vsel %vm2626, %v2853, 0.0
        %v2865 = vadd.f32 %v2863, %v2864
        %v2866 = vsel %vm2626, %v2854, 0.0
        %v2867 = vadd.f32 %v2865, %v2866
        %v2868 = vsel %vm2626, %v2855, 0.0
        %v2869 = vadd.f32 %v2867, %v2868
        %v2870 = vsel %vm2626, %v2856, 0.0
        %v2871 = vadd.f32 %v2869, %v2870
        %2872 = vadd.xlane.f32.xlu0 %v2871
        %v2873 = vpop.xlane.xlu0 %2872
        %v2874 = vrot.slane %v2873, 4
        %v2875 = vadd.f32 %v2873, %v2874
        %v2876 = vrot.slane %v2875, 2
        %v2877 = vadd.f32 %v2875, %v2876
        %v2878 = vrot.slane %v2877, 1
        %v2879 = vadd.f32 %v2877, %v2878
        %s2880 = vtos %v2879
        %s2881 = smul.f32 %s2880, 0.001953125
        %v2882 = vmul.f32 %v2588, %v2841
        %v2883 = vmul.f32 %v2591, %v2842
        %v2884 = vmul.f32 %v2594, %v2843
        %v2885 = vmul.f32 %v2597, %v2844
        %v2886 = vmul.f32 %v2600, %v2845
        %v2887 = vmul.f32 %v2603, %v2846
        %v2888 = vmul.f32 %v2606, %v2847
        %v2889 = vmul.f32 %v2609, %v2848
        %v2890 = vsel %vm2626, %v2882, 0.0
        %v2891 = vsel %vm2626, %v2883, 0.0
        %v2892 = vadd.f32 %v2890, %v2891
        %v2893 = vsel %vm2626, %v2884, 0.0
        %v2894 = vadd.f32 %v2892, %v2893
        %v2895 = vsel %vm2626, %v2885, 0.0
        %v2896 = vadd.f32 %v2894, %v2895
        %v2897 = vsel %vm2626, %v2886, 0.0
        %v2898 = vadd.f32 %v2896, %v2897
        %v2899 = vsel %vm2626, %v2887, 0.0
        %v2900 = vadd.f32 %v2898, %v2899
        %v2901 = vsel %vm2626, %v2888, 0.0
        %v2902 = vadd.f32 %v2900, %v2901
        %v2903 = vsel %vm2626, %v2889, 0.0
        %v2904 = vadd.f32 %v2902, %v2903
        %2905 = vadd.xlane.f32.xlu0 %v2904
        %v2906 = vpop.xlane.xlu0 %2905
        %v2907 = vrot.slane %v2906, 4
        %v2908 = vadd.f32 %v2906, %v2907
        %v2909 = vrot.slane %v2908, 2
        %v2910 = vadd.f32 %v2908, %v2909
        %v2911 = vrot.slane %v2910, 1
        %v2912 = vadd.f32 %v2910, %v2911
        %s2913 = vtos %v2912
        %s2914 = smul.f32 %s2913, 0.001953125
        %s2915 = smul.f32 %s2881, %s2881
        %s2916 = ssub.f32 %s2914, %s2915
        %s2917 = sadd.f32 %s2916, 1e-05
        %v2918 = vstv %s2917
        %v2919 = vrsqrt.pop %v2918
        %s2920 = vtos %v2919
        %v2921 = vstv %s2881
        %v2922 = vmul.f32 %v2841, %v2921
        %v2923 = vmul.f32 %v2842, %v2921
        %v2924 = vmul.f32 %v2843, %v2921
        %v2925 = vmul.f32 %v2844, %v2921
        %v2926 = vmul.f32 %v2845, %v2921
        %v2927 = vmul.f32 %v2846, %v2921
        %v2928 = vmul.f32 %v2847, %v2921
        %v2929 = vmul.f32 %v2848, %v2921
        %v2930 = vadd.f32 %v2815, %v2922
        %v2931 = vadd.f32 %v2816, %v2923
        %v2932 = vadd.f32 %v2817, %v2924
        %v2933 = vadd.f32 %v2818, %v2925
        %v2934 = vadd.f32 %v2819, %v2926
        %v2935 = vadd.f32 %v2820, %v2927
        %v2936 = vadd.f32 %v2821, %v2928
        %v2937 = vadd.f32 %v2822, %v2929
        %v2938 = vstv %s2920
        %v2939 = vmul.f32 %v2841, %v2938
        %v2940 = vmul.f32 %v2842, %v2938
        %v2941 = vmul.f32 %v2843, %v2938
        %v2942 = vmul.f32 %v2844, %v2938
        %v2943 = vmul.f32 %v2845, %v2938
        %v2944 = vmul.f32 %v2846, %v2938
        %v2945 = vmul.f32 %v2847, %v2938
        %v2946 = vmul.f32 %v2848, %v2938
        %v2947 = vadd.f32 %v2832, %v2939
        %v2948 = vadd.f32 %v2833, %v2940
        %v2949 = vadd.f32 %v2834, %v2941
        %v2950 = vadd.f32 %v2835, %v2942
        %v2951 = vadd.f32 %v2836, %v2943
        %v2952 = vadd.f32 %v2837, %v2944
        %v2953 = vadd.f32 %v2838, %v2945
        %v2954 = vadd.f32 %v2839, %v2946
        %s2955 = scalar_lea.vmem %s3, 192
        %v2956 = vld [vmem:[%s2955] sm:$0xff]
        %v2957 = vld [vmem:[%s2955 + $0x8] sm:$0xff]
        %v2958 = vld [vmem:[%s2955 + $0x10] sm:$0xff]
        %v2959 = vld [vmem:[%s2955 + $0x18] sm:$0xff]
        %v2960 = vld [vmem:[%s2955 + $0x20] sm:$0xff]
        %v2961 = vld [vmem:[%s2955 + $0x28] sm:$0xff]
        %v2962 = vld [vmem:[%s2955 + $0x30] sm:$0xff]
        %v2963 = vld [vmem:[%s2955 + $0x38] sm:$0xff]
        %v2964 = vmul.f32 %v2556, %v2956
        %v2965 = vmul.f32 %v2559, %v2957
        %v2966 = vmul.f32 %v2562, %v2958
        %v2967 = vmul.f32 %v2565, %v2959
        %v2968 = vmul.f32 %v2568, %v2960
        %v2969 = vmul.f32 %v2571, %v2961
        %v2970 = vmul.f32 %v2574, %v2962
        %v2971 = vmul.f32 %v2577, %v2963
        %v2972 = vsel %vm2626, %v2964, 0.0
        %v2973 = vsel %vm2626, %v2965, 0.0
        %v2974 = vadd.f32 %v2972, %v2973
        %v2975 = vsel %vm2626, %v2966, 0.0
        %v2976 = vadd.f32 %v2974, %v2975
        %v2977 = vsel %vm2626, %v2967, 0.0
        %v2978 = vadd.f32 %v2976, %v2977
        %v2979 = vsel %vm2626, %v2968, 0.0
        %v2980 = vadd.f32 %v2978, %v2979
        %v2981 = vsel %vm2626, %v2969, 0.0
        %v2982 = vadd.f32 %v2980, %v2981
        %v2983 = vsel %vm2626, %v2970, 0.0
        %v2984 = vadd.f32 %v2982, %v2983
        %v2985 = vsel %vm2626, %v2971, 0.0
        %v2986 = vadd.f32 %v2984, %v2985
        %2987 = vadd.xlane.f32.xlu0 %v2986
        %v2988 = vpop.xlane.xlu0 %2987
        %v2989 = vrot.slane %v2988, 4
        %v2990 = vadd.f32 %v2988, %v2989
        %v2991 = vrot.slane %v2990, 2
        %v2992 = vadd.f32 %v2990, %v2991
        %v2993 = vrot.slane %v2992, 1
        %v2994 = vadd.f32 %v2992, %v2993
        %s2995 = vtos %v2994
        %s2996 = smul.f32 %s2995, 0.001953125
        %v2997 = vmul.f32 %v2588, %v2956
        %v2998 = vmul.f32 %v2591, %v2957
        %v2999 = vmul.f32 %v2594, %v2958
        %v3000 = vmul.f32 %v2597, %v2959
        %v3001 = vmul.f32 %v2600, %v2960
        %v3002 = vmul.f32 %v2603, %v2961
        %v3003 = vmul.f32 %v2606, %v2962
        %v3004 = vmul.f32 %v2609, %v2963
        %v3005 = vsel %vm2626, %v2997, 0.0
        %v3006 = vsel %vm2626, %v2998, 0.0
        %v3007 = vadd.f32 %v3005, %v3006
        %v3008 = vsel %vm2626, %v2999, 0.0
        %v3009 = vadd.f32 %v3007, %v3008
        %v3010 = vsel %vm2626, %v3000, 0.0
        %v3011 = vadd.f32 %v3009, %v3010
        %v3012 = vsel %vm2626, %v3001, 0.0
        %v3013 = vadd.f32 %v3011, %v3012
        %v3014 = vsel %vm2626, %v3002, 0.0
        %v3015 = vadd.f32 %v3013, %v3014
        %v3016 = vsel %vm2626, %v3003, 0.0
        %v3017 = vadd.f32 %v3015, %v3016
        %v3018 = vsel %vm2626, %v3004, 0.0
        %v3019 = vadd.f32 %v3017, %v3018
        %3020 = vadd.xlane.f32.xlu0 %v3019
        %v3021 = vpop.xlane.xlu0 %3020
        %v3022 = vrot.slane %v3021, 4
        %v3023 = vadd.f32 %v3021, %v3022
        %v3024 = vrot.slane %v3023, 2
        %v3025 = vadd.f32 %v3023, %v3024
        %v3026 = vrot.slane %v3025, 1
        %v3027 = vadd.f32 %v3025, %v3026
        %s3028 = vtos %v3027
        %s3029 = smul.f32 %s3028, 0.001953125
        %s3030 = smul.f32 %s2996, %s2996
        %s3031 = ssub.f32 %s3029, %s3030
        %s3032 = sadd.f32 %s3031, 1e-05
        %v3033 = vstv %s3032
        %v3034 = vrsqrt.pop %v3033
        %s3035 = vtos %v3034
        %v3036 = vstv %s2996
        %v3037 = vmul.f32 %v2956, %v3036
        %v3038 = vmul.f32 %v2957, %v3036
        %v3039 = vmul.f32 %v2958, %v3036
        %v3040 = vmul.f32 %v2959, %v3036
        %v3041 = vmul.f32 %v2960, %v3036
        %v3042 = vmul.f32 %v2961, %v3036
        %v3043 = vmul.f32 %v2962, %v3036
        %v3044 = vmul.f32 %v2963, %v3036
        %v3045 = vadd.f32 %v2930, %v3037
        %v3046 = vadd.f32 %v2931, %v3038
        %v3047 = vadd.f32 %v2932, %v3039
        %v3048 = vadd.f32 %v2933, %v3040
        %v3049 = vadd.f32 %v2934, %v3041
        %v3050 = vadd.f32 %v2935, %v3042
        %v3051 = vadd.f32 %v2936, %v3043
        %v3052 = vadd.f32 %v2937, %v3044
        %v3053 = vstv %s3035
        %v3054 = vmul.f32 %v2956, %v3053
        %v3055 = vmul.f32 %v2957, %v3053
        %v3056 = vmul.f32 %v2958, %v3053
        %v3057 = vmul.f32 %v2959, %v3053
        %v3058 = vmul.f32 %v2960, %v3053
        %v3059 = vmul.f32 %v2961, %v3053
        %v3060 = vmul.f32 %v2962, %v3053
        %v3061 = vmul.f32 %v2963, %v3053
        %v3062 = vadd.f32 %v2947, %v3054
        %v3063 = vadd.f32 %v2948, %v3055
        %v3064 = vadd.f32 %v2949, %v3056
        %v3065 = vadd.f32 %v2950, %v3057
        %v3066 = vadd.f32 %v2951, %v3058
        %v3067 = vadd.f32 %v2952, %v3059
        %v3068 = vadd.f32 %v2953, %v3060
        %v3069 = vadd.f32 %v2954, %v3061
        %3071 = vset.pattern.permute.xlu0 0
        %3072 = vperm.xlu0 %3071, %v3045
        %v3073 = vpop.permute.xlu0 %3072
        %3076 = vset.pattern.permute.xlu0 0
        %3077 = vperm.xlu0 %3076, %v3046
        %v3078 = vpop.permute.xlu0 %3077
        %3081 = vset.pattern.permute.xlu0 0
        %3082 = vperm.xlu0 %3081, %v3047
        %v3083 = vpop.permute.xlu0 %3082
        %3086 = vset.pattern.permute.xlu0 0
        %3087 = vperm.xlu0 %3086, %v3048
        %v3088 = vpop.permute.xlu0 %3087
        %3091 = vset.pattern.permute.xlu0 0
        %3092 = vperm.xlu0 %3091, %v3049
        %v3093 = vpop.permute.xlu0 %3092
        %3096 = vset.pattern.permute.xlu0 0
        %3097 = vperm.xlu0 %3096, %v3050
        %v3098 = vpop.permute.xlu0 %3097
        %3101 = vset.pattern.permute.xlu0 0
        %3102 = vperm.xlu0 %3101, %v3051
        %v3103 = vpop.permute.xlu0 %3102
        %3106 = vset.pattern.permute.xlu0 0
        %3107 = vperm.xlu0 %3106, %v3052
        %v3108 = vpop.permute.xlu0 %3107
        %v3110 = vsub.f32 %v2546, %v3073
        %v3111 = vsub.f32 %v2547, %v3078
        %v3112 = vsub.f32 %v2548, %v3083
        %v3113 = vsub.f32 %v2549, %v3088
        %v3114 = vsub.f32 %v2550, %v3093
        %v3115 = vsub.f32 %v2551, %v3098
        %v3116 = vsub.f32 %v2552, %v3103
        %v3117 = vsub.f32 %v2553, %v3108
        %3119 = vset.pattern.permute.xlu0 0
        %3120 = vperm.xlu0 %3119, %v3062
        %v3121 = vpop.permute.xlu0 %3120
        %3124 = vset.pattern.permute.xlu0 0
        %3125 = vperm.xlu0 %3124, %v3063
        %v3126 = vpop.permute.xlu0 %3125
        %3129 = vset.pattern.permute.xlu0 0
        %3130 = vperm.xlu0 %3129, %v3064
        %v3131 = vpop.permute.xlu0 %3130
        %3134 = vset.pattern.permute.xlu0 0
        %3135 = vperm.xlu0 %3134, %v3065
        %v3136 = vpop.permute.xlu0 %3135
        %3139 = vset.pattern.permute.xlu0 0
        %3140 = vperm.xlu0 %3139, %v3066
        %v3141 = vpop.permute.xlu0 %3140
        %3144 = vset.pattern.permute.xlu0 0
        %3145 = vperm.xlu0 %3144, %v3067
        %v3146 = vpop.permute.xlu0 %3145
        %3149 = vset.pattern.permute.xlu0 0
        %3150 = vperm.xlu0 %3149, %v3068
        %v3151 = vpop.permute.xlu0 %3150
        %3154 = vset.pattern.permute.xlu0 0
        %3155 = vperm.xlu0 %3154, %v3069
        %v3156 = vpop.permute.xlu0 %3155
        %v3158 = vmul.f32 %v3110, %v3121
        %v3159 = vmul.f32 %v3111, %v3126
        %v3160 = vmul.f32 %v3112, %v3131
        %v3161 = vmul.f32 %v3113, %v3136
        %v3162 = vmul.f32 %v3114, %v3141
        %v3163 = vmul.f32 %v3115, %v3146
        %v3164 = vmul.f32 %v3116, %v3151
        %v3165 = vmul.f32 %v3117, %v3156
        %v3166 = vld [vmem:[%s11] sm:$0x1]
        %v3168 = vlaneseq
        %v3169 = vshrl.u32 %v3168, 7
        %v3170 = vsub.s32 0, %v3169
        %v3171 = vrot.slane %v3166, %v3170
        %v3173 = vmul.f32 %v3158, %v3171
        %v3174 = vmul.f32 %v3159, %v3171
        %v3175 = vmul.f32 %v3160, %v3171
        %v3176 = vmul.f32 %v3161, %v3171
        %v3177 = vmul.f32 %v3162, %v3171
        %v3178 = vmul.f32 %v3163, %v3171
        %v3179 = vmul.f32 %v3164, %v3171
        %v3180 = vmul.f32 %v3165, %v3171
        %v3181 = vld [vmem:[%s12] sm:$0x1]
        %v3183 = vlaneseq
        %v3184 = vshrl.u32 %v3183, 7
        %v3185 = vsub.s32 0, %v3184
        %v3186 = vrot.slane %v3181, %v3185
        %v3188 = vadd.f32 %v3173, %v3186
        %v3189 = vadd.f32 %v3174, %v3186
        %v3190 = vadd.f32 %v3175, %v3186
        %v3191 = vadd.f32 %v3176, %v3186
        %v3192 = vadd.f32 %v3177, %v3186
        %v3193 = vadd.f32 %v3178, %v3186
        %v3194 = vadd.f32 %v3179, %v3186
        %v3195 = vadd.f32 %v3180, %v3186
        %v3196 = vadd.f32 %v647, %v3188
        %v3197 = vadd.f32 %v648, %v3189
        %v3198 = vadd.f32 %v649, %v3190
        %v3199 = vadd.f32 %v650, %v3191
        %v3200 = vadd.f32 %v651, %v3192
        %v3201 = vadd.f32 %v652, %v3193
        %v3202 = vadd.f32 %v653, %v3194
        %v3203 = vadd.f32 %v654, %v3195
        %v3204 = vld [vmem:[%s14] sm:$0xff]
        %v3205 = vld [vmem:[%s14 + $0x8] sm:$0xff]
        %v3206 = vld [vmem:[%s14 + $0x10] sm:$0xff]
        %v3207 = vld [vmem:[%s14 + $0x18] sm:$0xff]
        %v3208 = vld [vmem:[%s16] sm:$0x1]
        %v3210 = vlaneseq
        %v3211 = vshrl.u32 %v3210, 7
        %v3212 = vsub.s32 0, %v3211
        %v3213 = vrot.slane %v3208, %v3212
        %v3216 = vsel %vm666, %v3196, 0
        %v3219 = vsel %vm666, %v3197, 0
        %v3222 = vsel %vm666, %v3198, 0
        %v3225 = vsel %vm666, %v3199, 0
        %v3228 = vsel %vm666, %v3200, 0
        %v3231 = vsel %vm666, %v3201, 0
        %v3234 = vsel %vm666, %v3202, 0
        %v3237 = vsel %vm666, %v3203, 0
        %3239 = vmatprep.subr.mxu0 0.0
        %3240 = vmatpush1.msra.mxu0 %v3204
        %3241 = vmatprep.subr.mxu0 0.0
        %3242 = vmatpush1.msra.mxu0 %v3205
        %3243 = vmatprep.subr.mxu0 0.0
        %3244 = vmatpush1.msra.mxu0 %v3206
        %3245 = vmatprep.subr.mxu0 0.0
        %3246 = vmatpush1.msra.mxu0 %v3207
        %3247 = vmatprep.subr.mxu0 0.0
        %3248 = vmatpush1.msra.mxu0 0.0
        %3249 = vmatprep.subr.mxu0 0.0
        %3250 = vmatpush1.msra.mxu0 0.0
        %3251 = vmatprep.subr.mxu0 0.0
        %3252 = vmatpush1.msra.mxu0 0.0
        %3253 = vmatprep.subr.mxu0 0.0
        %3254 = vmatpush1.msra.mxu0 0.0
        %3255 = vmatprep.subr.mxu0 0.0
        %3256 = vmatpush1.msra.mxu0 0.0
        %3257 = vmatprep.subr.mxu0 0.0
        %3258 = vmatpush1.msra.mxu0 0.0
        %3259 = vmatprep.subr.mxu0 0.0
        %3260 = vmatpush1.msra.mxu0 0.0
        %3261 = vmatprep.subr.mxu0 0.0
        %3262 = vmatpush1.msra.mxu0 0.0
        %3263 = vmatprep.subr.mxu0 0.0
        %3264 = vmatpush1.msra.mxu0 0.0
        %3265 = vmatprep.subr.mxu0 0.0
        %3266 = vmatpush1.msra.mxu0 0.0
        %3267 = vmatprep.subr.mxu0 0.0
        %3268 = vmatpush1.msra.mxu0 0.0
        %3269 = vmatprep.subr.mxu0 0.0
        %3270 = vmatpush1.msra.mxu0 0.0
        %3271 = vmatprep.subr.mxu0 0.0
        %3272 = vmatpush1.msra.mxu0 0.0
        %3273 = vmatprep.subr.mxu0 0.0
        %3274 = vmatpush1.msra.mxu0 0.0
        %3275 = vmatprep.subr.mxu0 0.0
        %3276 = vmatpush1.msra.mxu0 0.0
        %3277 = vmatprep.subr.mxu0 0.0
        %3278 = vmatpush1.msra.mxu0 0.0
        %3279 = vmatprep.subr.mxu0 0.0
        %3280 = vmatpush1.msra.mxu0 0.0
        %3281 = vmatprep.subr.mxu0 0.0
        %3282 = vmatpush1.msra.mxu0 0.0
        %3283 = vmatprep.subr.mxu0 0.0
        %3284 = vmatpush1.msra.mxu0 0.0
        %3285 = vmatprep.subr.mxu0 0.0
        %3286 = vmatpush1.msra.mxu0 0.0
        %3287 = vmatprep.subr.mxu0 0.0
        %3288 = vmatpush1.msra.mxu0 0.0
        %3289 = vmatprep.subr.mxu0 0.0
        %3290 = vmatpush1.msra.mxu0 0.0
        %3291 = vmatprep.subr.mxu0 0.0
        %3292 = vmatpush1.msra.mxu0 0.0
        %3293 = vmatprep.subr.mxu0 0.0
        %3294 = vmatpush1.msra.mxu0 0.0
        %3295 = vmatprep.subr.mxu0 0.0
        %3296 = vmatpush1.msra.mxu0 0.0
        %3297 = vmatprep.subr.mxu0 0.0
        %3298 = vmatpush1.msra.mxu0 0.0
        %3299 = vmatprep.subr.mxu0 0.0
        %3300 = vmatpush1.msra.mxu0 0.0
        %3301 = vmatprep.subr.mxu0 0.0
        %3302 = vmatpush1.msra.mxu0 0.0
        %3303 = vmatprep.mubr.f32.mxu0 0.0
        %3304 = vmatmul.mubr.f32.gmra.mrb[0].mxu0 %v3216
        %v3305 = vpop.f32.mrb[0].mxu0
        %v3306 = vadd.f32 %v3213, %v3305
        %v3307 = vpop.f32.mrb[0].mxu0
        %3308 = vmatprep.mubr.f32.mxu0 0.0
        %3309 = vmatmul.mubr.f32.gmra.mrb[0].mxu0 %v3219
        %v3310 = vpop.f32.mrb[0].mxu0
        %v3311 = vadd.f32 %v3213, %v3310
        %v3312 = vpop.f32.mrb[0].mxu0
        %3313 = vmatprep.mubr.f32.mxu0 0.0
        %3314 = vmatmul.mubr.f32.gmra.mrb[0].mxu0 %v3222
        %v3315 = vpop.f32.mrb[0].mxu0
        %v3316 = vadd.f32 %v3213, %v3315
        %v3317 = vpop.f32.mrb[0].mxu0
        %3318 = vmatprep.mubr.f32.mxu0 0.0
        %3319 = vmatmul.mubr.f32.gmra.mrb[0].mxu0 %v3225
        %v3320 = vpop.f32.mrb[0].mxu0
        %v3321 = vadd.f32 %v3213, %v3320
        %v3322 = vpop.f32.mrb[0].mxu0
        %3323 = vmatprep.mubr.f32.mxu0 0.0
        %3324 = vmatmul.mubr.f32.gmra.mrb[0].mxu0 %v3228
        %v3325 = vpop.f32.mrb[0].mxu0
        %v3326 = vadd.f32 %v3213, %v3325
        %v3327 = vpop.f32.mrb[0].mxu0
        %3328 = vmatprep.mubr.f32.mxu0 0.0
        %3329 = vmatmul.mubr.f32.gmra.mrb[0].mxu0 %v3231
        %v3330 = vpop.f32.mrb[0].mxu0
        %v3331 = vadd.f32 %v3213, %v3330
        %v3332 = vpop.f32.mrb[0].mxu0
        %3333 = vmatprep.mubr.f32.mxu0 0.0
        %3334 = vmatmul.mubr.f32.gmra.mrb[0].mxu0 %v3234
        %v3335 = vpop.f32.mrb[0].mxu0
        %v3336 = vadd.f32 %v3213, %v3335
        %v3337 = vpop.f32.mrb[0].mxu0
        %3338 = vmatprep.mubr.f32.mxu0 0.0
        %3339 = vmatmul.mubr.f32.gmra.mrb[0].mxu0 %v3237
        %v3340 = vpop.f32.mrb[0].mxu0
        %v3341 = vadd.f32 %v3213, %v3340
        %v3342 = vpop.f32.mrb[0].mxu0
        %3343 = vdwg.mxu0
        %vm3344 = vcmask 781312
        %3345 = vst.msk [vmem:[#allocation2] sm:$0xf] %vm3344, %v3306
        %s3346 = scalar_lea.vmem [#allocation2], 4
        %vm3347 = vcmask 785412
        %3348 = vst.msk [vmem:[%s3346 - $0x4] sm:$0xf0] %vm3347, %v3306
        %s3349 = scalar_lea.vmem [#allocation2], 8
        %3350 = vst.msk [vmem:[%s3349] sm:$0xf] %vm3344, %v3311
        %s3351 = scalar_lea.vmem [#allocation2], 12
        %3352 = vst.msk [vmem:[%s3351 - $0x4] sm:$0xf0] %vm3347, %v3311
        %s3353 = scalar_lea.vmem [#allocation2], 16
        %3354 = vst.msk [vmem:[%s3353] sm:$0xf] %vm3344, %v3316
        %s3355 = scalar_lea.vmem [#allocation2], 20
        %3356 = vst.msk [vmem:[%s3355 - $0x4] sm:$0xf0] %vm3347, %v3316
        %s3357 = scalar_lea.vmem [#allocation2], 24
        %3358 = vst.msk [vmem:[%s3357] sm:$0xf] %vm3344, %v3321
        %s3359 = scalar_lea.vmem [#allocation2], 28
        %3360 = vst.msk [vmem:[%s3359 - $0x4] sm:$0xf0] %vm3347, %v3321
        %s3361 = scalar_lea.vmem [#allocation2], 32
        %3362 = vst.msk [vmem:[%s3361] sm:$0xf] %vm3344, %v3326
        %s3363 = scalar_lea.vmem [#allocation2], 36
        %3364 = vst.msk [vmem:[%s3363 - $0x4] sm:$0xf0] %vm3347, %v3326
        %s3365 = scalar_lea.vmem [#allocation2], 40
        %3366 = vst.msk [vmem:[%s3365] sm:$0xf] %vm3344, %v3331
        %s3367 = scalar_lea.vmem [#allocation2], 44
        %3368 = vst.msk [vmem:[%s3367 - $0x4] sm:$0xf0] %vm3347, %v3331
        %s3369 = scalar_lea.vmem [#allocation2], 48
        %3370 = vst.msk [vmem:[%s3369] sm:$0xf] %vm3344, %v3336
        %s3371 = scalar_lea.vmem [#allocation2], 52
        %3372 = vst.msk [vmem:[%s3371 - $0x4] sm:$0xf0] %vm3347, %v3336
        %s3373 = scalar_lea.vmem [#allocation2], 56
        %3374 = vst.msk [vmem:[%s3373] sm:$0xf] %vm3344, %v3341
        %s3375 = scalar_lea.vmem [#allocation2], 60
        %3376 = vst.msk [vmem:[%s3375 - $0x4] sm:$0xf0] %vm3347, %v3341
        %v3377 = vld [vmem:[%s15] sm:$0xff]
        %v3378 = vld [vmem:[%s15 + $0x8] sm:$0xff]
        %v3379 = vld [vmem:[%s15 + $0x10] sm:$0xff]
        %v3380 = vld [vmem:[%s15 + $0x18] sm:$0xff]
        %v3381 = vld [vmem:[%s17] sm:$0x1]
        loop: start=0, step=1, limit=16
        $region105: #{sil_block_forward.1} parent=99 // loop_pre_header
          _
        $region106: #{sil_block_forward.1} parent=99 // loop_header
          %s3383 = sphi 0, %s3387
          %p3384 = scmp.ge.s32.totalorder %s3383, 16
          %v3388 = vphi 0.0, %v3500
          %v3389 = vphi 0.0, %v3511
          %v3390 = vphi 0.0, %v3520
        $region107: #{sil_block_forward.1} parent=99 // loop_header_branch
          %3386 = sbr.rel (%p3384) target = $region111
        $region108: #{sil_block_forward.1} parent=99 // loop_body
          %s3391 = smul.u32 %s3383, 4
          %s3392 = scalar_lea.vmem [#allocation2], %s3391
          %v3393 = vld [vmem:[%s3392] sm:$0xf]
          %v3395 = vlaneseq
          %v3396 = vshrl.u32 %v3395, 7
          %v3397 = vsub.s32 0, %v3396
          %v3398 = vrot.slane %v3381, %v3397
          %3401 = vrot.lane.b32.xlu0 %v3388, 96
          %v3402 = vpop.permute.xlu0 %3401
          %v3403 = vsel %vm666, %v3402, 0
          %3405 = vmatprep.subr.mxu0 0.0
          %3406 = vmatpush1.msra.mxu0 %v3377
          %3407 = vmatprep.subr.mxu0 0.0
          %3408 = vmatpush1.msra.mxu0 %v3378
          %3409 = vmatprep.subr.mxu0 0.0
          %3410 = vmatpush1.msra.mxu0 %v3379
          %3411 = vmatprep.subr.mxu0 0.0
          %3412 = vmatpush1.msra.mxu0 %v3380
          %3413 = vmatprep.subr.mxu0 0.0
          %3414 = vmatpush1.msra.mxu0 0.0
          %3415 = vmatprep.subr.mxu0 0.0
          %3416 = vmatpush1.msra.mxu0 0.0
          %3417 = vmatprep.subr.mxu0 0.0
          %3418 = vmatpush1.msra.mxu0 0.0
          %3419 = vmatprep.subr.mxu0 0.0
          %3420 = vmatpush1.msra.mxu0 0.0
          %3421 = vmatprep.subr.mxu0 0.0
          %3422 = vmatpush1.msra.mxu0 0.0
          %3423 = vmatprep.subr.mxu0 0.0
          %3424 = vmatpush1.msra.mxu0 0.0
          %3425 = vmatprep.subr.mxu0 0.0
          %3426 = vmatpush1.msra.mxu0 0.0
          %3427 = vmatprep.subr.mxu0 0.0
          %3428 = vmatpush1.msra.mxu0 0.0
          %3429 = vmatprep.subr.mxu0 0.0
          %3430 = vmatpush1.msra.mxu0 0.0
          %3431 = vmatprep.subr.mxu0 0.0
          %3432 = vmatpush1.msra.mxu0 0.0
          %3433 = vmatprep.subr.mxu0 0.0
          %3434 = vmatpush1.msra.mxu0 0.0
          %3435 = vmatprep.subr.mxu0 0.0
          %3436 = vmatpush1.msra.mxu0 0.0
          %3437 = vmatprep.subr.mxu0 0.0
          %3438 = vmatpush1.msra.mxu0 0.0
          %3439 = vmatprep.subr.mxu0 0.0
          %3440 = vmatpush1.msra.mxu0 0.0
          %3441 = vmatprep.subr.mxu0 0.0
          %3442 = vmatpush1.msra.mxu0 0.0
          %3443 = vmatprep.subr.mxu0 0.0
          %3444 = vmatpush1.msra.mxu0 0.0
          %3445 = vmatprep.subr.mxu0 0.0
          %3446 = vmatpush1.msra.mxu0 0.0
          %3447 = vmatprep.subr.mxu0 0.0
          %3448 = vmatpush1.msra.mxu0 0.0
          %3449 = vmatprep.subr.mxu0 0.0
          %3450 = vmatpush1.msra.mxu0 0.0
          %3451 = vmatprep.subr.mxu0 0.0
          %3452 = vmatpush1.msra.mxu0 0.0
          %3453 = vmatprep.subr.mxu0 0.0
          %3454 = vmatpush1.msra.mxu0 0.0
          %3455 = vmatprep.subr.mxu0 0.0
          %3456 = vmatpush1.msra.mxu0 0.0
          %3457 = vmatprep.subr.mxu0 0.0
          %3458 = vmatpush1.msra.mxu0 0.0
          %3459 = vmatprep.subr.mxu0 0.0
          %3460 = vmatpush1.msra.mxu0 0.0
          %3461 = vmatprep.subr.mxu0 0.0
          %3462 = vmatpush1.msra.mxu0 0.0
          %3463 = vmatprep.subr.mxu0 0.0
          %3464 = vmatpush1.msra.mxu0 0.0
          %3465 = vmatprep.subr.mxu0 0.0
          %3466 = vmatpush1.msra.mxu0 0.0
          %3467 = vmatprep.subr.mxu0 0.0
          %3468 = vmatpush1.msra.mxu0 0.0
          %3469 = vmatprep.mubr.f32.mxu0 0.0
          %3470 = vmatmul.mubr.f32.gmra.mrb[0].mxu0 %v3403
          %v3471 = vpop.f32.mrb[0].mxu0
          %v3472 = vadd.f32 %v3398, %v3471
          %v3473 = vpop.f32.mrb[0].mxu0
          %3474 = vdwg.mxu0
          %v3475 = vadd.f32 %v3393, %v3472
          %v3476 = vxor.u32 %v3475, 2147483648
          %v3477 = vmul.f32 %v3476, 1.442695
          %v3478 = vpow.pop %v3477
          %v3479 = vadd.f32 %v3478, 1.0
          %v3480 = vrcp.pop %v3479
          %v3481 = vmul.f32 1.0, %v3480
          %3483 = vrot.lane.b32.xlu0 %v3472, 64
          %v3484 = vpop.permute.xlu0 %3483
          %v3486 = vmul.f32 %v3481, %v3484
          %3488 = vrot.lane.b32.xlu0 %v3486, 64
          %v3489 = vpop.permute.xlu0 %3488
          %v3491 = vadd.f32 %v3393, %v3489
          %v3492 = vtanh.pop %v3491
          %v3493 = vsub.f32 1.0, %v3481
          %3495 = vrot.lane.b32.xlu0 %v3492, 96
          %v3496 = vpop.permute.xlu0 %3495
          %v3498 = vmul.f32 %v3493, %v3496
          %v3499 = vmul.f32 %v3481, %v3388
          %v3500 = vadd.f32 %v3498, %v3499
          %3502 = vrot.lane.b32.xlu0 %v3500, 96
          %v3503 = vpop.permute.xlu0 %3502
          %s3505 = scalar_lea.vmem %s643, %s3391
          %vm3506 = vcmask 257024
          %3507 = vst.msk [vmem:[%s3505] sm:$0xf] %vm3506, %v3503
          %v3508 = vsel %vm3506, %v3503, 0.0
          %3509 = vadd.xlane.f32.xlu0 %v3508
          %v3510 = vpop.xlane.xlu0 %3509
          %v3511 = vadd.f32 %v3389, %v3510
          %v3512 = vmul.f32 %v3500, %v3500
          %3514 = vrot.lane.b32.xlu0 %v3512, 96
          %v3515 = vpop.permute.xlu0 %3514
          %v3517 = vsel %vm3506, %v3515, 0.0
          %3518 = vadd.xlane.f32.xlu0 %v3517
          %v3519 = vpop.xlane.xlu0 %3518
          %v3520 = vadd.f32 %v3390, %v3519
        $region109: #{sil_block_forward.1} parent=99 // loop_footer
          %s3387 = sadd.s32 1, %s3383
        $region110: #{sil_block_forward.1} parent=99 // loop_footer_branch
          %3382 = sbr.rel target = $region106
        $region111: #{sil_block_forward.1} parent=99 // loop_exit
          _
        %v3521 = vmul.f32 %v3389, 0.001953125
        %v3522 = vmul.f32 %v3390, 0.001953125
        %v3523 = vmul.f32 %v3521, %v3521
        %v3524 = vsub.f32 %v3522, %v3523
        %v3525 = vadd.f32 %v3524, 1e-05
        %v3526 = vrsqrt.pop %v3525
        %v3527 = vld [vmem:[%s643] sm:$0xf]
        %v3528 = vld [vmem:[%s643 + $0x4] sm:$0xf]
        %v3529 = vld [vmem:[%s643 + $0x8] sm:$0xf]
        %v3530 = vld [vmem:[%s643 + $0xc] sm:$0xf]
        %v3531 = vld [vmem:[%s643 + $0x10] sm:$0xf]
        %v3532 = vld [vmem:[%s643 + $0x14] sm:$0xf]
        %v3533 = vld [vmem:[%s643 + $0x18] sm:$0xf]
        %v3534 = vld [vmem:[%s643 + $0x1c] sm:$0xf]
        %v3535 = vld [vmem:[%s643 + $0x20] sm:$0xf]
        %v3536 = vld [vmem:[%s643 + $0x24] sm:$0xf]
        %v3537 = vld [vmem:[%s643 + $0x28] sm:$0xf]
        %v3538 = vld [vmem:[%s643 + $0x2c] sm:$0xf]
        %v3539 = vld [vmem:[%s643 + $0x30] sm:$0xf]
        %v3540 = vld [vmem:[%s643 + $0x34] sm:$0xf]
        %v3541 = vld [vmem:[%s643 + $0x38] sm:$0xf]
        %v3542 = vld [vmem:[%s643 + $0x3c] sm:$0xf]
        %v3543 = vsub.f32 %v3527, %v3521
        %v3544 = vsub.f32 %v3528, %v3521
        %v3545 = vsub.f32 %v3529, %v3521
        %v3546 = vsub.f32 %v3530, %v3521
        %v3547 = vsub.f32 %v3531, %v3521
        %v3548 = vsub.f32 %v3532, %v3521
        %v3549 = vsub.f32 %v3533, %v3521
        %v3550 = vsub.f32 %v3534, %v3521
        %v3551 = vsub.f32 %v3535, %v3521
        %v3552 = vsub.f32 %v3536, %v3521
        %v3553 = vsub.f32 %v3537, %v3521
        %v3554 = vsub.f32 %v3538, %v3521
        %v3555 = vsub.f32 %v3539, %v3521
        %v3556 = vsub.f32 %v3540, %v3521
        %v3557 = vsub.f32 %v3541, %v3521
        %v3558 = vsub.f32 %v3542, %v3521
        %v3559 = vmul.f32 %v3543, %v3526
        %v3560 = vmul.f32 %v3544, %v3526
        %v3561 = vmul.f32 %v3545, %v3526
        %v3562 = vmul.f32 %v3546, %v3526
        %v3563 = vmul.f32 %v3547, %v3526
        %v3564 = vmul.f32 %v3548, %v3526
        %v3565 = vmul.f32 %v3549, %v3526
        %v3566 = vmul.f32 %v3550, %v3526
        %v3567 = vmul.f32 %v3551, %v3526
        %v3568 = vmul.f32 %v3552, %v3526
        %v3569 = vmul.f32 %v3553, %v3526
        %v3570 = vmul.f32 %v3554, %v3526
        %v3571 = vmul.f32 %v3555, %v3526
        %v3572 = vmul.f32 %v3556, %v3526
        %v3573 = vmul.f32 %v3557, %v3526
        %v3574 = vmul.f32 %v3558, %v3526
        %v3575 = vld [vmem:[%s18] sm:$0x1]
        %v3577 = vlaneseq
        %v3578 = vshrl.u32 %v3577, 7
        %v3579 = vsub.s32 0, %v3578
        %v3580 = vrot.slane %v3575, %v3579
        %v3582 = vmul.f32 %v3559, %v3580
        %v3583 = vmul.f32 %v3560, %v3580
        %v3584 = vmul.f32 %v3561, %v3580
        %v3585 = vmul.f32 %v3562, %v3580
        %v3586 = vmul.f32 %v3563, %v3580
        %v3587 = vmul.f32 %v3564, %v3580
        %v3588 = vmul.f32 %v3565, %v3580
        %v3589 = vmul.f32 %v3566, %v3580
        %v3590 = vmul.f32 %v3567, %v3580
        %v3591 = vmul.f32 %v3568, %v3580
        %v3592 = vmul.f32 %v3569, %v3580
        %v3593 = vmul.f32 %v3570, %v3580
        %v3594 = vmul.f32 %v3571, %v3580
        %v3595 = vmul.f32 %v3572, %v3580
        %v3596 = vmul.f32 %v3573, %v3580
        %v3597 = vmul.f32 %v3574, %v3580
        %v3598 = vld [vmem:[%s19] sm:$0x1]
        %v3600 = vlaneseq
        %v3601 = vshrl.u32 %v3600, 7
        %v3602 = vsub.s32 0, %v3601
        %v3603 = vrot.slane %v3598, %v3602
        %v3605 = vadd.f32 %v3582, %v3603
        %v3606 = vadd.f32 %v3583, %v3603
        %v3607 = vadd.f32 %v3584, %v3603
        %v3608 = vadd.f32 %v3585, %v3603
        %v3609 = vadd.f32 %v3586, %v3603
        %v3610 = vadd.f32 %v3587, %v3603
        %v3611 = vadd.f32 %v3588, %v3603
        %v3612 = vadd.f32 %v3589, %v3603
        %v3613 = vadd.f32 %v3590, %v3603
        %v3614 = vadd.f32 %v3591, %v3603
        %v3615 = vadd.f32 %v3592, %v3603
        %v3616 = vadd.f32 %v3593, %v3603
        %v3617 = vadd.f32 %v3594, %v3603
        %v3618 = vadd.f32 %v3595, %v3603
        %v3619 = vadd.f32 %v3596, %v3603
        %v3620 = vadd.f32 %v3597, %v3603
        %vm3621 = vcmask 257024
        %3622 = vst.msk [vmem:[%s643] sm:$0xf] %vm3621, %v3605
        %3623 = vst.msk [vmem:[%s643 + $0x4] sm:$0xf] %vm3621, %v3606
        %3624 = vst.msk [vmem:[%s643 + $0x8] sm:$0xf] %vm3621, %v3607
        %3625 = vst.msk [vmem:[%s643 + $0xc] sm:$0xf] %vm3621, %v3608
        %3626 = vst.msk [vmem:[%s643 + $0x10] sm:$0xf] %vm3621, %v3609
        %3627 = vst.msk [vmem:[%s643 + $0x14] sm:$0xf] %vm3621, %v3610
        %3628 = vst.msk [vmem:[%s643 + $0x18] sm:$0xf] %vm3621, %v3611
        %3629 = vst.msk [vmem:[%s643 + $0x1c] sm:$0xf] %vm3621, %v3612
        %3630 = vst.msk [vmem:[%s643 + $0x20] sm:$0xf] %vm3621, %v3613
        %3631 = vst.msk [vmem:[%s643 + $0x24] sm:$0xf] %vm3621, %v3614
        %3632 = vst.msk [vmem:[%s643 + $0x28] sm:$0xf] %vm3621, %v3615
        %3633 = vst.msk [vmem:[%s643 + $0x2c] sm:$0xf] %vm3621, %v3616
        %3634 = vst.msk [vmem:[%s643 + $0x30] sm:$0xf] %vm3621, %v3617
        %3635 = vst.msk [vmem:[%s643 + $0x34] sm:$0xf] %vm3621, %v3618
        %3636 = vst.msk [vmem:[%s643 + $0x38] sm:$0xf] %vm3621, %v3619
        %3637 = vst.msk [vmem:[%s643 + $0x3c] sm:$0xf] %vm3621, %v3620
        %p3638 = scmp.lt.s32.totalorder %s32, 1
        %s3639 = scalar_select %p3638, %s32, 1
        %s3640 = smul.addr %s3639, 16
        %s3641 = smul.addr %s3640, 4
        %s3642 = scalar_lea.vmem %s20, %s3641
        // Predicated region
        $region112: #{sil_block_forward.1} parent=99 // pred_check
          %p3643 = pneg %p475
        $region113: #{sil_block_forward.1} parent=99 // pred_check_branch
          %3645 = sbr.rel (%p3643) target = $region115
        $region114: #{sil_block_forward.1} parent=99 // pred_region
          _
        $region115: #{sil_block_forward.1} parent=99 // pred_fallthru
          _
      $region100: #{sil_block_forward.1} parent=5 // pred_fallthru
        _
      %p3646 = scmp.le.s32.totalorder 2, %s27
      // Predicated region
      $region116: #{sil_block_forward.1} parent=5 // pred_check
        %p3647 = pneg %p3646
      $region117: #{sil_block_forward.1} parent=5 // pred_check_branch
        %3649 = sbr.rel (%p3647) target = $region119
      $region118: #{sil_block_forward.1} parent=5 // pred_region
        %s3650 = ssub.s32 %s27, 2
        // Predicated region
        $region120: #{sil_block_forward.1} parent=118 // pred_check
          %p3651 = pneg %p481
        $region121: #{sil_block_forward.1} parent=118 // pred_check_branch
          %3653 = sbr.rel (%p3651) target = $region123
        $region122: #{sil_block_forward.1} parent=118 // pred_region
          %p3654 = scmp.lt.s32.totalorder %s33, 1
          %s3655 = scalar_select %p3654, %s33, 1
          %s3656 = smul.addr %s3655, 16
          %s3657 = smul.addr %s3656, 4
          %s3658 = scalar_lea.vmem %s20, %s3657
        $region123: #{sil_block_forward.1} parent=118 // pred_fallthru
          _
      $region119: #{sil_block_forward.1} parent=5 // pred_fallthru
        _
    $region6: #{sil_block_forward.1} parent=1 // loop_footer
      %s31 = sadd.s32 1, %s27
    $region7: #{sil_block_forward.1} parent=1 // loop_footer_branch
      %26 = sbr.rel target = $region3
    $region8: #{sil_block_forward.1} parent=1 // loop_exit
      _
    %3659 = vsyncpa [#allocation4], 1
    %s3660 = scalar_lea.sflag [#allocation4], 1
    %3661 = vsyncpa %s3660, 1

</llo_original>
